<compile_context>
chip_gen: v5e
topology: v5e:2x2
jax: 0.10.0
libtpu: 0.0.40
codegen_flags: <defaults>
</compile_context>

<pallas_src>
import functools

import jax
import jax.numpy as jnp
from jax.experimental import pallas as pl
from jax.experimental.pallas import tpu as pltpu

SQRT2 = 1.4142135623730951
LANE = 128


def _gelu(x):
    # Exact erf-based GELU (matches torch.nn.GELU() default approximate='none').
    return 0.5 * x * (1.0 + jax.lax.erf(x / SQRT2))


def _mlp(feat, wb_refs):
    # wb_refs = [w0, b0, w1, b1, ..., wL, bL]; GELU after every linear but the last.
    h = feat
    n = len(wb_refs) // 2
    for i in range(n):
        w = wb_refs[2 * i][...]
        b = wb_refs[2 * i + 1][...]
        h = jnp.dot(h, w, preferred_element_type=jnp.float32) + b
        if i < n - 1:
            h = _gelu(h)
    return h


def vitbert_kernel(num_classes, n_wb, *refs):
    (e1_ref, m1_ref, e2_ref, m2_ref, wp_ref, bp_ref) = refs[:6]
    c1_refs = refs[6:6 + n_wb]                  # classifier1: w0,b0,...,wL,bL (padded)
    c2_refs = refs[6 + n_wb:6 + 2 * n_wb]       # classifier2: w0,b0,...,wL,bL (padded)
    out_ref = refs[6 + 2 * n_wb]                # [TB, CP] lane-dense output slab
    num_sc = refs[6 + 2 * n_wb + 1]             # [2*TB, H] masked-sum accumulator
    den_sc = refs[6 + 2 * n_wb + 2]             # [2*TB, 1] mask-count accumulator

    s = pl.program_id(1)
    tb = e1_ref.shape[0]

    @pl.when(s == 0)
    def _():
        num_sc[...] = jnp.zeros_like(num_sc)
        den_sc[...] = jnp.zeros_like(den_sc)

    # Accumulate the masked sums for this sequence tile (both streams).
    e1 = e1_ref[...]                            # [TB, TS, H]
    m1 = m1_ref[...]                            # [TB, TS, 1]
    e2 = e2_ref[...]
    m2 = m2_ref[...]
    num_sc[0:tb, :] += jnp.sum(e1 * m1, axis=1)
    num_sc[tb:2 * tb, :] += jnp.sum(e2 * m2, axis=1)
    den_sc[0:tb, :] += jnp.sum(m1, axis=1)
    den_sc[tb:2 * tb, :] += jnp.sum(m2, axis=1)

    @pl.when(s == pl.num_programs(1) - 1)
    def _():
        # Masked mean pool (EUP approx reciprocal instead of f32 divide).
        pooled = num_sc[...] * pl.reciprocal(den_sc[...], approx=True)   # [2*TB, H]
        # Fused BERT-style pooler for BOTH streams (shared weights): one matmul.
        feat = jnp.tanh(
            jnp.dot(pooled, wp_ref[...], preferred_element_type=jnp.float32)
            + bp_ref[...])                                               # [2*TB, HP]
        # Late fusion of the two DynamicClassifier heads.
        logits = (_mlp(feat[0:tb, :], c1_refs)
                  + _mlp(feat[tb:2 * tb, :], c2_refs))                   # [TB, CP]
        cp = logits.shape[1]
        lane_idx = jax.lax.broadcasted_iota(jnp.int32, (tb, cp), 1)
        logits = jnp.where(lane_idx < num_classes, logits, -1e30)
        # Softmax over dim=1 (lane-padded classes masked out above).
        z = logits - jnp.max(logits, axis=1, keepdims=True)
        ez = jnp.exp(z)
        out_ref[...] = ez * pl.reciprocal(
            jnp.sum(ez, axis=1, keepdims=True), approx=True)


def _round_up(n, m=LANE):
    return ((n + m - 1) // m) * m


def _pad2d(x, rows, cols):
    return jnp.pad(x, ((0, rows - x.shape[0]), (0, cols - x.shape[1])))


def _pad_classifier(params, in_pad):
    """Zero-pad every (w, b) pair so all in/out dims are lane multiples."""
    out = []
    prev = in_pad
    for i in range(0, len(params), 2):
        w, b = params[i], params[i + 1]
        out_pad = _round_up(w.shape[1])
        out.append(_pad2d(w, prev, out_pad))
        out.append(_pad2d(b, 1, out_pad))
        prev = out_pad
    return out, prev


def vitbert_forward(emb1, mask1, emb2, mask2, pooler_w, pooler_b,
                    c1_params, c2_params, num_classes,
                    *, batch_tile=8, seq_tile=8):
    B, S, H = emb1.shape
    tb = min(batch_tile, B)
    ts = min(seq_tile, S)
    assert B % tb == 0 and S % ts == 0
    assert tb % 8 == 0 or tb == B, "batch tile must be sublane aligned or full"
    assert ts % 8 == 0 or ts == S, "seq tile must be sublane aligned or full"

    # Lane-pad the pooler output dim and every classifier width to 128.
    hp = _round_up(H)
    wp_pad = _pad2d(pooler_w, H, hp)
    bp_pad = _pad2d(pooler_b, 1, hp)
    c1_pad, cp1 = _pad_classifier(list(c1_params), hp)
    c2_pad, cp2 = _pad_classifier(list(c2_params), hp)
    assert cp1 == cp2
    cp = cp1
    n_wb = len(c1_pad)

    # Trailing singleton lane axis keeps the mask BlockSpec tiling legal.
    m1 = mask1[..., None]
    m2 = mask2[..., None]

    emb_spec = pl.BlockSpec((tb, ts, H), lambda b, s: (b, s, 0))
    msk_spec = pl.BlockSpec((tb, ts, 1), lambda b, s: (b, s, 0))
    weights = [wp_pad, bp_pad] + c1_pad + c2_pad
    # Constant block index -> weights stay resident in VMEM across the grid.
    w_specs = [pl.BlockSpec(w.shape, lambda b, s: (0, 0)) for w in weights]

    grid = (B // tb, S // ts)
    out = pl.pallas_call(
        functools.partial(vitbert_kernel, num_classes, n_wb),
        out_shape=jax.ShapeDtypeStruct((B, cp), jnp.float32),
        grid_spec=pltpu.PrefetchScalarGridSpec(
            num_scalar_prefetch=0,
            grid=grid,
            in_specs=[emb_spec, msk_spec, emb_spec, msk_spec] + w_specs,
            out_specs=pl.BlockSpec((tb, cp), lambda b, s: (b, 0)),
            scratch_shapes=[pltpu.VMEM((2 * tb, H), jnp.float32),
                            pltpu.VMEM((2 * tb, 1), jnp.float32)]),
        compiler_params=pltpu.CompilerParams(
            dimension_semantics=("parallel", "arbitrary"),
            vmem_limit_bytes=32 * 1024 * 1024),
    )(emb1, m1, emb2, m2, *weights)
    return out[:, :num_classes]


def init_classifier_params(key, input_dim, num_classes, num_layers):
    """DynamicClassifier params: num_layers halving Linears + final Linear."""
    params = []
    dim = input_dim
    keys = jax.random.split(key, 2 * (num_layers + 1))
    for i in range(num_layers):
        out_dim = dim // 2
        w = jax.random.normal(keys[2 * i], (dim, out_dim), jnp.float32) * 0.05
        b = jax.random.normal(keys[2 * i + 1], (1, out_dim), jnp.float32) * 0.01
        params += [w, b]
        dim = out_dim
    w = jax.random.normal(keys[2 * num_layers], (dim, num_classes), jnp.float32) * 0.05
    b = jax.random.normal(keys[2 * num_layers + 1], (1, num_classes), jnp.float32) * 0.01
    params += [w, b]
    return params


def reference_forward(emb1, mask1, emb2, mask2, pooler_w, pooler_b,
                      c1_params, c2_params):
    def pool(e, m):
        pooled = (e * m[:, :, None]).sum(1) / m.sum(1, keepdims=True)
        return jnp.tanh(pooled @ pooler_w + pooler_b)

    def mlp(x, params):
        n = len(params) // 2
        for i in range(n):
            x = x @ params[2 * i] + params[2 * i + 1]
            if i < n - 1:
                x = _gelu(x)
        return x

    logits = mlp(pool(emb1, mask1), c1_params) + mlp(pool(emb2, mask2), c2_params)
    return jax.nn.softmax(logits, axis=1)


if __name__ == "__main__":
    B, S, H, C, VOCAB = 16, 16, 32, 4, 50   # small stand-in for hidden_size=768
    NUM_LAYERS = 4                          # DynamicClassifier num_layers=4

    key = jax.random.PRNGKey(0)
    (k_emb, k_pw, k_pb, k_c1, k_c2, k_ids1, k_ids2) = jax.random.split(key, 7)

    # Deterministic BERT stand-in parameters.
    emb_table = jax.random.normal(k_emb, (VOCAB, H), jnp.float32) * 0.1
    pooler_w = jax.random.normal(k_pw, (H, H), jnp.float32) * 0.1
    pooler_b = jax.random.normal(k_pb, (1, H), jnp.float32) * 0.01

    # Two independent DynamicClassifier heads.
    c1_params = init_classifier_params(k_c1, H, C, NUM_LAYERS)
    c2_params = init_classifier_params(k_c2, H, C, NUM_LAYERS)

    # Forward inputs (same as the PyTorch module's forward signature).
    input_ids1 = jax.random.randint(k_ids1, (B, S), 0, VOCAB)
    input_ids2 = jax.random.randint(k_ids2, (B, S), 0, VOCAB)
    attention_mask1 = jnp.ones((B, S), jnp.float32)
    attention_mask2 = jnp.ones((B, S), jnp.float32).at[:, -2:].set(0.0)

    # Glue: embedding gather in plain JAX (data-dependent gather).
    emb1 = emb_table[input_ids1]   # [B, S, H]
    emb2 = emb_table[input_ids2]   # [B, S, H]

    probs = vitbert_forward(emb1, attention_mask1, emb2, attention_mask2,
                            pooler_w, pooler_b, c1_params, c2_params, C,
                            batch_tile=8, seq_tile=8)
    probs = jax.block_until_ready(probs)

    ref = reference_forward(emb1, attention_mask1, emb2, attention_mask2,
                            pooler_w, pooler_b, c1_params, c2_params)
    assert probs.shape == (B, C)
    assert jnp.allclose(probs, ref, atol=2e-3, rtol=2e-3), (probs, ref)
    assert jnp.allclose(probs.sum(axis=1), 1.0, atol=2e-3)

    print("KERNEL_OK")
</pallas_src>

<mosaic_0001>
module attributes {stable_mosaic.version = 11 : i64} {
  func.func @vitbert_kernel(%arg0: i32, %arg1: i32, %arg2: memref<8x8x32xf32, #tpu.memory_space<vmem>>, %arg3: memref<8x8x1xf32, #tpu.memory_space<vmem>>, %arg4: memref<8x8x32xf32, #tpu.memory_space<vmem>>, %arg5: memref<8x8x1xf32, #tpu.memory_space<vmem>>, %arg6: memref<32x128xf32, #tpu.memory_space<vmem>>, %arg7: memref<1x128xf32, #tpu.memory_space<vmem>>, %arg8: memref<128x128xf32, #tpu.memory_space<vmem>>, %arg9: memref<1x128xf32, #tpu.memory_space<vmem>>, %arg10: memref<128x128xf32, #tpu.memory_space<vmem>>, %arg11: memref<1x128xf32, #tpu.memory_space<vmem>>, %arg12: memref<128x128xf32, #tpu.memory_space<vmem>>, %arg13: memref<1x128xf32, #tpu.memory_space<vmem>>, %arg14: memref<128x128xf32, #tpu.memory_space<vmem>>, %arg15: memref<1x128xf32, #tpu.memory_space<vmem>>, %arg16: memref<128x128xf32, #tpu.memory_space<vmem>>, %arg17: memref<1x128xf32, #tpu.memory_space<vmem>>, %arg18: memref<128x128xf32, #tpu.memory_space<vmem>>, %arg19: memref<1x128xf32, #tpu.memory_space<vmem>>, %arg20: memref<128x128xf32, #tpu.memory_space<vmem>>, %arg21: memref<1x128xf32, #tpu.memory_space<vmem>>, %arg22: memref<128x128xf32, #tpu.memory_space<vmem>>, %arg23: memref<1x128xf32, #tpu.memory_space<vmem>>, %arg24: memref<128x128xf32, #tpu.memory_space<vmem>>, %arg25: memref<1x128xf32, #tpu.memory_space<vmem>>, %arg26: memref<128x128xf32, #tpu.memory_space<vmem>>, %arg27: memref<1x128xf32, #tpu.memory_space<vmem>>, %arg28: memref<8x128xf32, #tpu.memory_space<vmem>>, %arg29: memref<16x32xf32, #tpu.memory_space<vmem>>, %arg30: memref<16x1xf32, #tpu.memory_space<vmem>>) attributes {dimension_semantics = [#tpu.dimension_semantics<parallel>, #tpu.dimension_semantics<arbitrary>], iteration_bounds = array<i64: 2, 2>, scalar_prefetch = 0 : i64, scratch_operands = 2 : i64, tpu.core_type = #tpu.core_type<tc>, window_params = [{transform_indices = @transform_0, window_bounds = array<i64: 8, 8, 32>}, {transform_indices = @transform_1, window_bounds = array<i64: 8, 8, 1>}, {transform_indices = @transform_2, window_bounds = array<i64: 8, 8, 32>}, {transform_indices = @transform_3, window_bounds = array<i64: 8, 8, 1>}, {pipeline_mode = #tpu.pipeline_mode<synchronous>, transform_indices = @transform_4, window_bounds = array<i64: 32, 128>}, {pipeline_mode = #tpu.pipeline_mode<synchronous>, transform_indices = @transform_5, window_bounds = array<i64: 1, 128>}, {pipeline_mode = #tpu.pipeline_mode<synchronous>, transform_indices = @transform_6, window_bounds = array<i64: 128, 128>}, {pipeline_mode = #tpu.pipeline_mode<synchronous>, transform_indices = @transform_7, window_bounds = array<i64: 1, 128>}, {pipeline_mode = #tpu.pipeline_mode<synchronous>, transform_indices = @transform_8, window_bounds = array<i64: 128, 128>}, {pipeline_mode = #tpu.pipeline_mode<synchronous>, transform_indices = @transform_9, window_bounds = array<i64: 1, 128>}, {pipeline_mode = #tpu.pipeline_mode<synchronous>, transform_indices = @transform_10, window_bounds = array<i64: 128, 128>}, {pipeline_mode = #tpu.pipeline_mode<synchronous>, transform_indices = @transform_11, window_bounds = array<i64: 1, 128>}, {pipeline_mode = #tpu.pipeline_mode<synchronous>, transform_indices = @transform_12, window_bounds = array<i64: 128, 128>}, {pipeline_mode = #tpu.pipeline_mode<synchronous>, transform_indices = @transform_13, window_bounds = array<i64: 1, 128>}, {pipeline_mode = #tpu.pipeline_mode<synchronous>, transform_indices = @transform_14, window_bounds = array<i64: 128, 128>}, {pipeline_mode = #tpu.pipeline_mode<synchronous>, transform_indices = @transform_15, window_bounds = array<i64: 1, 128>}, {pipeline_mode = #tpu.pipeline_mode<synchronous>, transform_indices = @transform_16, window_bounds = array<i64: 128, 128>}, {pipeline_mode = #tpu.pipeline_mode<synchronous>, transform_indices = @transform_17, window_bounds = array<i64: 1, 128>}, {pipeline_mode = #tpu.pipeline_mode<synchronous>, transform_indices = @transform_18, window_bounds = array<i64: 128, 128>}, {pipeline_mode = #tpu.pipeline_mode<synchronous>, transform_indices = @transform_19, window_bounds = array<i64: 1, 128>}, {pipeline_mode = #tpu.pipeline_mode<synchronous>, transform_indices = @transform_20, window_bounds = array<i64: 128, 128>}, {pipeline_mode = #tpu.pipeline_mode<synchronous>, transform_indices = @transform_21, window_bounds = array<i64: 1, 128>}, {pipeline_mode = #tpu.pipeline_mode<synchronous>, transform_indices = @transform_22, window_bounds = array<i64: 128, 128>}, {pipeline_mode = #tpu.pipeline_mode<synchronous>, transform_indices = @transform_23, window_bounds = array<i64: 1, 128>}, {pipeline_mode = #tpu.pipeline_mode<synchronous>, transform_indices = @transform_24, window_bounds = array<i64: 128, 128>}, {pipeline_mode = #tpu.pipeline_mode<synchronous>, transform_indices = @transform_25, window_bounds = array<i64: 1, 128>}, {transform_indices = @transform_26, window_bounds = array<i64: 8, 128>}]} {
    %c0_i32 = arith.constant 0 : i32
    %0 = arith.cmpi eq, %arg1, %c0_i32 : i32
    %1 = arith.extui %0 : i1 to i32
    %c0_i32_0 = arith.constant 0 : i32
    %2 = arith.cmpi ne, %1, %c0_i32_0 : i32
    scf.if %2 {
      %cst_31 = arith.constant 0.000000e+00 : f32
      %30 = vector.broadcast %cst_31 : f32 to vector<16x32xf32>
      %c0_32 = arith.constant 0 : index
      %c0_33 = arith.constant 0 : index
      %31 = vector.load %arg29[%c0_32, %c0_33] : memref<16x32xf32, #tpu.memory_space<vmem>>, vector<16x32xf32>
      tpu.vector_store %arg29[%c0_32, %c0_33], %30 {strides = array<i32>} : memref<16x32xf32, #tpu.memory_space<vmem>>, vector<16x32xf32>,
      %cst_34 = arith.constant 0.000000e+00 : f32
      %32 = vector.broadcast %cst_34 : f32 to vector<16x1xf32>
      %c0_35 = arith.constant 0 : index
      %c0_36 = arith.constant 0 : index
      %33 = vector.load %arg30[%c0_35, %c0_36] : memref<16x1xf32, #tpu.memory_space<vmem>>, vector<16x1xf32>
      tpu.vector_store %arg30[%c0_35, %c0_36], %32 {strides = array<i32>} : memref<16x1xf32, #tpu.memory_space<vmem>>, vector<16x1xf32>,
    } else {
    }
    %c0 = arith.constant 0 : index
    %c0_1 = arith.constant 0 : index
    %c0_2 = arith.constant 0 : index
    %3 = vector.load %arg2[%c0, %c0_1, %c0_2] : memref<8x8x32xf32, #tpu.memory_space<vmem>>, vector<8x8x32xf32>
    %c0_3 = arith.constant 0 : index
    %c0_4 = arith.constant 0 : index
    %c0_5 = arith.constant 0 : index
    %4 = vector.load %arg3[%c0_3, %c0_4, %c0_5] : memref<8x8x1xf32, #tpu.memory_space<vmem>>, vector<8x8x1xf32>
    %c0_6 = arith.constant 0 : index
    %c0_7 = arith.constant 0 : index
    %c0_8 = arith.constant 0 : index
    %5 = vector.load %arg4[%c0_6, %c0_7, %c0_8] : memref<8x8x32xf32, #tpu.memory_space<vmem>>, vector<8x8x32xf32>
    %c0_9 = arith.constant 0 : index
    %c0_10 = arith.constant 0 : index
    %c0_11 = arith.constant 0 : index
    %6 = vector.load %arg5[%c0_9, %c0_10, %c0_11] : memref<8x8x1xf32, #tpu.memory_space<vmem>>, vector<8x8x1xf32>
    %c0_12 = arith.constant 0 : index
    %c0_13 = arith.constant 0 : index
    %7 = vector.load %arg29[%c0_12, %c0_13] : memref<16x32xf32, #tpu.memory_space<vmem>>, vector<8x32xf32>
    %8 = vector.broadcast %4 : vector<8x8x1xf32> to vector<8x8x32xf32>
    %9 = arith.mulf %3, %8 : vector<8x8x32xf32>
    %cst = arith.constant dense<0.000000e+00> : vector<8x32xf32>
    %10 = vector.multi_reduction <add>, %9, %cst [1] : vector<8x8x32xf32> to vector<8x32xf32>
    %11 = arith.addf %7, %10 : vector<8x32xf32>
    %c0_14 = arith.constant 0 : index
    %c0_15 = arith.constant 0 : index
    %12 = vector.load %arg29[%c0_14, %c0_15] : memref<16x32xf32, #tpu.memory_space<vmem>>, vector<8x32xf32>
    tpu.vector_store %arg29[%c0_14, %c0_15], %11 {strides = array<i32>} : memref<16x32xf32, #tpu.memory_space<vmem>>, vector<8x32xf32>,
    %c8 = arith.constant 8 : index
    %c0_16 = arith.constant 0 : index
    %13 = vector.load %arg29[%c8, %c0_16] : memref<16x32xf32, #tpu.memory_space<vmem>>, vector<8x32xf32>
    %14 = vector.broadcast %6 : vector<8x8x1xf32> to vector<8x8x32xf32>
    %15 = arith.mulf %5, %14 : vector<8x8x32xf32>
    %cst_17 = arith.constant dense<0.000000e+00> : vector<8x32xf32>
    %16 = vector.multi_reduction <add>, %15, %cst_17 [1] : vector<8x8x32xf32> to vector<8x32xf32>
    %17 = arith.addf %13, %16 : vector<8x32xf32>
    %c8_18 = arith.constant 8 : index
    %c0_19 = arith.constant 0 : index
    %18 = vector.load %arg29[%c8_18, %c0_19] : memref<16x32xf32, #tpu.memory_space<vmem>>, vector<8x32xf32>
    tpu.vector_store %arg29[%c8_18, %c0_19], %17 {strides = array<i32>} : memref<16x32xf32, #tpu.memory_space<vmem>>, vector<8x32xf32>,
    %c0_20 = arith.constant 0 : index
    %c0_21 = arith.constant 0 : index
    %19 = vector.load %arg30[%c0_20, %c0_21] : memref<16x1xf32, #tpu.memory_space<vmem>>, vector<8x1xf32>
    %cst_22 = arith.constant dense<0.000000e+00> : vector<8x1xf32>
    %20 = vector.multi_reduction <add>, %4, %cst_22 [1] : vector<8x8x1xf32> to vector<8x1xf32>
    %21 = arith.addf %19, %20 : vector<8x1xf32>
    %c0_23 = arith.constant 0 : index
    %c0_24 = arith.constant 0 : index
    %22 = vector.load %arg30[%c0_23, %c0_24] : memref<16x1xf32, #tpu.memory_space<vmem>>, vector<8x1xf32>
    tpu.vector_store %arg30[%c0_23, %c0_24], %21 {strides = array<i32>} : memref<16x1xf32, #tpu.memory_space<vmem>>, vector<8x1xf32>,
    %c8_25 = arith.constant 8 : index
    %c0_26 = arith.constant 0 : index
    %23 = vector.load %arg30[%c8_25, %c0_26] : memref<16x1xf32, #tpu.memory_space<vmem>>, vector<8x1xf32>
    %cst_27 = arith.constant dense<0.000000e+00> : vector<8x1xf32>
    %24 = vector.multi_reduction <add>, %6, %cst_27 [1] : vector<8x8x1xf32> to vector<8x1xf32>
    %25 = arith.addf %23, %24 : vector<8x1xf32>
    %c8_28 = arith.constant 8 : index
    %c0_29 = arith.constant 0 : index
    %26 = vector.load %arg30[%c8_28, %c0_29] : memref<16x1xf32, #tpu.memory_space<vmem>>, vector<8x1xf32>
    tpu.vector_store %arg30[%c8_28, %c0_29], %25 {strides = array<i32>} : memref<16x1xf32, #tpu.memory_space<vmem>>, vector<8x1xf32>,
    %c1_i32 = arith.constant 1 : i32
    %27 = arith.cmpi eq, %arg1, %c1_i32 : i32
    %28 = arith.extui %27 : i1 to i32
    %c0_i32_30 = arith.constant 0 : i32
    %29 = arith.cmpi ne, %28, %c0_i32_30 : i32
    scf.if %29 {
      %c0_31 = arith.constant 0 : index
      %c0_32 = arith.constant 0 : index
      %30 = vector.load %arg29[%c0_31, %c0_32] : memref<16x32xf32, #tpu.memory_space<vmem>>, vector<16x32xf32>
      %c0_33 = arith.constant 0 : index
      %c0_34 = arith.constant 0 : index
      %31 = vector.load %arg30[%c0_33, %c0_34] : memref<16x1xf32, #tpu.memory_space<vmem>>, vector<16x1xf32>
      %32 = tpu.reciprocal %31 {approx = true} : vector<16x1xf32> -> vector<16x1xf32>
      %33 = vector.broadcast %32 : vector<16x1xf32> to vector<16x32xf32>
      %34 = arith.mulf %30, %33 : vector<16x32xf32>
      %c0_35 = arith.constant 0 : index
      %c0_36 = arith.constant 0 : index
      %35 = vector.load %arg6[%c0_35, %c0_36] : memref<32x128xf32, #tpu.memory_space<vmem>>, vector<32x128xf32>
      %cst_37 = arith.constant dense<0.000000e+00> : vector<16x128xf32>
      %36 = tpu.matmul %34, %35, %cst_37 {dimension_numbers = #tpu.dot_dimension_numbers<[1], [0], [0], [1], [0, 0, 1, 1], [], []>} : vector<16x32xf32>, vector<32x128xf32>, vector<16x128xf32> -> vector<16x128xf32>
      %c0_38 = arith.constant 0 : index
      %c0_39 = arith.constant 0 : index
      %37 = vector.load %arg7[%c0_38, %c0_39] : memref<1x128xf32, #tpu.memory_space<vmem>>, vector<1x128xf32>
      %38 = vector.broadcast %37 : vector<1x128xf32> to vector<16x128xf32>
      %39 = arith.addf %36, %38 : vector<16x128xf32>
      %40 = math.tanh %39 : vector<16x128xf32>
      %41 = vector.extract_strided_slice %40 {offsets = [0, 0], sizes = [8, 128], strides = [1, 1]} : vector<16x128xf32> to vector<8x128xf32>
      %c0_40 = arith.constant 0 : index
      %c0_41 = arith.constant 0 : index
      %42 = vector.load %arg8[%c0_40, %c0_41] : memref<128x128xf32, #tpu.memory_space<vmem>>, vector<128x128xf32>
      %c0_42 = arith.constant 0 : index
      %c0_43 = arith.constant 0 : index
      %43 = vector.load %arg9[%c0_42, %c0_43] : memref<1x128xf32, #tpu.memory_space<vmem>>, vector<1x128xf32>
      %cst_44 = arith.constant dense<0.000000e+00> : vector<8x128xf32>
      %44 = tpu.matmul %41, %42, %cst_44 {dimension_numbers = #tpu.dot_dimension_numbers<[1], [0], [0], [1], [0, 0, 1, 1], [], []>} : vector<8x128xf32>, vector<128x128xf32>, vector<8x128xf32> -> vector<8x128xf32>
      %45 = vector.broadcast %43 : vector<1x128xf32> to vector<8x128xf32>
      %46 = arith.addf %44, %45 : vector<8x128xf32>
      %cst_45 = arith.constant 5.000000e-01 : f32
      %47 = vector.broadcast %cst_45 : f32 to vector<8x128xf32>
      %48 = arith.mulf %47, %46 : vector<8x128xf32>
      %cst_46 = arith.constant 1.41421354 : f32
      %49 = vector.broadcast %cst_46 : f32 to vector<8x128xf32>
      %50 = arith.divf %46, %49 : vector<8x128xf32>
      %51 = math.erf %50 : vector<8x128xf32>
      %cst_47 = arith.constant 1.000000e+00 : f32
      %52 = vector.broadcast %cst_47 : f32 to vector<8x128xf32>
      %53 = arith.addf %52, %51 : vector<8x128xf32>
      %54 = arith.mulf %48, %53 : vector<8x128xf32>
      %c0_48 = arith.constant 0 : index
      %c0_49 = arith.constant 0 : index
      %55 = vector.load %arg10[%c0_48, %c0_49] : memref<128x128xf32, #tpu.memory_space<vmem>>, vector<128x128xf32>
      %c0_50 = arith.constant 0 : index
      %c0_51 = arith.constant 0 : index
      %56 = vector.load %arg11[%c0_50, %c0_51] : memref<1x128xf32, #tpu.memory_space<vmem>>, vector<1x128xf32>
      %cst_52 = arith.constant dense<0.000000e+00> : vector<8x128xf32>
      %57 = tpu.matmul %54, %55, %cst_52 {dimension_numbers = #tpu.dot_dimension_numbers<[1], [0], [0], [1], [0, 0, 1, 1], [], []>} : vector<8x128xf32>, vector<128x128xf32>, vector<8x128xf32> -> vector<8x128xf32>
      %58 = vector.broadcast %56 : vector<1x128xf32> to vector<8x128xf32>
      %59 = arith.addf %57, %58 : vector<8x128xf32>
      %cst_53 = arith.constant 5.000000e-01 : f32
      %60 = vector.broadcast %cst_53 : f32 to vector<8x128xf32>
      %61 = arith.mulf %60, %59 : vector<8x128xf32>
      %cst_54 = arith.constant 1.41421354 : f32
      %62 = vector.broadcast %cst_54 : f32 to vector<8x128xf32>
      %63 = arith.divf %59, %62 : vector<8x128xf32>
      %64 = math.erf %63 : vector<8x128xf32>
      %cst_55 = arith.constant 1.000000e+00 : f32
      %65 = vector.broadcast %cst_55 : f32 to vector<8x128xf32>
      %66 = arith.addf %65, %64 : vector<8x128xf32>
      %67 = arith.mulf %61, %66 : vector<8x128xf32>
      %c0_56 = arith.constant 0 : index
      %c0_57 = arith.constant 0 : index
      %68 = vector.load %arg12[%c0_56, %c0_57] : memref<128x128xf32, #tpu.memory_space<vmem>>, vector<128x128xf32>
      %c0_58 = arith.constant 0 : index
      %c0_59 = arith.constant 0 : index
      %69 = vector.load %arg13[%c0_58, %c0_59] : memref<1x128xf32, #tpu.memory_space<vmem>>, vector<1x128xf32>
      %cst_60 = arith.constant dense<0.000000e+00> : vector<8x128xf32>
      %70 = tpu.matmul %67, %68, %cst_60 {dimension_numbers = #tpu.dot_dimension_numbers<[1], [0], [0], [1], [0, 0, 1, 1], [], []>} : vector<8x128xf32>, vector<128x128xf32>, vector<8x128xf32> -> vector<8x128xf32>
      %71 = vector.broadcast %69 : vector<1x128xf32> to vector<8x128xf32>
      %72 = arith.addf %70, %71 : vector<8x128xf32>
      %cst_61 = arith.constant 5.000000e-01 : f32
      %73 = vector.broadcast %cst_61 : f32 to vector<8x128xf32>
      %74 = arith.mulf %73, %72 : vector<8x128xf32>
      %cst_62 = arith.constant 1.41421354 : f32
      %75 = vector.broadcast %cst_62 : f32 to vector<8x128xf32>
      %76 = arith.divf %72, %75 : vector<8x128xf32>
      %77 = math.erf %76 : vector<8x128xf32>
      %cst_63 = arith.constant 1.000000e+00 : f32
      %78 = vector.broadcast %cst_63 : f32 to vector<8x128xf32>
      %79 = arith.addf %78, %77 : vector<8x128xf32>
      %80 = arith.mulf %74, %79 : vector<8x128xf32>
      %c0_64 = arith.constant 0 : index
      %c0_65 = arith.constant 0 : index
      %81 = vector.load %arg14[%c0_64, %c0_65] : memref<128x128xf32, #tpu.memory_space<vmem>>, vector<128x128xf32>
      %c0_66 = arith.constant 0 : index
      %c0_67 = arith.constant 0 : index
      %82 = vector.load %arg15[%c0_66, %c0_67] : memref<1x128xf32, #tpu.memory_space<vmem>>, vector<1x128xf32>
      %cst_68 = arith.constant dense<0.000000e+00> : vector<8x128xf32>
      %83 = tpu.matmul %80, %81, %cst_68 {dimension_numbers = #tpu.dot_dimension_numbers<[1], [0], [0], [1], [0, 0, 1, 1], [], []>} : vector<8x128xf32>, vector<128x128xf32>, vector<8x128xf32> -> vector<8x128xf32>
      %84 = vector.broadcast %82 : vector<1x128xf32> to vector<8x128xf32>
      %85 = arith.addf %83, %84 : vector<8x128xf32>
      %cst_69 = arith.constant 5.000000e-01 : f32
      %86 = vector.broadcast %cst_69 : f32 to vector<8x128xf32>
      %87 = arith.mulf %86, %85 : vector<8x128xf32>
      %cst_70 = arith.constant 1.41421354 : f32
      %88 = vector.broadcast %cst_70 : f32 to vector<8x128xf32>
      %89 = arith.divf %85, %88 : vector<8x128xf32>
      %90 = math.erf %89 : vector<8x128xf32>
      %cst_71 = arith.constant 1.000000e+00 : f32
      %91 = vector.broadcast %cst_71 : f32 to vector<8x128xf32>
      %92 = arith.addf %91, %90 : vector<8x128xf32>
      %93 = arith.mulf %87, %92 : vector<8x128xf32>
      %c0_72 = arith.constant 0 : index
      %c0_73 = arith.constant 0 : index
      %94 = vector.load %arg16[%c0_72, %c0_73] : memref<128x128xf32, #tpu.memory_space<vmem>>, vector<128x128xf32>
      %c0_74 = arith.constant 0 : index
      %c0_75 = arith.constant 0 : index
      %95 = vector.load %arg17[%c0_74, %c0_75] : memref<1x128xf32, #tpu.memory_space<vmem>>, vector<1x128xf32>
      %cst_76 = arith.constant dense<0.000000e+00> : vector<8x128xf32>
      %96 = tpu.matmul %93, %94, %cst_76 {dimension_numbers = #tpu.dot_dimension_numbers<[1], [0], [0], [1], [0, 0, 1, 1], [], []>} : vector<8x128xf32>, vector<128x128xf32>, vector<8x128xf32> -> vector<8x128xf32>
      %97 = vector.broadcast %95 : vector<1x128xf32> to vector<8x128xf32>
      %98 = arith.addf %96, %97 : vector<8x128xf32>
      %99 = vector.extract_strided_slice %40 {offsets = [8, 0], sizes = [8, 128], strides = [1, 1]} : vector<16x128xf32> to vector<8x128xf32>
      %c0_77 = arith.constant 0 : index
      %c0_78 = arith.constant 0 : index
      %100 = vector.load %arg18[%c0_77, %c0_78] : memref<128x128xf32, #tpu.memory_space<vmem>>, vector<128x128xf32>
      %c0_79 = arith.constant 0 : index
      %c0_80 = arith.constant 0 : index
      %101 = vector.load %arg19[%c0_79, %c0_80] : memref<1x128xf32, #tpu.memory_space<vmem>>, vector<1x128xf32>
      %cst_81 = arith.constant dense<0.000000e+00> : vector<8x128xf32>
      %102 = tpu.matmul %99, %100, %cst_81 {dimension_numbers = #tpu.dot_dimension_numbers<[1], [0], [0], [1], [0, 0, 1, 1], [], []>} : vector<8x128xf32>, vector<128x128xf32>, vector<8x128xf32> -> vector<8x128xf32>
      %103 = vector.broadcast %101 : vector<1x128xf32> to vector<8x128xf32>
      %104 = arith.addf %102, %103 : vector<8x128xf32>
      %cst_82 = arith.constant 5.000000e-01 : f32
      %105 = vector.broadcast %cst_82 : f32 to vector<8x128xf32>
      %106 = arith.mulf %105, %104 : vector<8x128xf32>
      %cst_83 = arith.constant 1.41421354 : f32
      %107 = vector.broadcast %cst_83 : f32 to vector<8x128xf32>
      %108 = arith.divf %104, %107 : vector<8x128xf32>
      %109 = math.erf %108 : vector<8x128xf32>
      %cst_84 = arith.constant 1.000000e+00 : f32
      %110 = vector.broadcast %cst_84 : f32 to vector<8x128xf32>
      %111 = arith.addf %110, %109 : vector<8x128xf32>
      %112 = arith.mulf %106, %111 : vector<8x128xf32>
      %c0_85 = arith.constant 0 : index
      %c0_86 = arith.constant 0 : index
      %113 = vector.load %arg20[%c0_85, %c0_86] : memref<128x128xf32, #tpu.memory_space<vmem>>, vector<128x128xf32>
      %c0_87 = arith.constant 0 : index
      %c0_88 = arith.constant 0 : index
      %114 = vector.load %arg21[%c0_87, %c0_88] : memref<1x128xf32, #tpu.memory_space<vmem>>, vector<1x128xf32>
      %cst_89 = arith.constant dense<0.000000e+00> : vector<8x128xf32>
      %115 = tpu.matmul %112, %113, %cst_89 {dimension_numbers = #tpu.dot_dimension_numbers<[1], [0], [0], [1], [0, 0, 1, 1], [], []>} : vector<8x128xf32>, vector<128x128xf32>, vector<8x128xf32> -> vector<8x128xf32>
      %116 = vector.broadcast %114 : vector<1x128xf32> to vector<8x128xf32>
      %117 = arith.addf %115, %116 : vector<8x128xf32>
      %cst_90 = arith.constant 5.000000e-01 : f32
      %118 = vector.broadcast %cst_90 : f32 to vector<8x128xf32>
      %119 = arith.mulf %118, %117 : vector<8x128xf32>
      %cst_91 = arith.constant 1.41421354 : f32
      %120 = vector.broadcast %cst_91 : f32 to vector<8x128xf32>
      %121 = arith.divf %117, %120 : vector<8x128xf32>
      %122 = math.erf %121 : vector<8x128xf32>
      %cst_92 = arith.constant 1.000000e+00 : f32
      %123 = vector.broadcast %cst_92 : f32 to vector<8x128xf32>
      %124 = arith.addf %123, %122 : vector<8x128xf32>
      %125 = arith.mulf %119, %124 : vector<8x128xf32>
      %c0_93 = arith.constant 0 : index
      %c0_94 = arith.constant 0 : index
      %126 = vector.load %arg22[%c0_93, %c0_94] : memref<128x128xf32, #tpu.memory_space<vmem>>, vector<128x128xf32>
      %c0_95 = arith.constant 0 : index
      %c0_96 = arith.constant 0 : index
      %127 = vector.load %arg23[%c0_95, %c0_96] : memref<1x128xf32, #tpu.memory_space<vmem>>, vector<1x128xf32>
      %cst_97 = arith.constant dense<0.000000e+00> : vector<8x128xf32>
      %128 = tpu.matmul %125, %126, %cst_97 {dimension_numbers = #tpu.dot_dimension_numbers<[1], [0], [0], [1], [0, 0, 1, 1], [], []>} : vector<8x128xf32>, vector<128x128xf32>, vector<8x128xf32> -> vector<8x128xf32>
      %129 = vector.broadcast %127 : vector<1x128xf32> to vector<8x128xf32>
      %130 = arith.addf %128, %129 : vector<8x128xf32>
      %cst_98 = arith.constant 5.000000e-01 : f32
      %131 = vector.broadcast %cst_98 : f32 to vector<8x128xf32>
      %132 = arith.mulf %131, %130 : vector<8x128xf32>
      %cst_99 = arith.constant 1.41421354 : f32
      %133 = vector.broadcast %cst_99 : f32 to vector<8x128xf32>
      %134 = arith.divf %130, %133 : vector<8x128xf32>
      %135 = math.erf %134 : vector<8x128xf32>
      %cst_100 = arith.constant 1.000000e+00 : f32
      %136 = vector.broadcast %cst_100 : f32 to vector<8x128xf32>
      %137 = arith.addf %136, %135 : vector<8x128xf32>
      %138 = arith.mulf %132, %137 : vector<8x128xf32>
      %c0_101 = arith.constant 0 : index
      %c0_102 = arith.constant 0 : index
      %139 = vector.load %arg24[%c0_101, %c0_102] : memref<128x128xf32, #tpu.memory_space<vmem>>, vector<128x128xf32>
      %c0_103 = arith.constant 0 : index
      %c0_104 = arith.constant 0 : index
      %140 = vector.load %arg25[%c0_103, %c0_104] : memref<1x128xf32, #tpu.memory_space<vmem>>, vector<1x128xf32>
      %cst_105 = arith.constant dense<0.000000e+00> : vector<8x128xf32>
      %141 = tpu.matmul %138, %139, %cst_105 {dimension_numbers = #tpu.dot_dimension_numbers<[1], [0], [0], [1], [0, 0, 1, 1], [], []>} : vector<8x128xf32>, vector<128x128xf32>, vector<8x128xf32> -> vector<8x128xf32>
      %142 = vector.broadcast %140 : vector<1x128xf32> to vector<8x128xf32>
      %143 = arith.addf %141, %142 : vector<8x128xf32>
      %cst_106 = arith.constant 5.000000e-01 : f32
      %144 = vector.broadcast %cst_106 : f32 to vector<8x128xf32>
      %145 = arith.mulf %144, %143 : vector<8x128xf32>
      %cst_107 = arith.constant 1.41421354 : f32
      %146 = vector.broadcast %cst_107 : f32 to vector<8x128xf32>
      %147 = arith.divf %143, %146 : vector<8x128xf32>
      %148 = math.erf %147 : vector<8x128xf32>
      %cst_108 = arith.constant 1.000000e+00 : f32
      %149 = vector.broadcast %cst_108 : f32 to vector<8x128xf32>
      %150 = arith.addf %149, %148 : vector<8x128xf32>
      %151 = arith.mulf %145, %150 : vector<8x128xf32>
      %c0_109 = arith.constant 0 : index
      %c0_110 = arith.constant 0 : index
      %152 = vector.load %arg26[%c0_109, %c0_110] : memref<128x128xf32, #tpu.memory_space<vmem>>, vector<128x128xf32>
      %c0_111 = arith.constant 0 : index
      %c0_112 = arith.constant 0 : index
      %153 = vector.load %arg27[%c0_111, %c0_112] : memref<1x128xf32, #tpu.memory_space<vmem>>, vector<1x128xf32>
      %cst_113 = arith.constant dense<0.000000e+00> : vector<8x128xf32>
      %154 = tpu.matmul %151, %152, %cst_113 {dimension_numbers = #tpu.dot_dimension_numbers<[1], [0], [0], [1], [0, 0, 1, 1], [], []>} : vector<8x128xf32>, vector<128x128xf32>, vector<8x128xf32> -> vector<8x128xf32>
      %155 = vector.broadcast %153 : vector<1x128xf32> to vector<8x128xf32>
      %156 = arith.addf %154, %155 : vector<8x128xf32>
      %157 = arith.addf %98, %156 : vector<8x128xf32>
      %158 = tpu.iota {dimensions = array<i32: 1>} : vector<8x128xi32>
      %c4_i32 = arith.constant 4 : i32
      %159 = vector.broadcast %c4_i32 : i32 to vector<8x128xi32>
      %160 = arith.cmpi slt, %158, %159 : vector<8x128xi32>
      %cst_114 = arith.constant -1.000000e+30 : f32
      %161 = vector.broadcast %cst_114 : f32 to vector<8x128xf32>
      %162 = arith.select %160, %157, %161 : vector<8x128xi1>, vector<8x128xf32>
      %cst_115 = arith.constant dense<0xFF800000> : vector<8xf32>
      %163 = vector.multi_reduction <maximumf>, %162, %cst_115 [1] : vector<8x128xf32> to vector<8xf32>
      %164 = vector.shape_cast %163 : vector<8xf32> to vector<8x1xf32>
      %165 = vector.broadcast %164 : vector<8x1xf32> to vector<8x128xf32>
      %166 = arith.subf %162, %165 : vector<8x128xf32>
      %167 = math.exp %166 : vector<8x128xf32>
      %cst_116 = arith.constant dense<0.000000e+00> : vector<8xf32>
      %168 = vector.multi_reduction <add>, %167, %cst_116 [1] : vector<8x128xf32> to vector<8xf32>
      %169 = vector.shape_cast %168 : vector<8xf32> to vector<8x1xf32>
      %170 = tpu.reciprocal %169 {approx = true} : vector<8x1xf32> -> vector<8x1xf32>
      %171 = vector.broadcast %170 : vector<8x1xf32> to vector<8x128xf32>
      %172 = arith.mulf %167, %171 : vector<8x128xf32>
      %c0_117 = arith.constant 0 : index
      %c0_118 = arith.constant 0 : index
      %173 = vector.load %arg28[%c0_117, %c0_118] : memref<8x128xf32, #tpu.memory_space<vmem>>, vector<8x128xf32>
      tpu.vector_store %arg28[%c0_117, %c0_118], %172 {strides = array<i32>} : memref<8x128xf32, #tpu.memory_space<vmem>>, vector<8x128xf32>,
    } else {
    }
    return
  }
  func.func @transform_0(%arg0: i32, %arg1: i32) -> (i32, i32, i32) {
    %c0_i32 = arith.constant 0 : i32
    %c0_i32_0 = arith.constant 0 : i32
    return %arg0, %arg1, %c0_i32 : i32, i32, i32
  }
  func.func @transform_1(%arg0: i32, %arg1: i32) -> (i32, i32, i32) {
    %c0_i32 = arith.constant 0 : i32
    %c0_i32_0 = arith.constant 0 : i32
    return %arg0, %arg1, %c0_i32 : i32, i32, i32
  }
  func.func @transform_2(%arg0: i32, %arg1: i32) -> (i32, i32, i32) {
    %c0_i32 = arith.constant 0 : i32
    %c0_i32_0 = arith.constant 0 : i32
    return %arg0, %arg1, %c0_i32 : i32, i32, i32
  }
  func.func @transform_3(%arg0: i32, %arg1: i32) -> (i32, i32, i32) {
    %c0_i32 = arith.constant 0 : i32
    %c0_i32_0 = arith.constant 0 : i32
    return %arg0, %arg1, %c0_i32 : i32, i32, i32
  }
  func.func @transform_4(%arg0: i32, %arg1: i32) -> (i32, i32) {
    %c0_i32 = arith.constant 0 : i32
    %c0_i32_0 = arith.constant 0 : i32
    %c0_i32_1 = arith.constant 0 : i32
    return %c0_i32, %c0_i32_0 : i32, i32
  }
  func.func @transform_5(%arg0: i32, %arg1: i32) -> (i32, i32) {
    %c0_i32 = arith.constant 0 : i32
    %c0_i32_0 = arith.constant 0 : i32
    %c0_i32_1 = arith.constant 0 : i32
    return %c0_i32, %c0_i32_0 : i32, i32
  }
  func.func @transform_6(%arg0: i32, %arg1: i32) -> (i32, i32) {
    %c0_i32 = arith.constant 0 : i32
    %c0_i32_0 = arith.constant 0 : i32
    %c0_i32_1 = arith.constant 0 : i32
    return %c0_i32, %c0_i32_0 : i32, i32
  }
  func.func @transform_7(%arg0: i32, %arg1: i32) -> (i32, i32) {
    %c0_i32 = arith.constant 0 : i32
    %c0_i32_0 = arith.constant 0 : i32
    %c0_i32_1 = arith.constant 0 : i32
    return %c0_i32, %c0_i32_0 : i32, i32
  }
  func.func @transform_8(%arg0: i32, %arg1: i32) -> (i32, i32) {
    %c0_i32 = arith.constant 0 : i32
    %c0_i32_0 = arith.constant 0 : i32
    %c0_i32_1 = arith.constant 0 : i32
    return %c0_i32, %c0_i32_0 : i32, i32
  }
  func.func @transform_9(%arg0: i32, %arg1: i32) -> (i32, i32) {
    %c0_i32 = arith.constant 0 : i32
    %c0_i32_0 = arith.constant 0 : i32
    %c0_i32_1 = arith.constant 0 : i32
    return %c0_i32, %c0_i32_0 : i32, i32
  }
  func.func @transform_10(%arg0: i32, %arg1: i32) -> (i32, i32) {
    %c0_i32 = arith.constant 0 : i32
    %c0_i32_0 = arith.constant 0 : i32
    %c0_i32_1 = arith.constant 0 : i32
    return %c0_i32, %c0_i32_0 : i32, i32
  }
  func.func @transform_11(%arg0: i32, %arg1: i32) -> (i32, i32) {
    %c0_i32 = arith.constant 0 : i32
    %c0_i32_0 = arith.constant 0 : i32
    %c0_i32_1 = arith.constant 0 : i32
    return %c0_i32, %c0_i32_0 : i32, i32
  }
  func.func @transform_12(%arg0: i32, %arg1: i32) -> (i32, i32) {
    %c0_i32 = arith.constant 0 : i32
    %c0_i32_0 = arith.constant 0 : i32
    %c0_i32_1 = arith.constant 0 : i32
    return %c0_i32, %c0_i32_0 : i32, i32
  }
  func.func @transform_13(%arg0: i32, %arg1: i32) -> (i32, i32) {
    %c0_i32 = arith.constant 0 : i32
    %c0_i32_0 = arith.constant 0 : i32
    %c0_i32_1 = arith.constant 0 : i32
    return %c0_i32, %c0_i32_0 : i32, i32
  }
  func.func @transform_14(%arg0: i32, %arg1: i32) -> (i32, i32) {
    %c0_i32 = arith.constant 0 : i32
    %c0_i32_0 = arith.constant 0 : i32
    %c0_i32_1 = arith.constant 0 : i32
    return %c0_i32, %c0_i32_0 : i32, i32
  }
  func.func @transform_15(%arg0: i32, %arg1: i32) -> (i32, i32) {
    %c0_i32 = arith.constant 0 : i32
    %c0_i32_0 = arith.constant 0 : i32
    %c0_i32_1 = arith.constant 0 : i32
    return %c0_i32, %c0_i32_0 : i32, i32
  }
  func.func @transform_16(%arg0: i32, %arg1: i32) -> (i32, i32) {
    %c0_i32 = arith.constant 0 : i32
    %c0_i32_0 = arith.constant 0 : i32
    %c0_i32_1 = arith.constant 0 : i32
    return %c0_i32, %c0_i32_0 : i32, i32
  }
  func.func @transform_17(%arg0: i32, %arg1: i32) -> (i32, i32) {
    %c0_i32 = arith.constant 0 : i32
    %c0_i32_0 = arith.constant 0 : i32
    %c0_i32_1 = arith.constant 0 : i32
    return %c0_i32, %c0_i32_0 : i32, i32
  }
  func.func @transform_18(%arg0: i32, %arg1: i32) -> (i32, i32) {
    %c0_i32 = arith.constant 0 : i32
    %c0_i32_0 = arith.constant 0 : i32
    %c0_i32_1 = arith.constant 0 : i32
    return %c0_i32, %c0_i32_0 : i32, i32
  }
  func.func @transform_19(%arg0: i32, %arg1: i32) -> (i32, i32) {
    %c0_i32 = arith.constant 0 : i32
    %c0_i32_0 = arith.constant 0 : i32
    %c0_i32_1 = arith.constant 0 : i32
    return %c0_i32, %c0_i32_0 : i32, i32
  }
  func.func @transform_20(%arg0: i32, %arg1: i32) -> (i32, i32) {
    %c0_i32 = arith.constant 0 : i32
    %c0_i32_0 = arith.constant 0 : i32
    %c0_i32_1 = arith.constant 0 : i32
    return %c0_i32, %c0_i32_0 : i32, i32
  }
  func.func @transform_21(%arg0: i32, %arg1: i32) -> (i32, i32) {
    %c0_i32 = arith.constant 0 : i32
    %c0_i32_0 = arith.constant 0 : i32
    %c0_i32_1 = arith.constant 0 : i32
    return %c0_i32, %c0_i32_0 : i32, i32
  }
  func.func @transform_22(%arg0: i32, %arg1: i32) -> (i32, i32) {
    %c0_i32 = arith.constant 0 : i32
    %c0_i32_0 = arith.constant 0 : i32
    %c0_i32_1 = arith.constant 0 : i32
    return %c0_i32, %c0_i32_0 : i32, i32
  }
  func.func @transform_23(%arg0: i32, %arg1: i32) -> (i32, i32) {
    %c0_i32 = arith.constant 0 : i32
    %c0_i32_0 = arith.constant 0 : i32
    %c0_i32_1 = arith.constant 0 : i32
    return %c0_i32, %c0_i32_0 : i32, i32
  }
  func.func @transform_24(%arg0: i32, %arg1: i32) -> (i32, i32) {
    %c0_i32 = arith.constant 0 : i32
    %c0_i32_0 = arith.constant 0 : i32
    %c0_i32_1 = arith.constant 0 : i32
    return %c0_i32, %c0_i32_0 : i32, i32
  }
  func.func @transform_25(%arg0: i32, %arg1: i32) -> (i32, i32) {
    %c0_i32 = arith.constant 0 : i32
    %c0_i32_0 = arith.constant 0 : i32
    %c0_i32_1 = arith.constant 0 : i32
    return %c0_i32, %c0_i32_0 : i32, i32
  }
  func.func @transform_26(%arg0: i32, %arg1: i32) -> (i32, i32) {
    %c0_i32 = arith.constant 0 : i32
    %c0_i32_0 = arith.constant 0 : i32
    return %arg0, %c0_i32 : i32, i32
  }
}

</mosaic_0001>

<llo_original>
// kernel: tpu_custom_call.1
$region0: #{tpu_custom_call.1}
  #allocation0 [shape = 'u32[]', space=smem, size = 0x4, offset = 0x4, fixed_abs, tag = 'smem constant byte address 0x4 - core index']
  #allocation1 [shape = 'u32[72,128]{1,0:T(1,128)}', space=vmem, size = 0x9000, scoped, tag = 'internal scratch']
  #allocation2 [shape = 'f32[16,32]{1,0:T(8,128)}', space=vmem, size = 0x2000, scoped, tag = 'scratch operand']
  #allocation3 [shape = 'f32[16,1]{1,0:T(8,128)}', space=vmem, size = 0x2000, scoped, tag = 'scratch operand']
  %s0 = inlined_call_operand.vmem [shape: f32[16,16,32], index: 0, kind: input, shape index: {}]
  %s1 = inlined_call_operand.vmem [shape: f32[16,16,1], index: 1, kind: input, shape index: {}]
  %s2 = inlined_call_operand.vmem [shape: f32[16,16,32], index: 2, kind: input, shape index: {}]
  %s3 = inlined_call_operand.vmem [shape: f32[16,16,1], index: 3, kind: input, shape index: {}]
  %s4 = inlined_call_operand.hbm [shape: f32[32,128], index: 4, kind: input, shape index: {}]
  %s5 = inlined_call_operand.vmem [shape: f32[1,128], index: 5, kind: input, shape index: {}]
  %s6 = inlined_call_operand.hbm [shape: f32[128,128], index: 6, kind: input, shape index: {}]
  %s7 = inlined_call_operand.vmem [shape: f32[1,128], index: 7, kind: input, shape index: {}]
  %s8 = inlined_call_operand.hbm [shape: f32[128,128], index: 8, kind: input, shape index: {}]
  %s9 = inlined_call_operand.vmem [shape: f32[1,128], index: 9, kind: input, shape index: {}]
  %s10 = inlined_call_operand.hbm [shape: f32[128,128], index: 10, kind: input, shape index: {}]
  %s11 = inlined_call_operand.vmem [shape: f32[1,128], index: 11, kind: input, shape index: {}]
  %s12 = inlined_call_operand.hbm [shape: f32[128,128], index: 12, kind: input, shape index: {}]
  %s13 = inlined_call_operand.vmem [shape: f32[1,128], index: 13, kind: input, shape index: {}]
  %s14 = inlined_call_operand.hbm [shape: f32[128,128], index: 14, kind: input, shape index: {}]
  %s15 = inlined_call_operand.vmem [shape: f32[1,128], index: 15, kind: input, shape index: {}]
  %s16 = inlined_call_operand.hbm [shape: f32[128,128], index: 16, kind: input, shape index: {}]
  %s17 = inlined_call_operand.vmem [shape: f32[1,128], index: 17, kind: input, shape index: {}]
  %s18 = inlined_call_operand.hbm [shape: f32[128,128], index: 18, kind: input, shape index: {}]
  %s19 = inlined_call_operand.vmem [shape: f32[1,128], index: 19, kind: input, shape index: {}]
  %s20 = inlined_call_operand.hbm [shape: f32[128,128], index: 20, kind: input, shape index: {}]
  %s21 = inlined_call_operand.vmem [shape: f32[1,128], index: 21, kind: input, shape index: {}]
  %s22 = inlined_call_operand.hbm [shape: f32[128,128], index: 22, kind: input, shape index: {}]
  %s23 = inlined_call_operand.vmem [shape: f32[1,128], index: 23, kind: input, shape index: {}]
  %s24 = inlined_call_operand.hbm [shape: f32[128,128], index: 24, kind: input, shape index: {}]
  %s25 = inlined_call_operand.vmem [shape: f32[1,128], index: 25, kind: input, shape index: {}]
  %s26 = inlined_call_operand.hbm [shape: f32[16,128], index: 26, kind: output, shape index: {}]
  %s27 = sld [smem:[#allocation0]]
  $region341: #{tpu_custom_call.1} parent=0
    _
  %s29 = ssub.s32 1, %s27
  %s30 = scalar_select 0, %s29, %s27
  $region1: #{tpu_custom_call.1} parent=0
    #allocation4 [shape = 'u8[65536]{0}', space=vmem, size = 0x10000, scoped, tag = 'input window, operand 0']
    #allocation5 [shape = 'u8[65536]{0}', space=vmem, size = 0x10000, scoped, tag = 'input window, operand 1']
    #allocation6 [shape = 'u8[65536]{0}', space=vmem, size = 0x10000, scoped, tag = 'input window, operand 2']
    #allocation7 [shape = 'u8[65536]{0}', space=vmem, size = 0x10000, scoped, tag = 'input window, operand 3']
    #allocation8 [shape = 'u8[16384]{0}', space=vmem, size = 0x4000, scoped, tag = 'input window, operand 4, single buffered']
    #allocation9 [shape = 's32[2]{0}', space=sflag, size = 0x8, scoped, tag = 'scoped memory for tpu_custom_call.1']
    #allocation10 [shape = 's32[2]{0}', space=sflag, size = 0x8, scoped, tag = 'scoped memory for tpu_custom_call.1']
    #allocation11 [shape = 'u8[65536]{0}', space=vmem, size = 0x10000, scoped, tag = 'input window, operand 6, single buffered']
    #allocation12 [shape = 's32[1]{0}', space=sflag, size = 0x4, scoped, tag = 'scoped memory for tpu_custom_call.1']
    #allocation13 [shape = 'u8[65536]{0}', space=vmem, size = 0x10000, scoped, tag = 'input window, operand 8, single buffered']
    #allocation14 [shape = 'u8[65536]{0}', space=vmem, size = 0x10000, scoped, tag = 'input window, operand 10, single buffered']
    #allocation15 [shape = 's32[1]{0}', space=sflag, size = 0x4, scoped, tag = 'scoped memory for tpu_custom_call.1']
    #allocation16 [shape = 'u8[65536]{0}', space=vmem, size = 0x10000, scoped, tag = 'input window, operand 12, single buffered']
    #allocation17 [shape = 'u8[65536]{0}', space=vmem, size = 0x10000, scoped, tag = 'input window, operand 14, single buffered']
    #allocation18 [shape = 's32[1]{0}', space=sflag, size = 0x4, scoped, tag = 'scoped memory for tpu_custom_call.1']
    #allocation19 [shape = 'u8[65536]{0}', space=vmem, size = 0x10000, scoped, tag = 'input window, operand 16, single buffered']
    #allocation20 [shape = 'u8[65536]{0}', space=vmem, size = 0x10000, scoped, tag = 'input window, operand 18, single buffered']
    #allocation21 [shape = 's32[1]{0}', space=sflag, size = 0x4, scoped, tag = 'scoped memory for tpu_custom_call.1']
    #allocation22 [shape = 'u8[65536]{0}', space=vmem, size = 0x10000, scoped, tag = 'input window, operand 20, single buffered']
    #allocation23 [shape = 'u8[65536]{0}', space=vmem, size = 0x10000, scoped, tag = 'input window, operand 22, single buffered']
    #allocation24 [shape = 's32[1]{0}', space=sflag, size = 0x4, scoped, tag = 'scoped memory for tpu_custom_call.1']
    #allocation25 [shape = 'u8[65536]{0}', space=vmem, size = 0x10000, scoped, tag = 'input window, operand 24, single buffered']
    #allocation26 [shape = 'u8[8192]{0}', space=vmem, size = 0x2000, scoped, tag = 'output window, operand 0']
    %31 = vsyncpa [#allocation9], 0
    %32 = vsyncpa [#allocation12], 0
    %33 = vsyncpa [#allocation15], 0
    %34 = vsyncpa [#allocation18], 0
    %35 = vsyncpa [#allocation21], 0
    %36 = vsyncpa [#allocation24], 0
    %37 = vsyncpa [#allocation10], 0
    %s38 = scalar_lea.sflag [#allocation10], 1
    %39 = vsyncpa %s38, 0
    loop: start=0, step=1, limit=6
    $region2: #{tpu_custom_call.1} parent=1 // loop_pre_header
      _
    $region3: #{tpu_custom_call.1} parent=1 // loop_header
      %s41 = sphi 0, %s45
      %p42 = scmp.ge.s32.totalorder %s41, 6
      %s48 = sphi 0, %s60
      %s49 = sphi 0, %s56
      %s50 = sphi 0, %s48
      %s51 = sphi 0, %s49
      %s52 = sphi 0, %s50
      %s53 = sphi 0, %s51
      %s65 = sphi 0, %s67
      %s68 = sphi 0, %s65
      %s69 = sphi 0, %s68
      %s85 = sphi 0, %s69
      %s93 = sphi 0, %s95
      %s96 = sphi 0, %s93
      %s97 = sphi 0, %s96
      %s113 = sphi 0, %s97
      %s121 = sphi 0, %s123
      %s124 = sphi 0, %s121
      %s125 = sphi 0, %s124
      %s141 = sphi 0, %s125
      %s149 = sphi 0, %s151
      %s152 = sphi 0, %s149
      %s153 = sphi 0, %s152
      %s169 = sphi 0, %s153
      %s173 = sphi 0, %s173
      %s175 = sphi 0, %s173
      %s176 = sphi 0, %s175
      %s190 = sphi 0, %s176
      %s194 = sphi 0, %s194
      %s196 = sphi 0, %s194
      %s197 = sphi 0, %s196
      %s211 = sphi 0, %s197
      %s215 = sphi 0, %s215
      %s217 = sphi 0, %s215
      %s218 = sphi 0, %s217
      %s232 = sphi 0, %s218
      %s236 = sphi 0, %s236
      %s238 = sphi 0, %s236
      %s239 = sphi 0, %s238
      %s253 = sphi 0, %s239
      %s257 = sphi 0, %s257
      %s259 = sphi 0, %s257
      %s260 = sphi 0, %s259
      %s274 = sphi 0, %s260
      %s278 = sphi 0, %s278
      %s280 = sphi 0, %s278
      %s281 = sphi 0, %s280
      %s295 = sphi 0, %s281
      %s299 = sphi 0, %s299
      %s301 = sphi 0, %s299
      %s302 = sphi 0, %s301
      %s316 = sphi 0, %s302
      %s320 = sphi 0, %s320
      %s322 = sphi 0, %s320
      %s323 = sphi 0, %s322
      %s337 = sphi 0, %s323
      %s341 = sphi 0, %s341
      %s343 = sphi 0, %s341
      %s344 = sphi 0, %s343
      %s358 = sphi 0, %s344
      %s362 = sphi 0, %s362
      %s364 = sphi 0, %s362
      %s365 = sphi 0, %s364
      %s379 = sphi 0, %s365
      %s383 = sphi 0, %s383
      %s385 = sphi 0, %s383
      %s386 = sphi 0, %s385
      %s400 = sphi 0, %s386
      %s404 = sphi 0, %s404
      %s406 = sphi 0, %s404
      %s407 = sphi 0, %s406
      %s421 = sphi 0, %s407
      %s425 = sphi 0, %s425
      %s427 = sphi 0, %s425
      %s428 = sphi 0, %s427
      %s442 = sphi 0, %s428
      %s446 = sphi 0, %s446
      %s448 = sphi 0, %s446
      %s449 = sphi 0, %s448
      %s463 = sphi 0, %s449
      %s467 = sphi 0, %s467
      %s469 = sphi 0, %s467
      %s470 = sphi 0, %s469
      %s484 = sphi 0, %s470
      %s488 = sphi 0, %s488
      %s490 = sphi 0, %s488
      %s491 = sphi 0, %s490
      %s505 = sphi 0, %s491
      %s509 = sphi 0, %s509
      %s511 = sphi 0, %s509
      %s512 = sphi 0, %s511
      %s526 = sphi 0, %s512
      %s530 = sphi 0, %s530
      %s532 = sphi 0, %s530
      %s533 = sphi 0, %s532
      %s547 = sphi 0, %s533
      %s551 = sphi 0, %s551
      %s553 = sphi 0, %s551
      %s554 = sphi 0, %s553
      %s568 = sphi 0, %s554
      %s572 = sphi 0, %s572
      %s574 = sphi 0, %s572
      %s575 = sphi 0, %s574
      %s589 = sphi 0, %s575
      %s593 = sphi 0, %s593
      %s595 = sphi 0, %s593
      %s596 = sphi 0, %s595
      %s610 = sphi 0, %s596
      %s614 = sphi 0, %s614
      %s616 = sphi 0, %s614
      %s617 = sphi 0, %s616
      %s631 = sphi 0, %s617
      %s637 = sphi 0, %s639
      %s640 = sphi 0, %s637
      %s641 = sphi 0, %s640
      %s657 = sphi 0, %s641
    $region4: #{tpu_custom_call.1} parent=1 // loop_header_branch
      %44 = sbr.rel (%p42) target = $region8
    $region5: #{tpu_custom_call.1} parent=1 // loop_body
      %s46 = ssub.s32 %s41, 1
      %s47 = ssub.s32 %s41, 2
      %s54 = sadd.s32 1, %s49
      %p55 = scmp.ge.s32.totalorder %s54, 2
      %s56 = scalar_select %p55, 0, %s54
      %s57 = sadd.s32 1, %s48
      %s58 = scalar_select %p55, %s57, %s48
      %p59 = scmp.ge.s32.totalorder %s58, 2
      %s60 = scalar_select %p59, 0, %s58
      %s61 = ssub.s32 %s48, %s60
      %s62 = ssub.s32 %s49, %s56
      %s63 = sor.u32 %s61, %s62
      %p64 = scmp.eq.s32.totalorder %s63, 0
      %s66 = sadd.s32 %s65, 1
      %s67 = scalar_select %p64, %s65, %s66
      %p70 = pneg %p64
      %p71 = scmp.eq.s32.totalorder %s41, 3
      %p72 = por %p70, %p71
      %p73 = scmp.ne.s32.totalorder %s65, %s68
      %p74 = scmp.eq.s32.totalorder %s41, 0
      %p75 = por %p73, %p74
      %p76 = scmp.ne.s32.totalorder %s65, %s68
      %p77 = scmp.eq.s32.totalorder %s46, 3
      %p78 = por %p76, %p77
      %p79 = scmp.ne.s32.totalorder %s68, %s69
      %p80 = scmp.eq.s32.totalorder %s46, 0
      %p81 = por %p79, %p80
      %p82 = scmp.ne.s32.totalorder %s68, %s69
      %p83 = scmp.eq.s32.totalorder %s47, 3
      %p84 = por %p82, %p83
      %p86 = scmp.ne.s32.totalorder %s69, %s85
      %p87 = scmp.eq.s32.totalorder %s47, 0
      %p88 = por %p86, %p87
      %s89 = ssub.s32 %s48, %s60
      %s90 = ssub.s32 %s49, %s56
      %s91 = sor.u32 %s89, %s90
      %p92 = scmp.eq.s32.totalorder %s91, 0
      %s94 = sadd.s32 %s93, 1
      %s95 = scalar_select %p92, %s93, %s94
      %p98 = pneg %p92
      %p99 = scmp.eq.s32.totalorder %s41, 3
      %p100 = por %p98, %p99
      %p101 = scmp.ne.s32.totalorder %s93, %s96
      %p102 = scmp.eq.s32.totalorder %s41, 0
      %p103 = por %p101, %p102
      %p104 = scmp.ne.s32.totalorder %s93, %s96
      %p105 = scmp.eq.s32.totalorder %s46, 3
      %p106 = por %p104, %p105
      %p107 = scmp.ne.s32.totalorder %s96, %s97
      %p108 = scmp.eq.s32.totalorder %s46, 0
      %p109 = por %p107, %p108
      %p110 = scmp.ne.s32.totalorder %s96, %s97
      %p111 = scmp.eq.s32.totalorder %s47, 3
      %p112 = por %p110, %p111
      %p114 = scmp.ne.s32.totalorder %s97, %s113
      %p115 = scmp.eq.s32.totalorder %s47, 0
      %p116 = por %p114, %p115
      %s117 = ssub.s32 %s48, %s60
      %s118 = ssub.s32 %s49, %s56
      %s119 = sor.u32 %s117, %s118
      %p120 = scmp.eq.s32.totalorder %s119, 0
      %s122 = sadd.s32 %s121, 1
      %s123 = scalar_select %p120, %s121, %s122
      %p126 = pneg %p120
      %p127 = scmp.eq.s32.totalorder %s41, 3
      %p128 = por %p126, %p127
      %p129 = scmp.ne.s32.totalorder %s121, %s124
      %p130 = scmp.eq.s32.totalorder %s41, 0
      %p131 = por %p129, %p130
      %p132 = scmp.ne.s32.totalorder %s121, %s124
      %p133 = scmp.eq.s32.totalorder %s46, 3
      %p134 = por %p132, %p133
      %p135 = scmp.ne.s32.totalorder %s124, %s125
      %p136 = scmp.eq.s32.totalorder %s46, 0
      %p137 = por %p135, %p136
      %p138 = scmp.ne.s32.totalorder %s124, %s125
      %p139 = scmp.eq.s32.totalorder %s47, 3
      %p140 = por %p138, %p139
      %p142 = scmp.ne.s32.totalorder %s125, %s141
      %p143 = scmp.eq.s32.totalorder %s47, 0
      %p144 = por %p142, %p143
      %s145 = ssub.s32 %s48, %s60
      %s146 = ssub.s32 %s49, %s56
      %s147 = sor.u32 %s145, %s146
      %p148 = scmp.eq.s32.totalorder %s147, 0
      %s150 = sadd.s32 %s149, 1
      %s151 = scalar_select %p148, %s149, %s150
      %p154 = pneg %p148
      %p155 = scmp.eq.s32.totalorder %s41, 3
      %p156 = por %p154, %p155
      %p157 = scmp.ne.s32.totalorder %s149, %s152
      %p158 = scmp.eq.s32.totalorder %s41, 0
      %p159 = por %p157, %p158
      %p160 = scmp.ne.s32.totalorder %s149, %s152
      %p161 = scmp.eq.s32.totalorder %s46, 3
      %p162 = por %p160, %p161
      %p163 = scmp.ne.s32.totalorder %s152, %s153
      %p164 = scmp.eq.s32.totalorder %s46, 0
      %p165 = por %p163, %p164
      %p166 = scmp.ne.s32.totalorder %s152, %s153
      %p167 = scmp.eq.s32.totalorder %s47, 3
      %p168 = por %p166, %p167
      %p170 = scmp.ne.s32.totalorder %s153, %s169
      %p171 = scmp.eq.s32.totalorder %s47, 0
      %p172 = por %p170, %p171
      %s174 = sadd.s32 %s173, 1
      %p177 = scmp.eq.s32.totalorder %s41, 3
      %p178 = scmp.ne.s32.totalorder %s173, %s175
      %p179 = scmp.eq.s32.totalorder %s41, 0
      %p180 = por %p178, %p179
      %p181 = scmp.ne.s32.totalorder %s173, %s175
      %p182 = scmp.eq.s32.totalorder %s46, 3
      %p183 = por %p181, %p182
      %p184 = scmp.ne.s32.totalorder %s175, %s176
      %p185 = scmp.eq.s32.totalorder %s46, 0
      %p186 = por %p184, %p185
      %p187 = scmp.ne.s32.totalorder %s175, %s176
      %p188 = scmp.eq.s32.totalorder %s47, 3
      %p189 = por %p187, %p188
      %p191 = scmp.ne.s32.totalorder %s176, %s190
      %p192 = scmp.eq.s32.totalorder %s47, 0
      %p193 = por %p191, %p192
      %s195 = sadd.s32 %s194, 1
      %p198 = scmp.eq.s32.totalorder %s41, 3
      %p199 = scmp.ne.s32.totalorder %s194, %s196
      %p200 = scmp.eq.s32.totalorder %s41, 0
      %p201 = por %p199, %p200
      %p202 = scmp.ne.s32.totalorder %s194, %s196
      %p203 = scmp.eq.s32.totalorder %s46, 3
      %p204 = por %p202, %p203
      %p205 = scmp.ne.s32.totalorder %s196, %s197
      %p206 = scmp.eq.s32.totalorder %s46, 0
      %p207 = por %p205, %p206
      %p208 = scmp.ne.s32.totalorder %s196, %s197
      %p209 = scmp.eq.s32.totalorder %s47, 3
      %p210 = por %p208, %p209
      %p212 = scmp.ne.s32.totalorder %s197, %s211
      %p213 = scmp.eq.s32.totalorder %s47, 0
      %p214 = por %p212, %p213
      %s216 = sadd.s32 %s215, 1
      %p219 = scmp.eq.s32.totalorder %s41, 3
      %p220 = scmp.ne.s32.totalorder %s215, %s217
      %p221 = scmp.eq.s32.totalorder %s41, 0
      %p222 = por %p220, %p221
      %p223 = scmp.ne.s32.totalorder %s215, %s217
      %p224 = scmp.eq.s32.totalorder %s46, 3
      %p225 = por %p223, %p224
      %p226 = scmp.ne.s32.totalorder %s217, %s218
      %p227 = scmp.eq.s32.totalorder %s46, 0
      %p228 = por %p226, %p227
      %p229 = scmp.ne.s32.totalorder %s217, %s218
      %p230 = scmp.eq.s32.totalorder %s47, 3
      %p231 = por %p229, %p230
      %p233 = scmp.ne.s32.totalorder %s218, %s232
      %p234 = scmp.eq.s32.totalorder %s47, 0
      %p235 = por %p233, %p234
      %s237 = sadd.s32 %s236, 1
      %p240 = scmp.eq.s32.totalorder %s41, 3
      %p241 = scmp.ne.s32.totalorder %s236, %s238
      %p242 = scmp.eq.s32.totalorder %s41, 0
      %p243 = por %p241, %p242
      %p244 = scmp.ne.s32.totalorder %s236, %s238
      %p245 = scmp.eq.s32.totalorder %s46, 3
      %p246 = por %p244, %p245
      %p247 = scmp.ne.s32.totalorder %s238, %s239
      %p248 = scmp.eq.s32.totalorder %s46, 0
      %p249 = por %p247, %p248
      %p250 = scmp.ne.s32.totalorder %s238, %s239
      %p251 = scmp.eq.s32.totalorder %s47, 3
      %p252 = por %p250, %p251
      %p254 = scmp.ne.s32.totalorder %s239, %s253
      %p255 = scmp.eq.s32.totalorder %s47, 0
      %p256 = por %p254, %p255
      %s258 = sadd.s32 %s257, 1
      %p261 = scmp.eq.s32.totalorder %s41, 3
      %p262 = scmp.ne.s32.totalorder %s257, %s259
      %p263 = scmp.eq.s32.totalorder %s41, 0
      %p264 = por %p262, %p263
      %p265 = scmp.ne.s32.totalorder %s257, %s259
      %p266 = scmp.eq.s32.totalorder %s46, 3
      %p267 = por %p265, %p266
      %p268 = scmp.ne.s32.totalorder %s259, %s260
      %p269 = scmp.eq.s32.totalorder %s46, 0
      %p270 = por %p268, %p269
      %p271 = scmp.ne.s32.totalorder %s259, %s260
      %p272 = scmp.eq.s32.totalorder %s47, 3
      %p273 = por %p271, %p272
      %p275 = scmp.ne.s32.totalorder %s260, %s274
      %p276 = scmp.eq.s32.totalorder %s47, 0
      %p277 = por %p275, %p276
      %s279 = sadd.s32 %s278, 1
      %p282 = scmp.eq.s32.totalorder %s41, 3
      %p283 = scmp.ne.s32.totalorder %s278, %s280
      %p284 = scmp.eq.s32.totalorder %s41, 0
      %p285 = por %p283, %p284
      %p286 = scmp.ne.s32.totalorder %s278, %s280
      %p287 = scmp.eq.s32.totalorder %s46, 3
      %p288 = por %p286, %p287
      %p289 = scmp.ne.s32.totalorder %s280, %s281
      %p290 = scmp.eq.s32.totalorder %s46, 0
      %p291 = por %p289, %p290
      %p292 = scmp.ne.s32.totalorder %s280, %s281
      %p293 = scmp.eq.s32.totalorder %s47, 3
      %p294 = por %p292, %p293
      %p296 = scmp.ne.s32.totalorder %s281, %s295
      %p297 = scmp.eq.s32.totalorder %s47, 0
      %p298 = por %p296, %p297
      %s300 = sadd.s32 %s299, 1
      %p303 = scmp.eq.s32.totalorder %s41, 3
      %p304 = scmp.ne.s32.totalorder %s299, %s301
      %p305 = scmp.eq.s32.totalorder %s41, 0
      %p306 = por %p304, %p305
      %p307 = scmp.ne.s32.totalorder %s299, %s301
      %p308 = scmp.eq.s32.totalorder %s46, 3
      %p309 = por %p307, %p308
      %p310 = scmp.ne.s32.totalorder %s301, %s302
      %p311 = scmp.eq.s32.totalorder %s46, 0
      %p312 = por %p310, %p311
      %p313 = scmp.ne.s32.totalorder %s301, %s302
      %p314 = scmp.eq.s32.totalorder %s47, 3
      %p315 = por %p313, %p314
      %p317 = scmp.ne.s32.totalorder %s302, %s316
      %p318 = scmp.eq.s32.totalorder %s47, 0
      %p319 = por %p317, %p318
      %s321 = sadd.s32 %s320, 1
      %p324 = scmp.eq.s32.totalorder %s41, 3
      %p325 = scmp.ne.s32.totalorder %s320, %s322
      %p326 = scmp.eq.s32.totalorder %s41, 0
      %p327 = por %p325, %p326
      %p328 = scmp.ne.s32.totalorder %s320, %s322
      %p329 = scmp.eq.s32.totalorder %s46, 3
      %p330 = por %p328, %p329
      %p331 = scmp.ne.s32.totalorder %s322, %s323
      %p332 = scmp.eq.s32.totalorder %s46, 0
      %p333 = por %p331, %p332
      %p334 = scmp.ne.s32.totalorder %s322, %s323
      %p335 = scmp.eq.s32.totalorder %s47, 3
      %p336 = por %p334, %p335
      %p338 = scmp.ne.s32.totalorder %s323, %s337
      %p339 = scmp.eq.s32.totalorder %s47, 0
      %p340 = por %p338, %p339
      %s342 = sadd.s32 %s341, 1
      %p345 = scmp.eq.s32.totalorder %s41, 3
      %p346 = scmp.ne.s32.totalorder %s341, %s343
      %p347 = scmp.eq.s32.totalorder %s41, 0
      %p348 = por %p346, %p347
      %p349 = scmp.ne.s32.totalorder %s341, %s343
      %p350 = scmp.eq.s32.totalorder %s46, 3
      %p351 = por %p349, %p350
      %p352 = scmp.ne.s32.totalorder %s343, %s344
      %p353 = scmp.eq.s32.totalorder %s46, 0
      %p354 = por %p352, %p353
      %p355 = scmp.ne.s32.totalorder %s343, %s344
      %p356 = scmp.eq.s32.totalorder %s47, 3
      %p357 = por %p355, %p356
      %p359 = scmp.ne.s32.totalorder %s344, %s358
      %p360 = scmp.eq.s32.totalorder %s47, 0
      %p361 = por %p359, %p360
      %s363 = sadd.s32 %s362, 1
      %p366 = scmp.eq.s32.totalorder %s41, 3
      %p367 = scmp.ne.s32.totalorder %s362, %s364
      %p368 = scmp.eq.s32.totalorder %s41, 0
      %p369 = por %p367, %p368
      %p370 = scmp.ne.s32.totalorder %s362, %s364
      %p371 = scmp.eq.s32.totalorder %s46, 3
      %p372 = por %p370, %p371
      %p373 = scmp.ne.s32.totalorder %s364, %s365
      %p374 = scmp.eq.s32.totalorder %s46, 0
      %p375 = por %p373, %p374
      %p376 = scmp.ne.s32.totalorder %s364, %s365
      %p377 = scmp.eq.s32.totalorder %s47, 3
      %p378 = por %p376, %p377
      %p380 = scmp.ne.s32.totalorder %s365, %s379
      %p381 = scmp.eq.s32.totalorder %s47, 0
      %p382 = por %p380, %p381
      %s384 = sadd.s32 %s383, 1
      %p387 = scmp.eq.s32.totalorder %s41, 3
      %p388 = scmp.ne.s32.totalorder %s383, %s385
      %p389 = scmp.eq.s32.totalorder %s41, 0
      %p390 = por %p388, %p389
      %p391 = scmp.ne.s32.totalorder %s383, %s385
      %p392 = scmp.eq.s32.totalorder %s46, 3
      %p393 = por %p391, %p392
      %p394 = scmp.ne.s32.totalorder %s385, %s386
      %p395 = scmp.eq.s32.totalorder %s46, 0
      %p396 = por %p394, %p395
      %p397 = scmp.ne.s32.totalorder %s385, %s386
      %p398 = scmp.eq.s32.totalorder %s47, 3
      %p399 = por %p397, %p398
      %p401 = scmp.ne.s32.totalorder %s386, %s400
      %p402 = scmp.eq.s32.totalorder %s47, 0
      %p403 = por %p401, %p402
      %s405 = sadd.s32 %s404, 1
      %p408 = scmp.eq.s32.totalorder %s41, 3
      %p409 = scmp.ne.s32.totalorder %s404, %s406
      %p410 = scmp.eq.s32.totalorder %s41, 0
      %p411 = por %p409, %p410
      %p412 = scmp.ne.s32.totalorder %s404, %s406
      %p413 = scmp.eq.s32.totalorder %s46, 3
      %p414 = por %p412, %p413
      %p415 = scmp.ne.s32.totalorder %s406, %s407
      %p416 = scmp.eq.s32.totalorder %s46, 0
      %p417 = por %p415, %p416
      %p418 = scmp.ne.s32.totalorder %s406, %s407
      %p419 = scmp.eq.s32.totalorder %s47, 3
      %p420 = por %p418, %p419
      %p422 = scmp.ne.s32.totalorder %s407, %s421
      %p423 = scmp.eq.s32.totalorder %s47, 0
      %p424 = por %p422, %p423
      %s426 = sadd.s32 %s425, 1
      %p429 = scmp.eq.s32.totalorder %s41, 3
      %p430 = scmp.ne.s32.totalorder %s425, %s427
      %p431 = scmp.eq.s32.totalorder %s41, 0
      %p432 = por %p430, %p431
      %p433 = scmp.ne.s32.totalorder %s425, %s427
      %p434 = scmp.eq.s32.totalorder %s46, 3
      %p435 = por %p433, %p434
      %p436 = scmp.ne.s32.totalorder %s427, %s428
      %p437 = scmp.eq.s32.totalorder %s46, 0
      %p438 = por %p436, %p437
      %p439 = scmp.ne.s32.totalorder %s427, %s428
      %p440 = scmp.eq.s32.totalorder %s47, 3
      %p441 = por %p439, %p440
      %p443 = scmp.ne.s32.totalorder %s428, %s442
      %p444 = scmp.eq.s32.totalorder %s47, 0
      %p445 = por %p443, %p444
      %s447 = sadd.s32 %s446, 1
      %p450 = scmp.eq.s32.totalorder %s41, 3
      %p451 = scmp.ne.s32.totalorder %s446, %s448
      %p452 = scmp.eq.s32.totalorder %s41, 0
      %p453 = por %p451, %p452
      %p454 = scmp.ne.s32.totalorder %s446, %s448
      %p455 = scmp.eq.s32.totalorder %s46, 3
      %p456 = por %p454, %p455
      %p457 = scmp.ne.s32.totalorder %s448, %s449
      %p458 = scmp.eq.s32.totalorder %s46, 0
      %p459 = por %p457, %p458
      %p460 = scmp.ne.s32.totalorder %s448, %s449
      %p461 = scmp.eq.s32.totalorder %s47, 3
      %p462 = por %p460, %p461
      %p464 = scmp.ne.s32.totalorder %s449, %s463
      %p465 = scmp.eq.s32.totalorder %s47, 0
      %p466 = por %p464, %p465
      %s468 = sadd.s32 %s467, 1
      %p471 = scmp.eq.s32.totalorder %s41, 3
      %p472 = scmp.ne.s32.totalorder %s467, %s469
      %p473 = scmp.eq.s32.totalorder %s41, 0
      %p474 = por %p472, %p473
      %p475 = scmp.ne.s32.totalorder %s467, %s469
      %p476 = scmp.eq.s32.totalorder %s46, 3
      %p477 = por %p475, %p476
      %p478 = scmp.ne.s32.totalorder %s469, %s470
      %p479 = scmp.eq.s32.totalorder %s46, 0
      %p480 = por %p478, %p479
      %p481 = scmp.ne.s32.totalorder %s469, %s470
      %p482 = scmp.eq.s32.totalorder %s47, 3
      %p483 = por %p481, %p482
      %p485 = scmp.ne.s32.totalorder %s470, %s484
      %p486 = scmp.eq.s32.totalorder %s47, 0
      %p487 = por %p485, %p486
      %s489 = sadd.s32 %s488, 1
      %p492 = scmp.eq.s32.totalorder %s41, 3
      %p493 = scmp.ne.s32.totalorder %s488, %s490
      %p494 = scmp.eq.s32.totalorder %s41, 0
      %p495 = por %p493, %p494
      %p496 = scmp.ne.s32.totalorder %s488, %s490
      %p497 = scmp.eq.s32.totalorder %s46, 3
      %p498 = por %p496, %p497
      %p499 = scmp.ne.s32.totalorder %s490, %s491
      %p500 = scmp.eq.s32.totalorder %s46, 0
      %p501 = por %p499, %p500
      %p502 = scmp.ne.s32.totalorder %s490, %s491
      %p503 = scmp.eq.s32.totalorder %s47, 3
      %p504 = por %p502, %p503
      %p506 = scmp.ne.s32.totalorder %s491, %s505
      %p507 = scmp.eq.s32.totalorder %s47, 0
      %p508 = por %p506, %p507
      %s510 = sadd.s32 %s509, 1
      %p513 = scmp.eq.s32.totalorder %s41, 3
      %p514 = scmp.ne.s32.totalorder %s509, %s511
      %p515 = scmp.eq.s32.totalorder %s41, 0
      %p516 = por %p514, %p515
      %p517 = scmp.ne.s32.totalorder %s509, %s511
      %p518 = scmp.eq.s32.totalorder %s46, 3
      %p519 = por %p517, %p518
      %p520 = scmp.ne.s32.totalorder %s511, %s512
      %p521 = scmp.eq.s32.totalorder %s46, 0
      %p522 = por %p520, %p521
      %p523 = scmp.ne.s32.totalorder %s511, %s512
      %p524 = scmp.eq.s32.totalorder %s47, 3
      %p525 = por %p523, %p524
      %p527 = scmp.ne.s32.totalorder %s512, %s526
      %p528 = scmp.eq.s32.totalorder %s47, 0
      %p529 = por %p527, %p528
      %s531 = sadd.s32 %s530, 1
      %p534 = scmp.eq.s32.totalorder %s41, 3
      %p535 = scmp.ne.s32.totalorder %s530, %s532
      %p536 = scmp.eq.s32.totalorder %s41, 0
      %p537 = por %p535, %p536
      %p538 = scmp.ne.s32.totalorder %s530, %s532
      %p539 = scmp.eq.s32.totalorder %s46, 3
      %p540 = por %p538, %p539
      %p541 = scmp.ne.s32.totalorder %s532, %s533
      %p542 = scmp.eq.s32.totalorder %s46, 0
      %p543 = por %p541, %p542
      %p544 = scmp.ne.s32.totalorder %s532, %s533
      %p545 = scmp.eq.s32.totalorder %s47, 3
      %p546 = por %p544, %p545
      %p548 = scmp.ne.s32.totalorder %s533, %s547
      %p549 = scmp.eq.s32.totalorder %s47, 0
      %p550 = por %p548, %p549
      %s552 = sadd.s32 %s551, 1
      %p555 = scmp.eq.s32.totalorder %s41, 3
      %p556 = scmp.ne.s32.totalorder %s551, %s553
      %p557 = scmp.eq.s32.totalorder %s41, 0
      %p558 = por %p556, %p557
      %p559 = scmp.ne.s32.totalorder %s551, %s553
      %p560 = scmp.eq.s32.totalorder %s46, 3
      %p561 = por %p559, %p560
      %p562 = scmp.ne.s32.totalorder %s553, %s554
      %p563 = scmp.eq.s32.totalorder %s46, 0
      %p564 = por %p562, %p563
      %p565 = scmp.ne.s32.totalorder %s553, %s554
      %p566 = scmp.eq.s32.totalorder %s47, 3
      %p567 = por %p565, %p566
      %p569 = scmp.ne.s32.totalorder %s554, %s568
      %p570 = scmp.eq.s32.totalorder %s47, 0
      %p571 = por %p569, %p570
      %s573 = sadd.s32 %s572, 1
      %p576 = scmp.eq.s32.totalorder %s41, 3
      %p577 = scmp.ne.s32.totalorder %s572, %s574
      %p578 = scmp.eq.s32.totalorder %s41, 0
      %p579 = por %p577, %p578
      %p580 = scmp.ne.s32.totalorder %s572, %s574
      %p581 = scmp.eq.s32.totalorder %s46, 3
      %p582 = por %p580, %p581
      %p583 = scmp.ne.s32.totalorder %s574, %s575
      %p584 = scmp.eq.s32.totalorder %s46, 0
      %p585 = por %p583, %p584
      %p586 = scmp.ne.s32.totalorder %s574, %s575
      %p587 = scmp.eq.s32.totalorder %s47, 3
      %p588 = por %p586, %p587
      %p590 = scmp.ne.s32.totalorder %s575, %s589
      %p591 = scmp.eq.s32.totalorder %s47, 0
      %p592 = por %p590, %p591
      %s594 = sadd.s32 %s593, 1
      %p597 = scmp.eq.s32.totalorder %s41, 3
      %p598 = scmp.ne.s32.totalorder %s593, %s595
      %p599 = scmp.eq.s32.totalorder %s41, 0
      %p600 = por %p598, %p599
      %p601 = scmp.ne.s32.totalorder %s593, %s595
      %p602 = scmp.eq.s32.totalorder %s46, 3
      %p603 = por %p601, %p602
      %p604 = scmp.ne.s32.totalorder %s595, %s596
      %p605 = scmp.eq.s32.totalorder %s46, 0
      %p606 = por %p604, %p605
      %p607 = scmp.ne.s32.totalorder %s595, %s596
      %p608 = scmp.eq.s32.totalorder %s47, 3
      %p609 = por %p607, %p608
      %p611 = scmp.ne.s32.totalorder %s596, %s610
      %p612 = scmp.eq.s32.totalorder %s47, 0
      %p613 = por %p611, %p612
      %s615 = sadd.s32 %s614, 1
      %p618 = scmp.eq.s32.totalorder %s41, 3
      %p619 = scmp.ne.s32.totalorder %s614, %s616
      %p620 = scmp.eq.s32.totalorder %s41, 0
      %p621 = por %p619, %p620
      %p622 = scmp.ne.s32.totalorder %s614, %s616
      %p623 = scmp.eq.s32.totalorder %s46, 3
      %p624 = por %p622, %p623
      %p625 = scmp.ne.s32.totalorder %s616, %s617
      %p626 = scmp.eq.s32.totalorder %s46, 0
      %p627 = por %p625, %p626
      %p628 = scmp.ne.s32.totalorder %s616, %s617
      %p629 = scmp.eq.s32.totalorder %s47, 3
      %p630 = por %p628, %p629
      %p632 = scmp.ne.s32.totalorder %s617, %s631
      %p633 = scmp.eq.s32.totalorder %s47, 0
      %p634 = por %p632, %p633
      %s635 = ssub.s32 %s48, %s60
      %p636 = scmp.eq.s32.totalorder %s635, 0
      %s638 = sadd.s32 %s637, 1
      %s639 = scalar_select %p636, %s637, %s638
      %p642 = pneg %p636
      %p643 = scmp.eq.s32.totalorder %s41, 3
      %p644 = por %p642, %p643
      %p645 = scmp.ne.s32.totalorder %s637, %s640
      %p646 = scmp.eq.s32.totalorder %s41, 0
      %p647 = por %p645, %p646
      %p648 = scmp.ne.s32.totalorder %s637, %s640
      %p649 = scmp.eq.s32.totalorder %s46, 3
      %p650 = por %p648, %p649
      %p651 = scmp.ne.s32.totalorder %s640, %s641
      %p652 = scmp.eq.s32.totalorder %s46, 0
      %p653 = por %p651, %p652
      %p654 = scmp.ne.s32.totalorder %s640, %s641
      %p655 = scmp.eq.s32.totalorder %s47, 3
      %p656 = por %p654, %p655
      %p658 = scmp.ne.s32.totalorder %s641, %s657
      %p659 = scmp.eq.s32.totalorder %s47, 0
      %p660 = por %p658, %p659
      %p661 = scmp.le.s32.totalorder 1, %s41
      %p662 = scmp.lt.s32.totalorder %s41, 5
      %p663 = pnand %p661, %p662
      %p664 = pneg %p663
      // Predicated region
      $region9: #{tpu_custom_call.1} parent=5 // pred_check
        _
      $region10: #{tpu_custom_call.1} parent=5 // pred_check_branch
        %666 = sbr.rel (%p663) target = $region12
      $region11: #{tpu_custom_call.1} parent=5 // pred_region
        %s667 = ssub.s32 %s41, 1
        // Predicated region
        $region13: #{tpu_custom_call.1} parent=11 // pred_check
          %p668 = pneg %p186
        $region14: #{tpu_custom_call.1} parent=11 // pred_check_branch
          %670 = sbr.rel (%p668) target = $region16
        $region15: #{tpu_custom_call.1} parent=11 // pred_region
          %672 = vsyncadd [#allocation9], 0
          %s673 = sshll.u32 %s4, 4
          %s674 = int_to_ptr.hbm [resolvable:$true] %s673
          %s675 = sshll.u32 [#allocation8], 4
          %s676 = int_to_ptr.vmem [resolvable:$true] %s675
          %681 = dma.hbm_to_vmem [thread:$0]  %s674, 512, %s676, [#allocation9], 128, 128, 8
        $region16: #{tpu_custom_call.1} parent=11 // pred_fallthru
          _
        // Predicated region
        $region17: #{tpu_custom_call.1} parent=11 // pred_check
          %p682 = pneg %p207
        $region18: #{tpu_custom_call.1} parent=11 // pred_check_branch
          %684 = sbr.rel (%p682) target = $region20
        $region19: #{tpu_custom_call.1} parent=11 // pred_region
          _
        $region20: #{tpu_custom_call.1} parent=11 // pred_fallthru
          _
        // Predicated region
        $region21: #{tpu_custom_call.1} parent=11 // pred_check
          %p685 = pneg %p228
        $region22: #{tpu_custom_call.1} parent=11 // pred_check_branch
          %687 = sbr.rel (%p685) target = $region24
        $region23: #{tpu_custom_call.1} parent=11 // pred_region
          %689 = vsyncadd [#allocation12], 0
          %s690 = sshll.u32 %s6, 4
          %s691 = int_to_ptr.hbm [resolvable:$true] %s690
          %s692 = sshll.u32 [#allocation11], 4
          %s693 = int_to_ptr.vmem [resolvable:$true] %s692
          %698 = dma.hbm_to_vmem [thread:$0]  %s691, 2048, %s693, [#allocation12], 128, 128, 8
        $region24: #{tpu_custom_call.1} parent=11 // pred_fallthru
          _
        // Predicated region
        $region25: #{tpu_custom_call.1} parent=11 // pred_check
          %p699 = pneg %p249
        $region26: #{tpu_custom_call.1} parent=11 // pred_check_branch
          %701 = sbr.rel (%p699) target = $region28
        $region27: #{tpu_custom_call.1} parent=11 // pred_region
          _
        $region28: #{tpu_custom_call.1} parent=11 // pred_fallthru
          _
        // Predicated region
        $region29: #{tpu_custom_call.1} parent=11 // pred_check
          %p702 = pneg %p270
        $region30: #{tpu_custom_call.1} parent=11 // pred_check_branch
          %704 = sbr.rel (%p702) target = $region32
        $region31: #{tpu_custom_call.1} parent=11 // pred_region
          %706 = vsyncadd [#allocation12], 0
          %s707 = sshll.u32 %s8, 4
          %s708 = int_to_ptr.hbm [resolvable:$true] %s707
          %s709 = sshll.u32 [#allocation13], 4
          %s710 = int_to_ptr.vmem [resolvable:$true] %s709
          %715 = dma.hbm_to_vmem [thread:$0]  %s708, 2048, %s710, [#allocation12], 128, 128, 8
        $region32: #{tpu_custom_call.1} parent=11 // pred_fallthru
          _
        // Predicated region
        $region33: #{tpu_custom_call.1} parent=11 // pred_check
          %p716 = pneg %p291
        $region34: #{tpu_custom_call.1} parent=11 // pred_check_branch
          %718 = sbr.rel (%p716) target = $region36
        $region35: #{tpu_custom_call.1} parent=11 // pred_region
          _
        $region36: #{tpu_custom_call.1} parent=11 // pred_fallthru
          _
        // Predicated region
        $region37: #{tpu_custom_call.1} parent=11 // pred_check
          %p719 = pneg %p312
        $region38: #{tpu_custom_call.1} parent=11 // pred_check_branch
          %721 = sbr.rel (%p719) target = $region40
        $region39: #{tpu_custom_call.1} parent=11 // pred_region
          %723 = vsyncadd [#allocation15], 0
          %s724 = sshll.u32 %s10, 4
          %s725 = int_to_ptr.hbm [resolvable:$true] %s724
          %s726 = sshll.u32 [#allocation14], 4
          %s727 = int_to_ptr.vmem [resolvable:$true] %s726
          %732 = dma.hbm_to_vmem [thread:$0]  %s725, 2048, %s727, [#allocation15], 128, 128, 8
        $region40: #{tpu_custom_call.1} parent=11 // pred_fallthru
          _
        // Predicated region
        $region41: #{tpu_custom_call.1} parent=11 // pred_check
          %p733 = pneg %p333
        $region42: #{tpu_custom_call.1} parent=11 // pred_check_branch
          %735 = sbr.rel (%p733) target = $region44
        $region43: #{tpu_custom_call.1} parent=11 // pred_region
          _
        $region44: #{tpu_custom_call.1} parent=11 // pred_fallthru
          _
        // Predicated region
        $region45: #{tpu_custom_call.1} parent=11 // pred_check
          %p736 = pneg %p354
        $region46: #{tpu_custom_call.1} parent=11 // pred_check_branch
          %738 = sbr.rel (%p736) target = $region48
        $region47: #{tpu_custom_call.1} parent=11 // pred_region
          %740 = vsyncadd [#allocation15], 0
          %s741 = sshll.u32 %s12, 4
          %s742 = int_to_ptr.hbm [resolvable:$true] %s741
          %s743 = sshll.u32 [#allocation16], 4
          %s744 = int_to_ptr.vmem [resolvable:$true] %s743
          %749 = dma.hbm_to_vmem [thread:$0]  %s742, 2048, %s744, [#allocation15], 128, 128, 8
        $region48: #{tpu_custom_call.1} parent=11 // pred_fallthru
          _
        // Predicated region
        $region49: #{tpu_custom_call.1} parent=11 // pred_check
          %p750 = pneg %p375
        $region50: #{tpu_custom_call.1} parent=11 // pred_check_branch
          %752 = sbr.rel (%p750) target = $region52
        $region51: #{tpu_custom_call.1} parent=11 // pred_region
          _
        $region52: #{tpu_custom_call.1} parent=11 // pred_fallthru
          _
        // Predicated region
        $region53: #{tpu_custom_call.1} parent=11 // pred_check
          %p753 = pneg %p396
        $region54: #{tpu_custom_call.1} parent=11 // pred_check_branch
          %755 = sbr.rel (%p753) target = $region56
        $region55: #{tpu_custom_call.1} parent=11 // pred_region
          %757 = vsyncadd [#allocation18], 0
          %s758 = sshll.u32 %s14, 4
          %s759 = int_to_ptr.hbm [resolvable:$true] %s758
          %s760 = sshll.u32 [#allocation17], 4
          %s761 = int_to_ptr.vmem [resolvable:$true] %s760
          %766 = dma.hbm_to_vmem [thread:$0]  %s759, 2048, %s761, [#allocation18], 128, 128, 8
        $region56: #{tpu_custom_call.1} parent=11 // pred_fallthru
          _
        // Predicated region
        $region57: #{tpu_custom_call.1} parent=11 // pred_check
          %p767 = pneg %p417
        $region58: #{tpu_custom_call.1} parent=11 // pred_check_branch
          %769 = sbr.rel (%p767) target = $region60
        $region59: #{tpu_custom_call.1} parent=11 // pred_region
          _
        $region60: #{tpu_custom_call.1} parent=11 // pred_fallthru
          _
        // Predicated region
        $region61: #{tpu_custom_call.1} parent=11 // pred_check
          %p770 = pneg %p438
        $region62: #{tpu_custom_call.1} parent=11 // pred_check_branch
          %772 = sbr.rel (%p770) target = $region64
        $region63: #{tpu_custom_call.1} parent=11 // pred_region
          %774 = vsyncadd [#allocation18], 0
          %s775 = sshll.u32 %s16, 4
          %s776 = int_to_ptr.hbm [resolvable:$true] %s775
          %s777 = sshll.u32 [#allocation19], 4
          %s778 = int_to_ptr.vmem [resolvable:$true] %s777
          %783 = dma.hbm_to_vmem [thread:$0]  %s776, 2048, %s778, [#allocation18], 128, 128, 8
        $region64: #{tpu_custom_call.1} parent=11 // pred_fallthru
          _
        // Predicated region
        $region65: #{tpu_custom_call.1} parent=11 // pred_check
          %p784 = pneg %p459
        $region66: #{tpu_custom_call.1} parent=11 // pred_check_branch
          %786 = sbr.rel (%p784) target = $region68
        $region67: #{tpu_custom_call.1} parent=11 // pred_region
          _
        $region68: #{tpu_custom_call.1} parent=11 // pred_fallthru
          _
        // Predicated region
        $region69: #{tpu_custom_call.1} parent=11 // pred_check
          %p787 = pneg %p480
        $region70: #{tpu_custom_call.1} parent=11 // pred_check_branch
          %789 = sbr.rel (%p787) target = $region72
        $region71: #{tpu_custom_call.1} parent=11 // pred_region
          %791 = vsyncadd [#allocation21], 0
          %s792 = sshll.u32 %s18, 4
          %s793 = int_to_ptr.hbm [resolvable:$true] %s792
          %s794 = sshll.u32 [#allocation20], 4
          %s795 = int_to_ptr.vmem [resolvable:$true] %s794
          %800 = dma.hbm_to_vmem [thread:$0]  %s793, 2048, %s795, [#allocation21], 128, 128, 8
        $region72: #{tpu_custom_call.1} parent=11 // pred_fallthru
          _
        // Predicated region
        $region73: #{tpu_custom_call.1} parent=11 // pred_check
          %p801 = pneg %p501
        $region74: #{tpu_custom_call.1} parent=11 // pred_check_branch
          %803 = sbr.rel (%p801) target = $region76
        $region75: #{tpu_custom_call.1} parent=11 // pred_region
          _
        $region76: #{tpu_custom_call.1} parent=11 // pred_fallthru
          _
        // Predicated region
        $region77: #{tpu_custom_call.1} parent=11 // pred_check
          %p804 = pneg %p522
        $region78: #{tpu_custom_call.1} parent=11 // pred_check_branch
          %806 = sbr.rel (%p804) target = $region80
        $region79: #{tpu_custom_call.1} parent=11 // pred_region
          %808 = vsyncadd [#allocation21], 0
          %s809 = sshll.u32 %s20, 4
          %s810 = int_to_ptr.hbm [resolvable:$true] %s809
          %s811 = sshll.u32 [#allocation22], 4
          %s812 = int_to_ptr.vmem [resolvable:$true] %s811
          %817 = dma.hbm_to_vmem [thread:$0]  %s810, 2048, %s812, [#allocation21], 128, 128, 8
        $region80: #{tpu_custom_call.1} parent=11 // pred_fallthru
          _
        // Predicated region
        $region81: #{tpu_custom_call.1} parent=11 // pred_check
          %p818 = pneg %p543
        $region82: #{tpu_custom_call.1} parent=11 // pred_check_branch
          %820 = sbr.rel (%p818) target = $region84
        $region83: #{tpu_custom_call.1} parent=11 // pred_region
          _
        $region84: #{tpu_custom_call.1} parent=11 // pred_fallthru
          _
        // Predicated region
        $region85: #{tpu_custom_call.1} parent=11 // pred_check
          %p821 = pneg %p564
        $region86: #{tpu_custom_call.1} parent=11 // pred_check_branch
          %823 = sbr.rel (%p821) target = $region88
        $region87: #{tpu_custom_call.1} parent=11 // pred_region
          %825 = vsyncadd [#allocation24], 0
          %s826 = sshll.u32 %s22, 4
          %s827 = int_to_ptr.hbm [resolvable:$true] %s826
          %s828 = sshll.u32 [#allocation23], 4
          %s829 = int_to_ptr.vmem [resolvable:$true] %s828
          %834 = dma.hbm_to_vmem [thread:$0]  %s827, 2048, %s829, [#allocation24], 128, 128, 8
        $region88: #{tpu_custom_call.1} parent=11 // pred_fallthru
          _
        // Predicated region
        $region89: #{tpu_custom_call.1} parent=11 // pred_check
          %p835 = pneg %p585
        $region90: #{tpu_custom_call.1} parent=11 // pred_check_branch
          %837 = sbr.rel (%p835) target = $region92
        $region91: #{tpu_custom_call.1} parent=11 // pred_region
          _
        $region92: #{tpu_custom_call.1} parent=11 // pred_fallthru
          _
        // Predicated region
        $region93: #{tpu_custom_call.1} parent=11 // pred_check
          %p838 = pneg %p606
        $region94: #{tpu_custom_call.1} parent=11 // pred_check_branch
          %840 = sbr.rel (%p838) target = $region96
        $region95: #{tpu_custom_call.1} parent=11 // pred_region
          %842 = vsyncadd [#allocation24], 0
          %s843 = sshll.u32 %s24, 4
          %s844 = int_to_ptr.hbm [resolvable:$true] %s843
          %s845 = sshll.u32 [#allocation25], 4
          %s846 = int_to_ptr.vmem [resolvable:$true] %s845
          %851 = dma.hbm_to_vmem [thread:$0]  %s844, 2048, %s846, [#allocation24], 128, 128, 8
        $region96: #{tpu_custom_call.1} parent=11 // pred_fallthru
          _
        // Predicated region
        $region97: #{tpu_custom_call.1} parent=11 // pred_check
          %p852 = pneg %p627
        $region98: #{tpu_custom_call.1} parent=11 // pred_check_branch
          %854 = sbr.rel (%p852) target = $region100
        $region99: #{tpu_custom_call.1} parent=11 // pred_region
          _
        $region100: #{tpu_custom_call.1} parent=11 // pred_fallthru
          _
      $region12: #{tpu_custom_call.1} parent=5 // pred_fallthru
        _
      %p855 = scmp.lt.s32.totalorder %s41, 4
      // Predicated region
      $region101: #{tpu_custom_call.1} parent=5 // pred_check
        %p856 = pneg %p855
      $region102: #{tpu_custom_call.1} parent=5 // pred_check_branch
        %858 = sbr.rel (%p856) target = $region104
      $region103: #{tpu_custom_call.1} parent=5 // pred_region
        // Predicated region
        $region105: #{tpu_custom_call.1} parent=103 // pred_check
          %p859 = pneg %p75
        $region106: #{tpu_custom_call.1} parent=103 // pred_check_branch
          %861 = sbr.rel (%p859) target = $region108
        $region107: #{tpu_custom_call.1} parent=103 // pred_region
          %s862 = sand.u32 %s65, 1
          %s863 = sand.u32 %s65, 1
          %s864 = smul.addr %s863, 64
          %s865 = scalar_lea.vmem [#allocation4], %s864
          %s866 = smul.u32 8, %s48
          %s867 = smul.addr %s866, 2
          %s868 = sadd.s32 %s49, %s867
          %s869 = smul.addr %s868, 8
          %s870 = scalar_lea.vmem %s0, %s869
          // Predicated region
          $region109: #{tpu_custom_call.1} parent=107 // pred_check
            _
          $region110: #{tpu_custom_call.1} parent=107 // pred_check_branch
            %872 = sbr.rel (0) target = $region112
          $region111: #{tpu_custom_call.1} parent=107 // pred_region
            // Predicated region
            $region113: #{tpu_custom_call.1} parent=111 // pred_check
              _
            $region114: #{tpu_custom_call.1} parent=111 // pred_check_branch
              %874 = sbr.rel (0) target = $region116
            $region115: #{tpu_custom_call.1} parent=111 // pred_region
              // Predicated region
              $region128: #{tpu_custom_call.1} parent=115 // pred_check
                _
              $region129: #{tpu_custom_call.1} parent=115 // pred_check_branch
                %904 = sbr.rel (0) target = $region131
              $region130: #{tpu_custom_call.1} parent=115 // pred_region
                loop: start=0, step=1, limit=1
                $region132: #{tpu_custom_call.1} parent=130 // loop_pre_header
                  _
                $region133: #{tpu_custom_call.1} parent=130 // loop_header
                  %s906 = sphi 0, %s910
                  %p907 = scmp.ge.s32.totalorder %s906, 1
                  %s911 = sphi %s870, %s870
                  %s912 = sphi %s865, %s865
                $region134: #{tpu_custom_call.1} parent=130 // loop_header_branch
                  %909 = sbr.rel (%p907) target = $region138
                $region135: #{tpu_custom_call.1} parent=130 // loop_body
                  %v913 = vld [vmem:[%s911] sm:$0xff]
                  %914 = vst [vmem:[%s912] sm:$0xff] %v913
                  %v915 = vld [vmem:[%s911 + $0x10] sm:$0xff]
                  %916 = vst [vmem:[%s912 + $0x8] sm:$0xff] %v915
                  %v917 = vld [vmem:[%s911 + $0x20] sm:$0xff]
                  %918 = vst [vmem:[%s912 + $0x10] sm:$0xff] %v917
                  %v919 = vld [vmem:[%s911 + $0x30] sm:$0xff]
                  %920 = vst [vmem:[%s912 + $0x18] sm:$0xff] %v919
                  %v921 = vld [vmem:[%s911 + $0x40] sm:$0xff]
                  %922 = vst [vmem:[%s912 + $0x20] sm:$0xff] %v921
                  %v923 = vld [vmem:[%s911 + $0x50] sm:$0xff]
                  %924 = vst [vmem:[%s912 + $0x28] sm:$0xff] %v923
                  %v925 = vld [vmem:[%s911 + $0x60] sm:$0xff]
                  %926 = vst [vmem:[%s912 + $0x30] sm:$0xff] %v925
                  %v927 = vld [vmem:[%s911 + $0x70] sm:$0xff]
                  %928 = vst [vmem:[%s912 + $0x38] sm:$0xff] %v927
                $region136: #{tpu_custom_call.1} parent=130 // loop_footer
                  %s910 = sadd.s32 1, %s906
                $region137: #{tpu_custom_call.1} parent=130 // loop_footer_branch
                  %905 = sbr.rel target = $region133
                $region138: #{tpu_custom_call.1} parent=130 // loop_exit
                  _
              $region131: #{tpu_custom_call.1} parent=115 // pred_fallthru
                _
              // Predicated region
              $region139: #{tpu_custom_call.1} parent=115 // pred_check
                _
              $region140: #{tpu_custom_call.1} parent=115 // pred_check_branch
                %930 = sbr.rel target = $region142
              $region141: #{tpu_custom_call.1} parent=115 // pred_region
                _
              $region142: #{tpu_custom_call.1} parent=115 // pred_fallthru
                _
            $region116: #{tpu_custom_call.1} parent=111 // pred_fallthru
              _
            // Predicated region
            $region117: #{tpu_custom_call.1} parent=111 // pred_check
              _
            $region118: #{tpu_custom_call.1} parent=111 // pred_check_branch
              %876 = sbr.rel target = $region120
            $region119: #{tpu_custom_call.1} parent=111 // pred_region
              %s878 = ssub.s32 256, 1
              loop: start=0, step=1, limit=1
              $region121: #{tpu_custom_call.1} parent=119 // loop_pre_header
                _
              $region122: #{tpu_custom_call.1} parent=119 // loop_header
                %s880 = sphi 0, %s884
                %p881 = scmp.ge.s32.totalorder %s880, 1
                %s885 = sphi %s870, %s870
                %s886 = sphi %s865, %s865
              $region123: #{tpu_custom_call.1} parent=119 // loop_header_branch
                %883 = sbr.rel (%p881) target = $region127
              $region124: #{tpu_custom_call.1} parent=119 // loop_body
                %v887 = vld [vmem:[%s885] sm:%s878]
                %888 = vst [vmem:[%s886] sm:%s878] %v887
                %v889 = vld [vmem:[%s885 + $0x10] sm:%s878]
                %890 = vst [vmem:[%s886 + $0x8] sm:%s878] %v889
                %v891 = vld [vmem:[%s885 + $0x20] sm:%s878]
                %892 = vst [vmem:[%s886 + $0x10] sm:%s878] %v891
                %v893 = vld [vmem:[%s885 + $0x30] sm:%s878]
                %894 = vst [vmem:[%s886 + $0x18] sm:%s878] %v893
                %v895 = vld [vmem:[%s885 + $0x40] sm:%s878]
                %896 = vst [vmem:[%s886 + $0x20] sm:%s878] %v895
                %v897 = vld [vmem:[%s885 + $0x50] sm:%s878]
                %898 = vst [vmem:[%s886 + $0x28] sm:%s878] %v897
                %v899 = vld [vmem:[%s885 + $0x60] sm:%s878]
                %900 = vst [vmem:[%s886 + $0x30] sm:%s878] %v899
                %v901 = vld [vmem:[%s885 + $0x70] sm:%s878]
                %902 = vst [vmem:[%s886 + $0x38] sm:%s878] %v901
              $region125: #{tpu_custom_call.1} parent=119 // loop_footer
                %s884 = sadd.s32 1, %s880
              $region126: #{tpu_custom_call.1} parent=119 // loop_footer_branch
                %879 = sbr.rel target = $region122
              $region127: #{tpu_custom_call.1} parent=119 // loop_exit
                _
            $region120: #{tpu_custom_call.1} parent=111 // pred_fallthru
              _
          $region112: #{tpu_custom_call.1} parent=107 // pred_fallthru
            _
          %931 = vnop
        $region108: #{tpu_custom_call.1} parent=103 // pred_fallthru
          _
        // Predicated region
        $region143: #{tpu_custom_call.1} parent=103 // pred_check
          %p932 = pneg %p103
        $region144: #{tpu_custom_call.1} parent=103 // pred_check_branch
          %934 = sbr.rel (%p932) target = $region146
        $region145: #{tpu_custom_call.1} parent=103 // pred_region
          %s935 = sand.u32 %s93, 1
          %s936 = sand.u32 %s93, 1
          %s937 = smul.addr %s936, 64
          %s938 = scalar_lea.vmem [#allocation5], %s937
          %s939 = smul.u32 8, %s48
          %s940 = smul.addr %s939, 2
          %s941 = sadd.s32 %s49, %s940
          %s942 = smul.addr %s941, 8
          %s943 = scalar_lea.vmem %s1, %s942
          // Predicated region
          $region147: #{tpu_custom_call.1} parent=145 // pred_check
            _
          $region148: #{tpu_custom_call.1} parent=145 // pred_check_branch
            %945 = sbr.rel (0) target = $region150
          $region149: #{tpu_custom_call.1} parent=145 // pred_region
            // Predicated region
            $region151: #{tpu_custom_call.1} parent=149 // pred_check
              _
            $region152: #{tpu_custom_call.1} parent=149 // pred_check_branch
              %947 = sbr.rel (0) target = $region154
            $region153: #{tpu_custom_call.1} parent=149 // pred_region
              // Predicated region
              $region166: #{tpu_custom_call.1} parent=153 // pred_check
                _
              $region167: #{tpu_custom_call.1} parent=153 // pred_check_branch
                %977 = sbr.rel (0) target = $region169
              $region168: #{tpu_custom_call.1} parent=153 // pred_region
                loop: start=0, step=1, limit=1
                $region170: #{tpu_custom_call.1} parent=168 // loop_pre_header
                  _
                $region171: #{tpu_custom_call.1} parent=168 // loop_header
                  %s979 = sphi 0, %s983
                  %p980 = scmp.ge.s32.totalorder %s979, 1
                  %s984 = sphi %s943, %s943
                  %s985 = sphi %s938, %s938
                $region172: #{tpu_custom_call.1} parent=168 // loop_header_branch
                  %982 = sbr.rel (%p980) target = $region176
                $region173: #{tpu_custom_call.1} parent=168 // loop_body
                  %v986 = vld [vmem:[%s984] sm:$0xff]
                  %987 = vst [vmem:[%s985] sm:$0xff] %v986
                  %v988 = vld [vmem:[%s984 + $0x10] sm:$0xff]
                  %989 = vst [vmem:[%s985 + $0x8] sm:$0xff] %v988
                  %v990 = vld [vmem:[%s984 + $0x20] sm:$0xff]
                  %991 = vst [vmem:[%s985 + $0x10] sm:$0xff] %v990
                  %v992 = vld [vmem:[%s984 + $0x30] sm:$0xff]
                  %993 = vst [vmem:[%s985 + $0x18] sm:$0xff] %v992
                  %v994 = vld [vmem:[%s984 + $0x40] sm:$0xff]
                  %995 = vst [vmem:[%s985 + $0x20] sm:$0xff] %v994
                  %v996 = vld [vmem:[%s984 + $0x50] sm:$0xff]
                  %997 = vst [vmem:[%s985 + $0x28] sm:$0xff] %v996
                  %v998 = vld [vmem:[%s984 + $0x60] sm:$0xff]
                  %999 = vst [vmem:[%s985 + $0x30] sm:$0xff] %v998
                  %v1000 = vld [vmem:[%s984 + $0x70] sm:$0xff]
                  %1001 = vst [vmem:[%s985 + $0x38] sm:$0xff] %v1000
                $region174: #{tpu_custom_call.1} parent=168 // loop_footer
                  %s983 = sadd.s32 1, %s979
                $region175: #{tpu_custom_call.1} parent=168 // loop_footer_branch
                  %978 = sbr.rel target = $region171
                $region176: #{tpu_custom_call.1} parent=168 // loop_exit
                  _
              $region169: #{tpu_custom_call.1} parent=153 // pred_fallthru
                _
              // Predicated region
              $region177: #{tpu_custom_call.1} parent=153 // pred_check
                _
              $region178: #{tpu_custom_call.1} parent=153 // pred_check_branch
                %1003 = sbr.rel target = $region180
              $region179: #{tpu_custom_call.1} parent=153 // pred_region
                _
              $region180: #{tpu_custom_call.1} parent=153 // pred_fallthru
                _
            $region154: #{tpu_custom_call.1} parent=149 // pred_fallthru
              _
            // Predicated region
            $region155: #{tpu_custom_call.1} parent=149 // pred_check
              _
            $region156: #{tpu_custom_call.1} parent=149 // pred_check_branch
              %949 = sbr.rel target = $region158
            $region157: #{tpu_custom_call.1} parent=149 // pred_region
              %s951 = ssub.s32 256, 1
              loop: start=0, step=1, limit=1
              $region159: #{tpu_custom_call.1} parent=157 // loop_pre_header
                _
              $region160: #{tpu_custom_call.1} parent=157 // loop_header
                %s953 = sphi 0, %s957
                %p954 = scmp.ge.s32.totalorder %s953, 1
                %s958 = sphi %s943, %s943
                %s959 = sphi %s938, %s938
              $region161: #{tpu_custom_call.1} parent=157 // loop_header_branch
                %956 = sbr.rel (%p954) target = $region165
              $region162: #{tpu_custom_call.1} parent=157 // loop_body
                %v960 = vld [vmem:[%s958] sm:%s951]
                %961 = vst [vmem:[%s959] sm:%s951] %v960
                %v962 = vld [vmem:[%s958 + $0x10] sm:%s951]
                %963 = vst [vmem:[%s959 + $0x8] sm:%s951] %v962
                %v964 = vld [vmem:[%s958 + $0x20] sm:%s951]
                %965 = vst [vmem:[%s959 + $0x10] sm:%s951] %v964
                %v966 = vld [vmem:[%s958 + $0x30] sm:%s951]
                %967 = vst [vmem:[%s959 + $0x18] sm:%s951] %v966
                %v968 = vld [vmem:[%s958 + $0x40] sm:%s951]
                %969 = vst [vmem:[%s959 + $0x20] sm:%s951] %v968
                %v970 = vld [vmem:[%s958 + $0x50] sm:%s951]
                %971 = vst [vmem:[%s959 + $0x28] sm:%s951] %v970
                %v972 = vld [vmem:[%s958 + $0x60] sm:%s951]
                %973 = vst [vmem:[%s959 + $0x30] sm:%s951] %v972
                %v974 = vld [vmem:[%s958 + $0x70] sm:%s951]
                %975 = vst [vmem:[%s959 + $0x38] sm:%s951] %v974
              $region163: #{tpu_custom_call.1} parent=157 // loop_footer
                %s957 = sadd.s32 1, %s953
              $region164: #{tpu_custom_call.1} parent=157 // loop_footer_branch
                %952 = sbr.rel target = $region160
              $region165: #{tpu_custom_call.1} parent=157 // loop_exit
                _
            $region158: #{tpu_custom_call.1} parent=149 // pred_fallthru
              _
          $region150: #{tpu_custom_call.1} parent=145 // pred_fallthru
            _
          %1004 = vnop
        $region146: #{tpu_custom_call.1} parent=103 // pred_fallthru
          _
        // Predicated region
        $region181: #{tpu_custom_call.1} parent=103 // pred_check
          %p1005 = pneg %p131
        $region182: #{tpu_custom_call.1} parent=103 // pred_check_branch
          %1007 = sbr.rel (%p1005) target = $region184
        $region183: #{tpu_custom_call.1} parent=103 // pred_region
          %s1008 = sand.u32 %s121, 1
          %s1009 = sand.u32 %s121, 1
          %s1010 = smul.addr %s1009, 64
          %s1011 = scalar_lea.vmem [#allocation6], %s1010
          %s1012 = smul.u32 8, %s48
          %s1013 = smul.addr %s1012, 2
          %s1014 = sadd.s32 %s49, %s1013
          %s1015 = smul.addr %s1014, 8
          %s1016 = scalar_lea.vmem %s2, %s1015
          // Predicated region
          $region185: #{tpu_custom_call.1} parent=183 // pred_check
            _
          $region186: #{tpu_custom_call.1} parent=183 // pred_check_branch
            %1018 = sbr.rel (0) target = $region188
          $region187: #{tpu_custom_call.1} parent=183 // pred_region
            // Predicated region
            $region189: #{tpu_custom_call.1} parent=187 // pred_check
              _
            $region190: #{tpu_custom_call.1} parent=187 // pred_check_branch
              %1020 = sbr.rel (0) target = $region192
            $region191: #{tpu_custom_call.1} parent=187 // pred_region
              // Predicated region
              $region204: #{tpu_custom_call.1} parent=191 // pred_check
                _
              $region205: #{tpu_custom_call.1} parent=191 // pred_check_branch
                %1050 = sbr.rel (0) target = $region207
              $region206: #{tpu_custom_call.1} parent=191 // pred_region
                loop: start=0, step=1, limit=1
                $region208: #{tpu_custom_call.1} parent=206 // loop_pre_header
                  _
                $region209: #{tpu_custom_call.1} parent=206 // loop_header
                  %s1052 = sphi 0, %s1056
                  %p1053 = scmp.ge.s32.totalorder %s1052, 1
                  %s1057 = sphi %s1016, %s1016
                  %s1058 = sphi %s1011, %s1011
                $region210: #{tpu_custom_call.1} parent=206 // loop_header_branch
                  %1055 = sbr.rel (%p1053) target = $region214
                $region211: #{tpu_custom_call.1} parent=206 // loop_body
                  %v1059 = vld [vmem:[%s1057] sm:$0xff]
                  %1060 = vst [vmem:[%s1058] sm:$0xff] %v1059
                  %v1061 = vld [vmem:[%s1057 + $0x10] sm:$0xff]
                  %1062 = vst [vmem:[%s1058 + $0x8] sm:$0xff] %v1061
                  %v1063 = vld [vmem:[%s1057 + $0x20] sm:$0xff]
                  %1064 = vst [vmem:[%s1058 + $0x10] sm:$0xff] %v1063
                  %v1065 = vld [vmem:[%s1057 + $0x30] sm:$0xff]
                  %1066 = vst [vmem:[%s1058 + $0x18] sm:$0xff] %v1065
                  %v1067 = vld [vmem:[%s1057 + $0x40] sm:$0xff]
                  %1068 = vst [vmem:[%s1058 + $0x20] sm:$0xff] %v1067
                  %v1069 = vld [vmem:[%s1057 + $0x50] sm:$0xff]
                  %1070 = vst [vmem:[%s1058 + $0x28] sm:$0xff] %v1069
                  %v1071 = vld [vmem:[%s1057 + $0x60] sm:$0xff]
                  %1072 = vst [vmem:[%s1058 + $0x30] sm:$0xff] %v1071
                  %v1073 = vld [vmem:[%s1057 + $0x70] sm:$0xff]
                  %1074 = vst [vmem:[%s1058 + $0x38] sm:$0xff] %v1073
                $region212: #{tpu_custom_call.1} parent=206 // loop_footer
                  %s1056 = sadd.s32 1, %s1052
                $region213: #{tpu_custom_call.1} parent=206 // loop_footer_branch
                  %1051 = sbr.rel target = $region209
                $region214: #{tpu_custom_call.1} parent=206 // loop_exit
                  _
              $region207: #{tpu_custom_call.1} parent=191 // pred_fallthru
                _
              // Predicated region
              $region215: #{tpu_custom_call.1} parent=191 // pred_check
                _
              $region216: #{tpu_custom_call.1} parent=191 // pred_check_branch
                %1076 = sbr.rel target = $region218
              $region217: #{tpu_custom_call.1} parent=191 // pred_region
                _
              $region218: #{tpu_custom_call.1} parent=191 // pred_fallthru
                _
            $region192: #{tpu_custom_call.1} parent=187 // pred_fallthru
              _
            // Predicated region
            $region193: #{tpu_custom_call.1} parent=187 // pred_check
              _
            $region194: #{tpu_custom_call.1} parent=187 // pred_check_branch
              %1022 = sbr.rel target = $region196
            $region195: #{tpu_custom_call.1} parent=187 // pred_region
              %s1024 = ssub.s32 256, 1
              loop: start=0, step=1, limit=1
              $region197: #{tpu_custom_call.1} parent=195 // loop_pre_header
                _
              $region198: #{tpu_custom_call.1} parent=195 // loop_header
                %s1026 = sphi 0, %s1030
                %p1027 = scmp.ge.s32.totalorder %s1026, 1
                %s1031 = sphi %s1016, %s1016
                %s1032 = sphi %s1011, %s1011
              $region199: #{tpu_custom_call.1} parent=195 // loop_header_branch
                %1029 = sbr.rel (%p1027) target = $region203
              $region200: #{tpu_custom_call.1} parent=195 // loop_body
                %v1033 = vld [vmem:[%s1031] sm:%s1024]
                %1034 = vst [vmem:[%s1032] sm:%s1024] %v1033
                %v1035 = vld [vmem:[%s1031 + $0x10] sm:%s1024]
                %1036 = vst [vmem:[%s1032 + $0x8] sm:%s1024] %v1035
                %v1037 = vld [vmem:[%s1031 + $0x20] sm:%s1024]
                %1038 = vst [vmem:[%s1032 + $0x10] sm:%s1024] %v1037
                %v1039 = vld [vmem:[%s1031 + $0x30] sm:%s1024]
                %1040 = vst [vmem:[%s1032 + $0x18] sm:%s1024] %v1039
                %v1041 = vld [vmem:[%s1031 + $0x40] sm:%s1024]
                %1042 = vst [vmem:[%s1032 + $0x20] sm:%s1024] %v1041
                %v1043 = vld [vmem:[%s1031 + $0x50] sm:%s1024]
                %1044 = vst [vmem:[%s1032 + $0x28] sm:%s1024] %v1043
                %v1045 = vld [vmem:[%s1031 + $0x60] sm:%s1024]
                %1046 = vst [vmem:[%s1032 + $0x30] sm:%s1024] %v1045
                %v1047 = vld [vmem:[%s1031 + $0x70] sm:%s1024]
                %1048 = vst [vmem:[%s1032 + $0x38] sm:%s1024] %v1047
              $region201: #{tpu_custom_call.1} parent=195 // loop_footer
                %s1030 = sadd.s32 1, %s1026
              $region202: #{tpu_custom_call.1} parent=195 // loop_footer_branch
                %1025 = sbr.rel target = $region198
              $region203: #{tpu_custom_call.1} parent=195 // loop_exit
                _
            $region196: #{tpu_custom_call.1} parent=187 // pred_fallthru
              _
          $region188: #{tpu_custom_call.1} parent=183 // pred_fallthru
            _
          %1077 = vnop
        $region184: #{tpu_custom_call.1} parent=103 // pred_fallthru
          _
        // Predicated region
        $region219: #{tpu_custom_call.1} parent=103 // pred_check
          %p1078 = pneg %p159
        $region220: #{tpu_custom_call.1} parent=103 // pred_check_branch
          %1080 = sbr.rel (%p1078) target = $region222
        $region221: #{tpu_custom_call.1} parent=103 // pred_region
          %s1081 = sand.u32 %s149, 1
          %s1082 = sand.u32 %s149, 1
          %s1083 = smul.addr %s1082, 64
          %s1084 = scalar_lea.vmem [#allocation7], %s1083
          %s1085 = smul.u32 8, %s48
          %s1086 = smul.addr %s1085, 2
          %s1087 = sadd.s32 %s49, %s1086
          %s1088 = smul.addr %s1087, 8
          %s1089 = scalar_lea.vmem %s3, %s1088
          // Predicated region
          $region223: #{tpu_custom_call.1} parent=221 // pred_check
            _
          $region224: #{tpu_custom_call.1} parent=221 // pred_check_branch
            %1091 = sbr.rel (0) target = $region226
          $region225: #{tpu_custom_call.1} parent=221 // pred_region
            // Predicated region
            $region227: #{tpu_custom_call.1} parent=225 // pred_check
              _
            $region228: #{tpu_custom_call.1} parent=225 // pred_check_branch
              %1093 = sbr.rel (0) target = $region230
            $region229: #{tpu_custom_call.1} parent=225 // pred_region
              // Predicated region
              $region242: #{tpu_custom_call.1} parent=229 // pred_check
                _
              $region243: #{tpu_custom_call.1} parent=229 // pred_check_branch
                %1123 = sbr.rel (0) target = $region245
              $region244: #{tpu_custom_call.1} parent=229 // pred_region
                loop: start=0, step=1, limit=1
                $region246: #{tpu_custom_call.1} parent=244 // loop_pre_header
                  _
                $region247: #{tpu_custom_call.1} parent=244 // loop_header
                  %s1125 = sphi 0, %s1129
                  %p1126 = scmp.ge.s32.totalorder %s1125, 1
                  %s1130 = sphi %s1089, %s1089
                  %s1131 = sphi %s1084, %s1084
                $region248: #{tpu_custom_call.1} parent=244 // loop_header_branch
                  %1128 = sbr.rel (%p1126) target = $region252
                $region249: #{tpu_custom_call.1} parent=244 // loop_body
                  %v1132 = vld [vmem:[%s1130] sm:$0xff]
                  %1133 = vst [vmem:[%s1131] sm:$0xff] %v1132
                  %v1134 = vld [vmem:[%s1130 + $0x10] sm:$0xff]
                  %1135 = vst [vmem:[%s1131 + $0x8] sm:$0xff] %v1134
                  %v1136 = vld [vmem:[%s1130 + $0x20] sm:$0xff]
                  %1137 = vst [vmem:[%s1131 + $0x10] sm:$0xff] %v1136
                  %v1138 = vld [vmem:[%s1130 + $0x30] sm:$0xff]
                  %1139 = vst [vmem:[%s1131 + $0x18] sm:$0xff] %v1138
                  %v1140 = vld [vmem:[%s1130 + $0x40] sm:$0xff]
                  %1141 = vst [vmem:[%s1131 + $0x20] sm:$0xff] %v1140
                  %v1142 = vld [vmem:[%s1130 + $0x50] sm:$0xff]
                  %1143 = vst [vmem:[%s1131 + $0x28] sm:$0xff] %v1142
                  %v1144 = vld [vmem:[%s1130 + $0x60] sm:$0xff]
                  %1145 = vst [vmem:[%s1131 + $0x30] sm:$0xff] %v1144
                  %v1146 = vld [vmem:[%s1130 + $0x70] sm:$0xff]
                  %1147 = vst [vmem:[%s1131 + $0x38] sm:$0xff] %v1146
                $region250: #{tpu_custom_call.1} parent=244 // loop_footer
                  %s1129 = sadd.s32 1, %s1125
                $region251: #{tpu_custom_call.1} parent=244 // loop_footer_branch
                  %1124 = sbr.rel target = $region247
                $region252: #{tpu_custom_call.1} parent=244 // loop_exit
                  _
              $region245: #{tpu_custom_call.1} parent=229 // pred_fallthru
                _
              // Predicated region
              $region253: #{tpu_custom_call.1} parent=229 // pred_check
                _
              $region254: #{tpu_custom_call.1} parent=229 // pred_check_branch
                %1149 = sbr.rel target = $region256
              $region255: #{tpu_custom_call.1} parent=229 // pred_region
                _
              $region256: #{tpu_custom_call.1} parent=229 // pred_fallthru
                _
            $region230: #{tpu_custom_call.1} parent=225 // pred_fallthru
              _
            // Predicated region
            $region231: #{tpu_custom_call.1} parent=225 // pred_check
              _
            $region232: #{tpu_custom_call.1} parent=225 // pred_check_branch
              %1095 = sbr.rel target = $region234
            $region233: #{tpu_custom_call.1} parent=225 // pred_region
              %s1097 = ssub.s32 256, 1
              loop: start=0, step=1, limit=1
              $region235: #{tpu_custom_call.1} parent=233 // loop_pre_header
                _
              $region236: #{tpu_custom_call.1} parent=233 // loop_header
                %s1099 = sphi 0, %s1103
                %p1100 = scmp.ge.s32.totalorder %s1099, 1
                %s1104 = sphi %s1089, %s1089
                %s1105 = sphi %s1084, %s1084
              $region237: #{tpu_custom_call.1} parent=233 // loop_header_branch
                %1102 = sbr.rel (%p1100) target = $region241
              $region238: #{tpu_custom_call.1} parent=233 // loop_body
                %v1106 = vld [vmem:[%s1104] sm:%s1097]
                %1107 = vst [vmem:[%s1105] sm:%s1097] %v1106
                %v1108 = vld [vmem:[%s1104 + $0x10] sm:%s1097]
                %1109 = vst [vmem:[%s1105 + $0x8] sm:%s1097] %v1108
                %v1110 = vld [vmem:[%s1104 + $0x20] sm:%s1097]
                %1111 = vst [vmem:[%s1105 + $0x10] sm:%s1097] %v1110
                %v1112 = vld [vmem:[%s1104 + $0x30] sm:%s1097]
                %1113 = vst [vmem:[%s1105 + $0x18] sm:%s1097] %v1112
                %v1114 = vld [vmem:[%s1104 + $0x40] sm:%s1097]
                %1115 = vst [vmem:[%s1105 + $0x20] sm:%s1097] %v1114
                %v1116 = vld [vmem:[%s1104 + $0x50] sm:%s1097]
                %1117 = vst [vmem:[%s1105 + $0x28] sm:%s1097] %v1116
                %v1118 = vld [vmem:[%s1104 + $0x60] sm:%s1097]
                %1119 = vst [vmem:[%s1105 + $0x30] sm:%s1097] %v1118
                %v1120 = vld [vmem:[%s1104 + $0x70] sm:%s1097]
                %1121 = vst [vmem:[%s1105 + $0x38] sm:%s1097] %v1120
              $region239: #{tpu_custom_call.1} parent=233 // loop_footer
                %s1103 = sadd.s32 1, %s1099
              $region240: #{tpu_custom_call.1} parent=233 // loop_footer_branch
                %1098 = sbr.rel target = $region236
              $region241: #{tpu_custom_call.1} parent=233 // loop_exit
                _
            $region234: #{tpu_custom_call.1} parent=225 // pred_fallthru
              _
          $region226: #{tpu_custom_call.1} parent=221 // pred_fallthru
            _
          %1150 = vnop
        $region222: #{tpu_custom_call.1} parent=103 // pred_fallthru
          _
      $region104: #{tpu_custom_call.1} parent=5 // pred_fallthru
        _
      %p1151 = scmp.le.s32.totalorder 1, %s41
      %p1152 = scmp.lt.s32.totalorder %s41, 5
      %p1153 = pnand %p1151, %p1152
      %p1154 = pneg %p1153
      // Predicated region
      $region257: #{tpu_custom_call.1} parent=5 // pred_check
        _
      $region258: #{tpu_custom_call.1} parent=5 // pred_check_branch
        %1156 = sbr.rel (%p1153) target = $region260
      $region259: #{tpu_custom_call.1} parent=5 // pred_region
        %s1157 = ssub.s32 %s41, 1
        %s1158 = sand.u32 %s68, 1
        %s1159 = sand.u32 %s68, 1
        %s1160 = smul.addr %s1159, 64
        %s1161 = scalar_lea.vmem [#allocation4], %s1160
        // Predicated region
        $region261: #{tpu_custom_call.1} parent=259 // pred_check
          %p1162 = pneg %p81
        $region262: #{tpu_custom_call.1} parent=259 // pred_check_branch
          %1164 = sbr.rel (%p1162) target = $region264
        $region263: #{tpu_custom_call.1} parent=259 // pred_region
          _
        $region264: #{tpu_custom_call.1} parent=259 // pred_fallthru
          _
        %s1165 = sand.u32 %s96, 1
        %s1166 = sand.u32 %s96, 1
        %s1167 = smul.addr %s1166, 64
        %s1168 = scalar_lea.vmem [#allocation5], %s1167
        // Predicated region
        $region265: #{tpu_custom_call.1} parent=259 // pred_check
          %p1169 = pneg %p109
        $region266: #{tpu_custom_call.1} parent=259 // pred_check_branch
          %1171 = sbr.rel (%p1169) target = $region268
        $region267: #{tpu_custom_call.1} parent=259 // pred_region
          _
        $region268: #{tpu_custom_call.1} parent=259 // pred_fallthru
          _
        %s1172 = sand.u32 %s124, 1
        %s1173 = sand.u32 %s124, 1
        %s1174 = smul.addr %s1173, 64
        %s1175 = scalar_lea.vmem [#allocation6], %s1174
        // Predicated region
        $region269: #{tpu_custom_call.1} parent=259 // pred_check
          %p1176 = pneg %p137
        $region270: #{tpu_custom_call.1} parent=259 // pred_check_branch
          %1178 = sbr.rel (%p1176) target = $region272
        $region271: #{tpu_custom_call.1} parent=259 // pred_region
          _
        $region272: #{tpu_custom_call.1} parent=259 // pred_fallthru
          _
        %s1179 = sand.u32 %s152, 1
        %s1180 = sand.u32 %s152, 1
        %s1181 = smul.addr %s1180, 64
        %s1182 = scalar_lea.vmem [#allocation7], %s1181
        // Predicated region
        $region273: #{tpu_custom_call.1} parent=259 // pred_check
          %p1183 = pneg %p165
        $region274: #{tpu_custom_call.1} parent=259 // pred_check_branch
          %1185 = sbr.rel (%p1183) target = $region276
        $region275: #{tpu_custom_call.1} parent=259 // pred_region
          _
        $region276: #{tpu_custom_call.1} parent=259 // pred_fallthru
          _
        // Predicated region
        $region277: #{tpu_custom_call.1} parent=259 // pred_check
          %p1186 = pneg %p186
        $region278: #{tpu_custom_call.1} parent=259 // pred_check_branch
          %1188 = sbr.rel (%p1186) target = $region280
        $region279: #{tpu_custom_call.1} parent=259 // pred_region
          %1190 = dma.done [#allocation9], 512
        $region280: #{tpu_custom_call.1} parent=259 // pred_fallthru
          _
        // Predicated region
        $region281: #{tpu_custom_call.1} parent=259 // pred_check
          %p1191 = pneg %p228
        $region282: #{tpu_custom_call.1} parent=259 // pred_check_branch
          %1193 = sbr.rel (%p1191) target = $region284
        $region283: #{tpu_custom_call.1} parent=259 // pred_region
          %1195 = dma.done [#allocation12], 2048
        $region284: #{tpu_custom_call.1} parent=259 // pred_fallthru
          _
        // Predicated region
        $region285: #{tpu_custom_call.1} parent=259 // pred_check
          %p1196 = pneg %p270
        $region286: #{tpu_custom_call.1} parent=259 // pred_check_branch
          %1198 = sbr.rel (%p1196) target = $region288
        $region287: #{tpu_custom_call.1} parent=259 // pred_region
          %1200 = dma.done [#allocation12], 2048
        $region288: #{tpu_custom_call.1} parent=259 // pred_fallthru
          _
        // Predicated region
        $region289: #{tpu_custom_call.1} parent=259 // pred_check
          %p1201 = pneg %p312
        $region290: #{tpu_custom_call.1} parent=259 // pred_check_branch
          %1203 = sbr.rel (%p1201) target = $region292
        $region291: #{tpu_custom_call.1} parent=259 // pred_region
          %1205 = dma.done [#allocation15], 2048
        $region292: #{tpu_custom_call.1} parent=259 // pred_fallthru
          _
        // Predicated region
        $region293: #{tpu_custom_call.1} parent=259 // pred_check
          %p1206 = pneg %p354
        $region294: #{tpu_custom_call.1} parent=259 // pred_check_branch
          %1208 = sbr.rel (%p1206) target = $region296
        $region295: #{tpu_custom_call.1} parent=259 // pred_region
          %1210 = dma.done [#allocation15], 2048
        $region296: #{tpu_custom_call.1} parent=259 // pred_fallthru
          _
        // Predicated region
        $region297: #{tpu_custom_call.1} parent=259 // pred_check
          %p1211 = pneg %p396
        $region298: #{tpu_custom_call.1} parent=259 // pred_check_branch
          %1213 = sbr.rel (%p1211) target = $region300
        $region299: #{tpu_custom_call.1} parent=259 // pred_region
          %1215 = dma.done [#allocation18], 2048
        $region300: #{tpu_custom_call.1} parent=259 // pred_fallthru
          _
        // Predicated region
        $region301: #{tpu_custom_call.1} parent=259 // pred_check
          %p1216 = pneg %p438
        $region302: #{tpu_custom_call.1} parent=259 // pred_check_branch
          %1218 = sbr.rel (%p1216) target = $region304
        $region303: #{tpu_custom_call.1} parent=259 // pred_region
          %1220 = dma.done [#allocation18], 2048
        $region304: #{tpu_custom_call.1} parent=259 // pred_fallthru
          _
        // Predicated region
        $region305: #{tpu_custom_call.1} parent=259 // pred_check
          %p1221 = pneg %p480
        $region306: #{tpu_custom_call.1} parent=259 // pred_check_branch
          %1223 = sbr.rel (%p1221) target = $region308
        $region307: #{tpu_custom_call.1} parent=259 // pred_region
          %1225 = dma.done [#allocation21], 2048
        $region308: #{tpu_custom_call.1} parent=259 // pred_fallthru
          _
        // Predicated region
        $region309: #{tpu_custom_call.1} parent=259 // pred_check
          %p1226 = pneg %p522
        $region310: #{tpu_custom_call.1} parent=259 // pred_check_branch
          %1228 = sbr.rel (%p1226) target = $region312
        $region311: #{tpu_custom_call.1} parent=259 // pred_region
          %1230 = dma.done [#allocation21], 2048
        $region312: #{tpu_custom_call.1} parent=259 // pred_fallthru
          _
        // Predicated region
        $region313: #{tpu_custom_call.1} parent=259 // pred_check
          %p1231 = pneg %p564
        $region314: #{tpu_custom_call.1} parent=259 // pred_check_branch
          %1233 = sbr.rel (%p1231) target = $region316
        $region315: #{tpu_custom_call.1} parent=259 // pred_region
          %1235 = dma.done [#allocation24], 2048
        $region316: #{tpu_custom_call.1} parent=259 // pred_fallthru
          _
        // Predicated region
        $region317: #{tpu_custom_call.1} parent=259 // pred_check
          %p1236 = pneg %p606
        $region318: #{tpu_custom_call.1} parent=259 // pred_check_branch
          %1238 = sbr.rel (%p1236) target = $region320
        $region319: #{tpu_custom_call.1} parent=259 // pred_region
          %1240 = dma.done [#allocation24], 2048
        $region320: #{tpu_custom_call.1} parent=259 // pred_fallthru
          _
        %s1241 = sand.u32 %s68, 1
        %s1242 = sand.u32 %s68, 1
        %s1243 = smul.addr %s1242, 64
        %s1244 = scalar_lea.vmem [#allocation4], %s1243
        %p1245 = pneg %p81
        %p1246 = pneg %p78
        %s1247 = sand.u32 %s96, 1
        %s1248 = sand.u32 %s96, 1
        %s1249 = smul.addr %s1248, 64
        %s1250 = scalar_lea.vmem [#allocation5], %s1249
        %p1251 = pneg %p109
        %p1252 = pneg %p106
        %s1253 = sand.u32 %s124, 1
        %s1254 = sand.u32 %s124, 1
        %s1255 = smul.addr %s1254, 64
        %s1256 = scalar_lea.vmem [#allocation6], %s1255
        %p1257 = pneg %p137
        %p1258 = pneg %p134
        %s1259 = sand.u32 %s152, 1
        %s1260 = sand.u32 %s152, 1
        %s1261 = smul.addr %s1260, 64
        %s1262 = scalar_lea.vmem [#allocation7], %s1261
        %p1263 = pneg %p165
        %p1264 = pneg %p162
        %p1265 = pneg %p186
        %p1266 = pneg %p183
        %p1267 = pneg %p207
        %p1268 = pneg %p204
        %p1269 = pneg %p228
        %p1270 = pneg %p225
        %p1271 = pneg %p249
        %p1272 = pneg %p246
        %p1273 = pneg %p270
        %p1274 = pneg %p267
        %p1275 = pneg %p291
        %p1276 = pneg %p288
        %p1277 = pneg %p312
        %p1278 = pneg %p309
        %p1279 = pneg %p333
        %p1280 = pneg %p330
        %p1281 = pneg %p354
        %p1282 = pneg %p351
        %p1283 = pneg %p375
        %p1284 = pneg %p372
        %p1285 = pneg %p396
        %p1286 = pneg %p393
        %p1287 = pneg %p417
        %p1288 = pneg %p414
        %p1289 = pneg %p438
        %p1290 = pneg %p435
        %p1291 = pneg %p459
        %p1292 = pneg %p456
        %p1293 = pneg %p480
        %p1294 = pneg %p477
        %p1295 = pneg %p501
        %p1296 = pneg %p498
        %p1297 = pneg %p522
        %p1298 = pneg %p519
        %p1299 = pneg %p543
        %p1300 = pneg %p540
        %p1301 = pneg %p564
        %p1302 = pneg %p561
        %p1303 = pneg %p585
        %p1304 = pneg %p582
        %p1305 = pneg %p606
        %p1306 = pneg %p603
        %p1307 = pneg %p627
        %p1308 = pneg %p624
        %p1309 = pneg %p653
        %p1310 = pneg %p650
        %s1311 = sand.u32 %s640, 1
        %s1312 = scalar_lea.sflag [#allocation10], %s1311
        %s1313 = sand.u32 %s640, 1
        %s1314 = smul.addr %s1313, 8
        %s1315 = scalar_lea.vmem [#allocation26], %s1314
        %s1316 = smul.u32 8, %s50
        %s1317 = smul.u32 8, %s50
        %s1318 = smul.u32 8, %s50
        %s1319 = smul.u32 8, %s50
        %p1320 = scmp.eq.s32.totalorder %s51, 0
        // Predicated region
        $region321: #{tpu_custom_call.1} parent=259 // pred_check
          %p1321 = pneg %p1320
        $region322: #{tpu_custom_call.1} parent=259 // pred_check_branch
          %1323 = sbr.rel (%p1321) target = $region324
        $region323: #{tpu_custom_call.1} parent=259 // pred_region
          %vm1324 = vcmask 261120
          %1325 = vst.msk [vmem:[#allocation2] sm:$0xff] %vm1324, 0.0
          %1326 = vst.msk [vmem:[#allocation2 + $0x8] sm:$0xff] %vm1324, 0.0
          %vm1327 = vcmask 7168
          %1328 = vst.msk [vmem:[#allocation3] sm:$0xff] %vm1327, 0.0
          %1329 = vst.msk [vmem:[#allocation3 + $0x8] sm:$0xff] %vm1327, 0.0
        $region324: #{tpu_custom_call.1} parent=259 // pred_fallthru
          _
        %v1330 = vld [vmem:[%s1161] sm:$0xff]
        %v1331 = vld [vmem:[%s1161 + $0x8] sm:$0xff]
        %v1332 = vld [vmem:[%s1161 + $0x10] sm:$0xff]
        %v1333 = vld [vmem:[%s1161 + $0x18] sm:$0xff]
        %v1334 = vld [vmem:[%s1161 + $0x20] sm:$0xff]
        %v1335 = vld [vmem:[%s1161 + $0x28] sm:$0xff]
        %v1336 = vld [vmem:[%s1161 + $0x30] sm:$0xff]
        %v1337 = vld [vmem:[%s1161 + $0x38] sm:$0xff]
        %v1338 = vld [vmem:[%s1168] sm:$0xff]
        %v1339 = vld [vmem:[%s1168 + $0x8] sm:$0xff]
        %v1340 = vld [vmem:[%s1168 + $0x10] sm:$0xff]
        %v1341 = vld [vmem:[%s1168 + $0x18] sm:$0xff]
        %v1342 = vld [vmem:[%s1168 + $0x20] sm:$0xff]
        %v1343 = vld [vmem:[%s1168 + $0x28] sm:$0xff]
        %v1344 = vld [vmem:[%s1168 + $0x30] sm:$0xff]
        %v1345 = vld [vmem:[%s1168 + $0x38] sm:$0xff]
        %v1346 = vld [vmem:[%s1175] sm:$0xff]
        %v1347 = vld [vmem:[%s1175 + $0x8] sm:$0xff]
        %v1348 = vld [vmem:[%s1175 + $0x10] sm:$0xff]
        %v1349 = vld [vmem:[%s1175 + $0x18] sm:$0xff]
        %v1350 = vld [vmem:[%s1175 + $0x20] sm:$0xff]
        %v1351 = vld [vmem:[%s1175 + $0x28] sm:$0xff]
        %v1352 = vld [vmem:[%s1175 + $0x30] sm:$0xff]
        %v1353 = vld [vmem:[%s1175 + $0x38] sm:$0xff]
        %v1354 = vld [vmem:[%s1182] sm:$0xff]
        %v1355 = vld [vmem:[%s1182 + $0x8] sm:$0xff]
        %v1356 = vld [vmem:[%s1182 + $0x10] sm:$0xff]
        %v1357 = vld [vmem:[%s1182 + $0x18] sm:$0xff]
        %v1358 = vld [vmem:[%s1182 + $0x20] sm:$0xff]
        %v1359 = vld [vmem:[%s1182 + $0x28] sm:$0xff]
        %v1360 = vld [vmem:[%s1182 + $0x30] sm:$0xff]
        %v1361 = vld [vmem:[%s1182 + $0x38] sm:$0xff]
        %v1362 = vld [vmem:[#allocation2] sm:$0xff]
        %1364 = vset.pattern.permute.xlu0 0
        %1365 = vperm.xlu0 %1364, %v1338
        %v1366 = vpop.permute.xlu0 %1365
        %1369 = vset.pattern.permute.xlu0 0
        %1370 = vperm.xlu0 %1369, %v1339
        %v1371 = vpop.permute.xlu0 %1370
        %1374 = vset.pattern.permute.xlu0 0
        %1375 = vperm.xlu0 %1374, %v1340
        %v1376 = vpop.permute.xlu0 %1375
        %1379 = vset.pattern.permute.xlu0 0
        %1380 = vperm.xlu0 %1379, %v1341
        %v1381 = vpop.permute.xlu0 %1380
        %1384 = vset.pattern.permute.xlu0 0
        %1385 = vperm.xlu0 %1384, %v1342
        %v1386 = vpop.permute.xlu0 %1385
        %1389 = vset.pattern.permute.xlu0 0
        %1390 = vperm.xlu0 %1389, %v1343
        %v1391 = vpop.permute.xlu0 %1390
        %1394 = vset.pattern.permute.xlu0 0
        %1395 = vperm.xlu0 %1394, %v1344
        %v1396 = vpop.permute.xlu0 %1395
        %1399 = vset.pattern.permute.xlu0 0
        %1400 = vperm.xlu0 %1399, %v1345
        %v1401 = vpop.permute.xlu0 %1400
        %v1403 = vmul.f32 %v1330, %v1366
        %v1404 = vmul.f32 %v1331, %v1371
        %v1405 = vmul.f32 %v1332, %v1376
        %v1406 = vmul.f32 %v1333, %v1381
        %v1407 = vmul.f32 %v1334, %v1386
        %v1408 = vmul.f32 %v1335, %v1391
        %v1409 = vmul.f32 %v1336, %v1396
        %v1410 = vmul.f32 %v1337, %v1401
        %vm1411 = vcmask 261120
        %v1412 = vsel %vm1411, %v1403, 0.0
        %v1413 = vrot.slane %v1412, 4
        %v1414 = vadd.f32 %v1412, %v1413
        %v1415 = vrot.slane %v1414, 2
        %v1416 = vadd.f32 %v1414, %v1415
        %v1417 = vrot.slane %v1416, 1
        %v1418 = vadd.f32 %v1416, %v1417
        %v1419 = vsel %vm1411, %v1404, 0.0
        %v1420 = vrot.slane %v1419, 4
        %v1421 = vadd.f32 %v1419, %v1420
        %v1422 = vrot.slane %v1421, 2
        %v1423 = vadd.f32 %v1421, %v1422
        %v1424 = vrot.slane %v1423, 1
        %v1425 = vadd.f32 %v1423, %v1424
        %v1426 = vsel %vm1411, %v1405, 0.0
        %v1427 = vrot.slane %v1426, 4
        %v1428 = vadd.f32 %v1426, %v1427
        %v1429 = vrot.slane %v1428, 2
        %v1430 = vadd.f32 %v1428, %v1429
        %v1431 = vrot.slane %v1430, 1
        %v1432 = vadd.f32 %v1430, %v1431
        %v1433 = vsel %vm1411, %v1406, 0.0
        %v1434 = vrot.slane %v1433, 4
        %v1435 = vadd.f32 %v1433, %v1434
        %v1436 = vrot.slane %v1435, 2
        %v1437 = vadd.f32 %v1435, %v1436
        %v1438 = vrot.slane %v1437, 1
        %v1439 = vadd.f32 %v1437, %v1438
        %v1440 = vsel %vm1411, %v1407, 0.0
        %v1441 = vrot.slane %v1440, 4
        %v1442 = vadd.f32 %v1440, %v1441
        %v1443 = vrot.slane %v1442, 2
        %v1444 = vadd.f32 %v1442, %v1443
        %v1445 = vrot.slane %v1444, 1
        %v1446 = vadd.f32 %v1444, %v1445
        %v1447 = vsel %vm1411, %v1408, 0.0
        %v1448 = vrot.slane %v1447, 4
        %v1449 = vadd.f32 %v1447, %v1448
        %v1450 = vrot.slane %v1449, 2
        %v1451 = vadd.f32 %v1449, %v1450
        %v1452 = vrot.slane %v1451, 1
        %v1453 = vadd.f32 %v1451, %v1452
        %v1454 = vsel %vm1411, %v1409, 0.0
        %v1455 = vrot.slane %v1454, 4
        %v1456 = vadd.f32 %v1454, %v1455
        %v1457 = vrot.slane %v1456, 2
        %v1458 = vadd.f32 %v1456, %v1457
        %v1459 = vrot.slane %v1458, 1
        %v1460 = vadd.f32 %v1458, %v1459
        %v1461 = vsel %vm1411, %v1410, 0.0
        %v1462 = vrot.slane %v1461, 4
        %v1463 = vadd.f32 %v1461, %v1462
        %v1464 = vrot.slane %v1463, 2
        %v1465 = vadd.f32 %v1463, %v1464
        %v1466 = vrot.slane %v1465, 1
        %v1467 = vadd.f32 %v1465, %v1466
        %vm1476 = vcmask 1041409
        %v1477 = vsel %vm1476, %v1425, %v1418
        %vm1478 = vcmask 1042434
        %v1479 = vsel %vm1478, %v1432, %v1477
        %vm1480 = vcmask 1043459
        %v1481 = vsel %vm1480, %v1439, %v1479
        %vm1482 = vcmask 1044484
        %v1483 = vsel %vm1482, %v1446, %v1481
        %vm1484 = vcmask 1045509
        %v1485 = vsel %vm1484, %v1453, %v1483
        %vm1486 = vcmask 1046534
        %v1487 = vsel %vm1486, %v1460, %v1485
        %vm1488 = vcmask 1047559
        %v1489 = vsel %vm1488, %v1467, %v1487
        %v1491 = vadd.f32 %v1362, %v1489
        %1492 = vst.msk [vmem:[#allocation2] sm:$0xff] %vm1411, %v1491
        %v1493 = vld [vmem:[#allocation2 + $0x8] sm:$0xff]
        %1495 = vset.pattern.permute.xlu0 0
        %1496 = vperm.xlu0 %1495, %v1354
        %v1497 = vpop.permute.xlu0 %1496
        %1500 = vset.pattern.permute.xlu0 0
        %1501 = vperm.xlu0 %1500, %v1355
        %v1502 = vpop.permute.xlu0 %1501
        %1505 = vset.pattern.permute.xlu0 0
        %1506 = vperm.xlu0 %1505, %v1356
        %v1507 = vpop.permute.xlu0 %1506
        %1510 = vset.pattern.permute.xlu0 0
        %1511 = vperm.xlu0 %1510, %v1357
        %v1512 = vpop.permute.xlu0 %1511
        %1515 = vset.pattern.permute.xlu0 0
        %1516 = vperm.xlu0 %1515, %v1358
        %v1517 = vpop.permute.xlu0 %1516
        %1520 = vset.pattern.permute.xlu0 0
        %1521 = vperm.xlu0 %1520, %v1359
        %v1522 = vpop.permute.xlu0 %1521
        %1525 = vset.pattern.permute.xlu0 0
        %1526 = vperm.xlu0 %1525, %v1360
        %v1527 = vpop.permute.xlu0 %1526
        %1530 = vset.pattern.permute.xlu0 0
        %1531 = vperm.xlu0 %1530, %v1361
        %v1532 = vpop.permute.xlu0 %1531
        %v1534 = vmul.f32 %v1346, %v1497
        %v1535 = vmul.f32 %v1347, %v1502
        %v1536 = vmul.f32 %v1348, %v1507
        %v1537 = vmul.f32 %v1349, %v1512
        %v1538 = vmul.f32 %v1350, %v1517
        %v1539 = vmul.f32 %v1351, %v1522
        %v1540 = vmul.f32 %v1352, %v1527
        %v1541 = vmul.f32 %v1353, %v1532
        %v1542 = vsel %vm1411, %v1534, 0.0
        %v1543 = vrot.slane %v1542, 4
        %v1544 = vadd.f32 %v1542, %v1543
        %v1545 = vrot.slane %v1544, 2
        %v1546 = vadd.f32 %v1544, %v1545
        %v1547 = vrot.slane %v1546, 1
        %v1548 = vadd.f32 %v1546, %v1547
        %v1549 = vsel %vm1411, %v1535, 0.0
        %v1550 = vrot.slane %v1549, 4
        %v1551 = vadd.f32 %v1549, %v1550
        %v1552 = vrot.slane %v1551, 2
        %v1553 = vadd.f32 %v1551, %v1552
        %v1554 = vrot.slane %v1553, 1
        %v1555 = vadd.f32 %v1553, %v1554
        %v1556 = vsel %vm1411, %v1536, 0.0
        %v1557 = vrot.slane %v1556, 4
        %v1558 = vadd.f32 %v1556, %v1557
        %v1559 = vrot.slane %v1558, 2
        %v1560 = vadd.f32 %v1558, %v1559
        %v1561 = vrot.slane %v1560, 1
        %v1562 = vadd.f32 %v1560, %v1561
        %v1563 = vsel %vm1411, %v1537, 0.0
        %v1564 = vrot.slane %v1563, 4
        %v1565 = vadd.f32 %v1563, %v1564
        %v1566 = vrot.slane %v1565, 2
        %v1567 = vadd.f32 %v1565, %v1566
        %v1568 = vrot.slane %v1567, 1
        %v1569 = vadd.f32 %v1567, %v1568
        %v1570 = vsel %vm1411, %v1538, 0.0
        %v1571 = vrot.slane %v1570, 4
        %v1572 = vadd.f32 %v1570, %v1571
        %v1573 = vrot.slane %v1572, 2
        %v1574 = vadd.f32 %v1572, %v1573
        %v1575 = vrot.slane %v1574, 1
        %v1576 = vadd.f32 %v1574, %v1575
        %v1577 = vsel %vm1411, %v1539, 0.0
        %v1578 = vrot.slane %v1577, 4
        %v1579 = vadd.f32 %v1577, %v1578
        %v1580 = vrot.slane %v1579, 2
        %v1581 = vadd.f32 %v1579, %v1580
        %v1582 = vrot.slane %v1581, 1
        %v1583 = vadd.f32 %v1581, %v1582
        %v1584 = vsel %vm1411, %v1540, 0.0
        %v1585 = vrot.slane %v1584, 4
        %v1586 = vadd.f32 %v1584, %v1585
        %v1587 = vrot.slane %v1586, 2
        %v1588 = vadd.f32 %v1586, %v1587
        %v1589 = vrot.slane %v1588, 1
        %v1590 = vadd.f32 %v1588, %v1589
        %v1591 = vsel %vm1411, %v1541, 0.0
        %v1592 = vrot.slane %v1591, 4
        %v1593 = vadd.f32 %v1591, %v1592
        %v1594 = vrot.slane %v1593, 2
        %v1595 = vadd.f32 %v1593, %v1594
        %v1596 = vrot.slane %v1595, 1
        %v1597 = vadd.f32 %v1595, %v1596
        %v1606 = vsel %vm1476, %v1555, %v1548
        %v1607 = vsel %vm1478, %v1562, %v1606
        %v1608 = vsel %vm1480, %v1569, %v1607
        %v1609 = vsel %vm1482, %v1576, %v1608
        %v1610 = vsel %vm1484, %v1583, %v1609
        %v1611 = vsel %vm1486, %v1590, %v1610
        %v1612 = vsel %vm1488, %v1597, %v1611
        %v1614 = vadd.f32 %v1493, %v1612
        %1615 = vst.msk [vmem:[#allocation2 + $0x8] sm:$0xff] %vm1411, %v1614
        %v1616 = vld [vmem:[#allocation3] sm:$0xff]
        %vm1617 = vcmask 7168
        %v1618 = vsel %vm1617, %v1338, 0.0
        %v1619 = vrot.slane %v1618, 4
        %v1620 = vadd.f32 %v1618, %v1619
        %v1621 = vrot.slane %v1620, 2
        %v1622 = vadd.f32 %v1620, %v1621
        %v1623 = vrot.slane %v1622, 1
        %v1624 = vadd.f32 %v1622, %v1623
        %v1625 = vsel %vm1617, %v1339, 0.0
        %v1626 = vrot.slane %v1625, 4
        %v1627 = vadd.f32 %v1625, %v1626
        %v1628 = vrot.slane %v1627, 2
        %v1629 = vadd.f32 %v1627, %v1628
        %v1630 = vrot.slane %v1629, 1
        %v1631 = vadd.f32 %v1629, %v1630
        %v1632 = vsel %vm1617, %v1340, 0.0
        %v1633 = vrot.slane %v1632, 4
        %v1634 = vadd.f32 %v1632, %v1633
        %v1635 = vrot.slane %v1634, 2
        %v1636 = vadd.f32 %v1634, %v1635
        %v1637 = vrot.slane %v1636, 1
        %v1638 = vadd.f32 %v1636, %v1637
        %v1639 = vsel %vm1617, %v1341, 0.0
        %v1640 = vrot.slane %v1639, 4
        %v1641 = vadd.f32 %v1639, %v1640
        %v1642 = vrot.slane %v1641, 2
        %v1643 = vadd.f32 %v1641, %v1642
        %v1644 = vrot.slane %v1643, 1
        %v1645 = vadd.f32 %v1643, %v1644
        %v1646 = vsel %vm1617, %v1342, 0.0
        %v1647 = vrot.slane %v1646, 4
        %v1648 = vadd.f32 %v1646, %v1647
        %v1649 = vrot.slane %v1648, 2
        %v1650 = vadd.f32 %v1648, %v1649
        %v1651 = vrot.slane %v1650, 1
        %v1652 = vadd.f32 %v1650, %v1651
        %v1653 = vsel %vm1617, %v1343, 0.0
        %v1654 = vrot.slane %v1653, 4
        %v1655 = vadd.f32 %v1653, %v1654
        %v1656 = vrot.slane %v1655, 2
        %v1657 = vadd.f32 %v1655, %v1656
        %v1658 = vrot.slane %v1657, 1
        %v1659 = vadd.f32 %v1657, %v1658
        %v1660 = vsel %vm1617, %v1344, 0.0
        %v1661 = vrot.slane %v1660, 4
        %v1662 = vadd.f32 %v1660, %v1661
        %v1663 = vrot.slane %v1662, 2
        %v1664 = vadd.f32 %v1662, %v1663
        %v1665 = vrot.slane %v1664, 1
        %v1666 = vadd.f32 %v1664, %v1665
        %v1667 = vsel %vm1617, %v1345, 0.0
        %v1668 = vrot.slane %v1667, 4
        %v1669 = vadd.f32 %v1667, %v1668
        %v1670 = vrot.slane %v1669, 2
        %v1671 = vadd.f32 %v1669, %v1670
        %v1672 = vrot.slane %v1671, 1
        %v1673 = vadd.f32 %v1671, %v1672
        %v1682 = vsel %vm1476, %v1631, %v1624
        %v1683 = vsel %vm1478, %v1638, %v1682
        %v1684 = vsel %vm1480, %v1645, %v1683
        %v1685 = vsel %vm1482, %v1652, %v1684
        %v1686 = vsel %vm1484, %v1659, %v1685
        %v1687 = vsel %vm1486, %v1666, %v1686
        %v1688 = vsel %vm1488, %v1673, %v1687
        %v1690 = vadd.f32 %v1616, %v1688
        %1691 = vst.msk [vmem:[#allocation3] sm:$0xff] %vm1617, %v1690
        %v1692 = vld [vmem:[#allocation3 + $0x8] sm:$0xff]
        %v1693 = vsel %vm1617, %v1354, 0.0
        %v1694 = vrot.slane %v1693, 4
        %v1695 = vadd.f32 %v1693, %v1694
        %v1696 = vrot.slane %v1695, 2
        %v1697 = vadd.f32 %v1695, %v1696
        %v1698 = vrot.slane %v1697, 1
        %v1699 = vadd.f32 %v1697, %v1698
        %v1700 = vsel %vm1617, %v1355, 0.0
        %v1701 = vrot.slane %v1700, 4
        %v1702 = vadd.f32 %v1700, %v1701
        %v1703 = vrot.slane %v1702, 2
        %v1704 = vadd.f32 %v1702, %v1703
        %v1705 = vrot.slane %v1704, 1
        %v1706 = vadd.f32 %v1704, %v1705
        %v1707 = vsel %vm1617, %v1356, 0.0
        %v1708 = vrot.slane %v1707, 4
        %v1709 = vadd.f32 %v1707, %v1708
        %v1710 = vrot.slane %v1709, 2
        %v1711 = vadd.f32 %v1709, %v1710
        %v1712 = vrot.slane %v1711, 1
        %v1713 = vadd.f32 %v1711, %v1712
        %v1714 = vsel %vm1617, %v1357, 0.0
        %v1715 = vrot.slane %v1714, 4
        %v1716 = vadd.f32 %v1714, %v1715
        %v1717 = vrot.slane %v1716, 2
        %v1718 = vadd.f32 %v1716, %v1717
        %v1719 = vrot.slane %v1718, 1
        %v1720 = vadd.f32 %v1718, %v1719
        %v1721 = vsel %vm1617, %v1358, 0.0
        %v1722 = vrot.slane %v1721, 4
        %v1723 = vadd.f32 %v1721, %v1722
        %v1724 = vrot.slane %v1723, 2
        %v1725 = vadd.f32 %v1723, %v1724
        %v1726 = vrot.slane %v1725, 1
        %v1727 = vadd.f32 %v1725, %v1726
        %v1728 = vsel %vm1617, %v1359, 0.0
        %v1729 = vrot.slane %v1728, 4
        %v1730 = vadd.f32 %v1728, %v1729
        %v1731 = vrot.slane %v1730, 2
        %v1732 = vadd.f32 %v1730, %v1731
        %v1733 = vrot.slane %v1732, 1
        %v1734 = vadd.f32 %v1732, %v1733
        %v1735 = vsel %vm1617, %v1360, 0.0
        %v1736 = vrot.slane %v1735, 4
        %v1737 = vadd.f32 %v1735, %v1736
        %v1738 = vrot.slane %v1737, 2
        %v1739 = vadd.f32 %v1737, %v1738
        %v1740 = vrot.slane %v1739, 1
        %v1741 = vadd.f32 %v1739, %v1740
        %v1742 = vsel %vm1617, %v1361, 0.0
        %v1743 = vrot.slane %v1742, 4
        %v1744 = vadd.f32 %v1742, %v1743
        %v1745 = vrot.slane %v1744, 2
        %v1746 = vadd.f32 %v1744, %v1745
        %v1747 = vrot.slane %v1746, 1
        %v1748 = vadd.f32 %v1746, %v1747
        %v1757 = vsel %vm1476, %v1706, %v1699
        %v1758 = vsel %vm1478, %v1713, %v1757
        %v1759 = vsel %vm1480, %v1720, %v1758
        %v1760 = vsel %vm1482, %v1727, %v1759
        %v1761 = vsel %vm1484, %v1734, %v1760
        %v1762 = vsel %vm1486, %v1741, %v1761
        %v1763 = vsel %vm1488, %v1748, %v1762
        %v1765 = vadd.f32 %v1692, %v1763
        %1766 = vst.msk [vmem:[#allocation3 + $0x8] sm:$0xff] %vm1617, %v1765
        %p1767 = scmp.eq.s32.totalorder %s51, 1
        // Predicated region
        $region325: #{tpu_custom_call.1} parent=259 // pred_check
          %p1768 = pneg %p1767
        $region326: #{tpu_custom_call.1} parent=259 // pred_check_branch
          %1770 = sbr.rel (%p1768) target = $region328
        $region327: #{tpu_custom_call.1} parent=259 // pred_region
          %v1771 = vld [vmem:[#allocation2] sm:$0xff]
          %v1772 = vld [vmem:[#allocation2 + $0x8] sm:$0xff]
          %v1773 = vld [vmem:[#allocation3] sm:$0xff]
          %v1774 = vld [vmem:[#allocation3 + $0x8] sm:$0xff]
          %v1775 = vrcp.pop %v1773
          %v1776 = vrcp.pop %v1774
          %1778 = vset.pattern.permute.xlu0 0
          %1779 = vperm.xlu0 %1778, %v1775
          %v1780 = vpop.permute.xlu0 %1779
          %1783 = vset.pattern.permute.xlu0 0
          %1784 = vperm.xlu0 %1783, %v1776
          %v1785 = vpop.permute.xlu0 %1784
          %v1787 = vmul.f32 %v1771, %v1780
          %v1788 = vmul.f32 %v1772, %v1785
          %v1789 = vld [vmem:[#allocation8] sm:$0xff]
          %v1790 = vld [vmem:[#allocation8 + $0x8] sm:$0xff]
          %v1791 = vld [vmem:[#allocation8 + $0x10] sm:$0xff]
          %v1792 = vld [vmem:[#allocation8 + $0x18] sm:$0xff]
          %v1793 = vld [vmem:[%s5] sm:$0x1]
          %v1795 = vperm.slane %v1793, 0
          %v1798 = vsel %vm1411, %v1787, 0
          %v1801 = vsel %vm1411, %v1788, 0
          %1803 = vmatpush.msra.mxu0 0.0
          %1804 = vmatpush.msra.mxu0 0.0
          %1805 = vmatpush.msra.mxu0 0.0
          %1806 = vmatpush.msra.mxu0 0.0
          %1807 = vmatpush.msra.mxu0 0.0
          %1808 = vmatpush.msra.mxu0 0.0
          %1809 = vmatpush.msra.mxu0 0.0
          %1810 = vmatpush.msra.mxu0 0.0
          %1811 = vmatpush.msra.mxu0 0.0
          %1812 = vmatpush.msra.mxu0 0.0
          %1813 = vmatpush.msra.mxu0 0.0
          %1814 = vmatpush.msra.mxu0 0.0
          %1815 = vmatpush.msra.mxu0 %v1792
          %1816 = vmatpush.msra.mxu0 %v1791
          %1817 = vmatpush.msra.mxu0 %v1790
          %1818 = vmatpush.msra.mxu0 %v1789
          %1819 = vmatmul.f32.gmra.mxu0 %v1798
          %v1820 = vpop.f32.mrf.mxu0
          %v1821 = vadd.f32 %v1795, %v1820
          %1822 = vmatmul.f32.gmra.mxu0 %v1801
          %v1823 = vpop.f32.mrf.mxu0
          %v1824 = vadd.f32 %v1795, %v1823
          %1825 = vdwg.mxu0
          %v1826 = vtanh.pop %v1821
          %v1827 = vtanh.pop %v1824
          %v1828 = vld [vmem:[#allocation11] sm:$0xff]
          %v1829 = vld [vmem:[#allocation11 + $0x8] sm:$0xff]
          %v1830 = vld [vmem:[#allocation11 + $0x10] sm:$0xff]
          %v1831 = vld [vmem:[#allocation11 + $0x18] sm:$0xff]
          %v1832 = vld [vmem:[#allocation11 + $0x20] sm:$0xff]
          %v1833 = vld [vmem:[#allocation11 + $0x28] sm:$0xff]
          %v1834 = vld [vmem:[#allocation11 + $0x30] sm:$0xff]
          %v1835 = vld [vmem:[#allocation11 + $0x38] sm:$0xff]
          %v1836 = vld [vmem:[#allocation11 + $0x40] sm:$0xff]
          %v1837 = vld [vmem:[#allocation11 + $0x48] sm:$0xff]
          %v1838 = vld [vmem:[#allocation11 + $0x50] sm:$0xff]
          %v1839 = vld [vmem:[#allocation11 + $0x58] sm:$0xff]
          %v1840 = vld [vmem:[#allocation11 + $0x60] sm:$0xff]
          %v1841 = vld [vmem:[#allocation11 + $0x68] sm:$0xff]
          %v1842 = vld [vmem:[#allocation11 + $0x70] sm:$0xff]
          %v1843 = vld [vmem:[#allocation11 + $0x78] sm:$0xff]
          %v1844 = vld [vmem:[%s7] sm:$0x1]
          %v1846 = vperm.slane %v1844, 0
          %1848 = vmatpush.msra.mxu0 %v1843
          %1849 = vmatpush.msra.mxu0 %v1842
          %1850 = vmatpush.msra.mxu0 %v1841
          %1851 = vmatpush.msra.mxu0 %v1840
          %1852 = vmatpush.msra.mxu0 %v1839
          %1853 = vmatpush.msra.mxu0 %v1838
          %1854 = vmatpush.msra.mxu0 %v1837
          %1855 = vmatpush.msra.mxu0 %v1836
          %1856 = vmatpush.msra.mxu0 %v1835
          %1857 = vmatpush.msra.mxu0 %v1834
          %1858 = vmatpush.msra.mxu0 %v1833
          %1859 = vmatpush.msra.mxu0 %v1832
          %1860 = vmatpush.msra.mxu0 %v1831
          %1861 = vmatpush.msra.mxu0 %v1830
          %1862 = vmatpush.msra.mxu0 %v1829
          %1863 = vmatpush.msra.mxu0 %v1828
          %1864 = vmatmul.f32.gmra.mxu0 %v1826
          %v1865 = vpop.f32.mrf.mxu0
          %v1866 = vadd.f32 %v1846, %v1865
          %1867 = vdwg.mxu0
          %v1868 = vmul.f32 %v1866, 0.5
          %v1869 = vrcp.pop 1.4142135
          %v1870 = vmul.f32 1.4142135, %v1869
          %v1871 = vsub.f32 1.0, %v1870
          %v1872 = vmul.f32 %v1869, %v1871
          %v1873 = vadd.f32 %v1869, %v1872
          %vm1874 = vweird.f32 %v1869
          %v1875 = vsel %vm1874, %v1869, %v1873
          %v1876 = vmul.f32 %v1866, %v1875
          %v1877 = vmul.f32 %v1876, %v1876
          %v1878 = vmin.f32 16.0, %v1877
          %v1879 = vmul.f32 %v1878, 2.1237322e-06
          %v1880 = vadd.f32 %v1879, 0.00028619796
          %v1881 = vmul.f32 %v1878, %v1880
          %v1882 = vadd.f32 %v1881, 0.0036580483
          %v1883 = vmul.f32 %v1878, %v1882
          %v1884 = vadd.f32 %v1883, 0.05243302
          %v1885 = vmul.f32 %v1878, %v1884
          %v1886 = vadd.f32 %v1885, 0.18741608
          %v1887 = vmul.f32 %v1878, %v1886
          %v1888 = vadd.f32 %v1887, 1.1283791
          %v1889 = vmul.f32 %v1876, %v1888
          %v1890 = vmul.f32 %v1878, 3.8918573e-05
          %v1891 = vadd.f32 %v1890, 0.001143296
          %v1892 = vmul.f32 %v1878, %v1891
          %v1893 = vadd.f32 %v1892, 0.014752088
          %v1894 = vmul.f32 %v1878, %v1893
          %v1895 = vadd.f32 %v1894, 0.112945676
          %v1896 = vmul.f32 %v1878, %v1895
          %v1897 = vadd.f32 %v1896, 0.4994258
          %v1898 = vmul.f32 %v1878, %v1897
          %v1899 = vadd.f32 %v1898, 1.0
          %v1900 = vrcp.pop %v1899
          %v1901 = vmul.f32 %v1899, %v1900
          %v1902 = vsub.f32 1.0, %v1901
          %v1903 = vmul.f32 %v1900, %v1902
          %v1904 = vadd.f32 %v1900, %v1903
          %vm1905 = vweird.f32 %v1899
          %vm1906 = vweird.f32 %v1900
          %vm1907 = vmor %vm1905, %vm1906
          %v1908 = vsel %vm1907, %v1900, %v1904
          %v1909 = vand.u32 2147483647, %v1899
          %vm1910 = vcmp.eq.f32.partialorder %v1909, 8.507059e+37
          %v1911 = vand.u32 %v1899, 2147483648
          %v1912 = vor.u32 1.1754944e-38, %v1911
          %v1913 = vsel %vm1910, %v1912, %v1908
          %v1914 = vmul.f32 %v1889, %v1913
          %v1915 = vmin.f32 %v1914, 1.0
          %v1916 = vmax.f32 %v1915, -1.0
          %v1917 = vadd.f32 %v1916, 1.0
          %v1918 = vmul.f32 %v1868, %v1917
          %v1919 = vld [vmem:[#allocation13] sm:$0xff]
          %v1920 = vld [vmem:[#allocation13 + $0x8] sm:$0xff]
          %v1921 = vld [vmem:[#allocation13 + $0x10] sm:$0xff]
          %v1922 = vld [vmem:[#allocation13 + $0x18] sm:$0xff]
          %v1923 = vld [vmem:[#allocation13 + $0x20] sm:$0xff]
          %v1924 = vld [vmem:[#allocation13 + $0x28] sm:$0xff]
          %v1925 = vld [vmem:[#allocation13 + $0x30] sm:$0xff]
          %v1926 = vld [vmem:[#allocation13 + $0x38] sm:$0xff]
          %v1927 = vld [vmem:[#allocation13 + $0x40] sm:$0xff]
          %v1928 = vld [vmem:[#allocation13 + $0x48] sm:$0xff]
          %v1929 = vld [vmem:[#allocation13 + $0x50] sm:$0xff]
          %v1930 = vld [vmem:[#allocation13 + $0x58] sm:$0xff]
          %v1931 = vld [vmem:[#allocation13 + $0x60] sm:$0xff]
          %v1932 = vld [vmem:[#allocation13 + $0x68] sm:$0xff]
          %v1933 = vld [vmem:[#allocation13 + $0x70] sm:$0xff]
          %v1934 = vld [vmem:[#allocation13 + $0x78] sm:$0xff]
          %v1935 = vld [vmem:[%s9] sm:$0x1]
          %v1937 = vperm.slane %v1935, 0
          %1939 = vmatpush.msra.mxu0 %v1934
          %1940 = vmatpush.msra.mxu0 %v1933
          %1941 = vmatpush.msra.mxu0 %v1932
          %1942 = vmatpush.msra.mxu0 %v1931
          %1943 = vmatpush.msra.mxu0 %v1930
          %1944 = vmatpush.msra.mxu0 %v1929
          %1945 = vmatpush.msra.mxu0 %v1928
          %1946 = vmatpush.msra.mxu0 %v1927
          %1947 = vmatpush.msra.mxu0 %v1926
          %1948 = vmatpush.msra.mxu0 %v1925
          %1949 = vmatpush.msra.mxu0 %v1924
          %1950 = vmatpush.msra.mxu0 %v1923
          %1951 = vmatpush.msra.mxu0 %v1922
          %1952 = vmatpush.msra.mxu0 %v1921
          %1953 = vmatpush.msra.mxu0 %v1920
          %1954 = vmatpush.msra.mxu0 %v1919
          %1955 = vmatmul.f32.gmra.mxu0 %v1918
          %v1956 = vpop.f32.mrf.mxu0
          %v1957 = vadd.f32 %v1937, %v1956
          %1958 = vdwg.mxu0
          %v1959 = vmul.f32 %v1957, 0.5
          %v1960 = vmul.f32 %v1957, %v1875
          %v1961 = vmul.f32 %v1960, %v1960
          %v1962 = vmin.f32 16.0, %v1961
          %v1963 = vmul.f32 %v1962, 2.1237322e-06
          %v1964 = vadd.f32 %v1963, 0.00028619796
          %v1965 = vmul.f32 %v1962, %v1964
          %v1966 = vadd.f32 %v1965, 0.0036580483
          %v1967 = vmul.f32 %v1962, %v1966
          %v1968 = vadd.f32 %v1967, 0.05243302
          %v1969 = vmul.f32 %v1962, %v1968
          %v1970 = vadd.f32 %v1969, 0.18741608
          %v1971 = vmul.f32 %v1962, %v1970
          %v1972 = vadd.f32 %v1971, 1.1283791
          %v1973 = vmul.f32 %v1960, %v1972
          %v1974 = vmul.f32 %v1962, 3.8918573e-05
          %v1975 = vadd.f32 %v1974, 0.001143296
          %v1976 = vmul.f32 %v1962, %v1975
          %v1977 = vadd.f32 %v1976, 0.014752088
          %v1978 = vmul.f32 %v1962, %v1977
          %v1979 = vadd.f32 %v1978, 0.112945676
          %v1980 = vmul.f32 %v1962, %v1979
          %v1981 = vadd.f32 %v1980, 0.4994258
          %v1982 = vmul.f32 %v1962, %v1981
          %v1983 = vadd.f32 %v1982, 1.0
          %v1984 = vrcp.pop %v1983
          %v1985 = vmul.f32 %v1983, %v1984
          %v1986 = vsub.f32 1.0, %v1985
          %v1987 = vmul.f32 %v1984, %v1986
          %v1988 = vadd.f32 %v1984, %v1987
          %vm1989 = vweird.f32 %v1983
          %vm1990 = vweird.f32 %v1984
          %vm1991 = vmor %vm1989, %vm1990
          %v1992 = vsel %vm1991, %v1984, %v1988
          %v1993 = vand.u32 2147483647, %v1983
          %vm1994 = vcmp.eq.f32.partialorder %v1993, 8.507059e+37
          %v1995 = vand.u32 %v1983, 2147483648
          %v1996 = vor.u32 1.1754944e-38, %v1995
          %v1997 = vsel %vm1994, %v1996, %v1992
          %v1998 = vmul.f32 %v1973, %v1997
          %v1999 = vmin.f32 %v1998, 1.0
          %v2000 = vmax.f32 %v1999, -1.0
          %v2001 = vadd.f32 %v2000, 1.0
          %v2002 = vmul.f32 %v1959, %v2001
          %v2003 = vld [vmem:[#allocation14] sm:$0xff]
          %v2004 = vld [vmem:[#allocation14 + $0x8] sm:$0xff]
          %v2005 = vld [vmem:[#allocation14 + $0x10] sm:$0xff]
          %v2006 = vld [vmem:[#allocation14 + $0x18] sm:$0xff]
          %v2007 = vld [vmem:[#allocation14 + $0x20] sm:$0xff]
          %v2008 = vld [vmem:[#allocation14 + $0x28] sm:$0xff]
          %v2009 = vld [vmem:[#allocation14 + $0x30] sm:$0xff]
          %v2010 = vld [vmem:[#allocation14 + $0x38] sm:$0xff]
          %v2011 = vld [vmem:[#allocation14 + $0x40] sm:$0xff]
          %v2012 = vld [vmem:[#allocation14 + $0x48] sm:$0xff]
          %v2013 = vld [vmem:[#allocation14 + $0x50] sm:$0xff]
          %v2014 = vld [vmem:[#allocation14 + $0x58] sm:$0xff]
          %v2015 = vld [vmem:[#allocation14 + $0x60] sm:$0xff]
          %v2016 = vld [vmem:[#allocation14 + $0x68] sm:$0xff]
          %v2017 = vld [vmem:[#allocation14 + $0x70] sm:$0xff]
          %v2018 = vld [vmem:[#allocation14 + $0x78] sm:$0xff]
          %v2019 = vld [vmem:[%s11] sm:$0x1]
          %v2021 = vperm.slane %v2019, 0
          %2023 = vmatpush.msra.mxu0 %v2018
          %2024 = vmatpush.msra.mxu0 %v2017
          %2025 = vmatpush.msra.mxu0 %v2016
          %2026 = vmatpush.msra.mxu0 %v2015
          %2027 = vmatpush.msra.mxu0 %v2014
          %2028 = vmatpush.msra.mxu0 %v2013
          %2029 = vmatpush.msra.mxu0 %v2012
          %2030 = vmatpush.msra.mxu0 %v2011
          %2031 = vmatpush.msra.mxu0 %v2010
          %2032 = vmatpush.msra.mxu0 %v2009
          %2033 = vmatpush.msra.mxu0 %v2008
          %2034 = vmatpush.msra.mxu0 %v2007
          %2035 = vmatpush.msra.mxu0 %v2006
          %2036 = vmatpush.msra.mxu0 %v2005
          %2037 = vmatpush.msra.mxu0 %v2004
          %2038 = vmatpush.msra.mxu0 %v2003
          %2039 = vmatmul.f32.gmra.mxu0 %v2002
          %v2040 = vpop.f32.mrf.mxu0
          %v2041 = vadd.f32 %v2021, %v2040
          %2042 = vdwg.mxu0
          %v2043 = vmul.f32 %v2041, 0.5
          %v2044 = vmul.f32 %v2041, %v1875
          %v2045 = vmul.f32 %v2044, %v2044
          %v2046 = vmin.f32 16.0, %v2045
          %v2047 = vmul.f32 %v2046, 2.1237322e-06
          %v2048 = vadd.f32 %v2047, 0.00028619796
          %v2049 = vmul.f32 %v2046, %v2048
          %v2050 = vadd.f32 %v2049, 0.0036580483
          %v2051 = vmul.f32 %v2046, %v2050
          %v2052 = vadd.f32 %v2051, 0.05243302
          %v2053 = vmul.f32 %v2046, %v2052
          %v2054 = vadd.f32 %v2053, 0.18741608
          %v2055 = vmul.f32 %v2046, %v2054
          %v2056 = vadd.f32 %v2055, 1.1283791
          %v2057 = vmul.f32 %v2044, %v2056
          %v2058 = vmul.f32 %v2046, 3.8918573e-05
          %v2059 = vadd.f32 %v2058, 0.001143296
          %v2060 = vmul.f32 %v2046, %v2059
          %v2061 = vadd.f32 %v2060, 0.014752088
          %v2062 = vmul.f32 %v2046, %v2061
          %v2063 = vadd.f32 %v2062, 0.112945676
          %v2064 = vmul.f32 %v2046, %v2063
          %v2065 = vadd.f32 %v2064, 0.4994258
          %v2066 = vmul.f32 %v2046, %v2065
          %v2067 = vadd.f32 %v2066, 1.0
          %v2068 = vrcp.pop %v2067
          %v2069 = vmul.f32 %v2067, %v2068
          %v2070 = vsub.f32 1.0, %v2069
          %v2071 = vmul.f32 %v2068, %v2070
          %v2072 = vadd.f32 %v2068, %v2071
          %vm2073 = vweird.f32 %v2067
          %vm2074 = vweird.f32 %v2068
          %vm2075 = vmor %vm2073, %vm2074
          %v2076 = vsel %vm2075, %v2068, %v2072
          %v2077 = vand.u32 2147483647, %v2067
          %vm2078 = vcmp.eq.f32.partialorder %v2077, 8.507059e+37
          %v2079 = vand.u32 %v2067, 2147483648
          %v2080 = vor.u32 1.1754944e-38, %v2079
          %v2081 = vsel %vm2078, %v2080, %v2076
          %v2082 = vmul.f32 %v2057, %v2081
          %v2083 = vmin.f32 %v2082, 1.0
          %v2084 = vmax.f32 %v2083, -1.0
          %v2085 = vadd.f32 %v2084, 1.0
          %v2086 = vmul.f32 %v2043, %v2085
          %v2087 = vld [vmem:[#allocation16] sm:$0xff]
          %v2088 = vld [vmem:[#allocation16 + $0x8] sm:$0xff]
          %v2089 = vld [vmem:[#allocation16 + $0x10] sm:$0xff]
          %v2090 = vld [vmem:[#allocation16 + $0x18] sm:$0xff]
          %v2091 = vld [vmem:[#allocation16 + $0x20] sm:$0xff]
          %v2092 = vld [vmem:[#allocation16 + $0x28] sm:$0xff]
          %v2093 = vld [vmem:[#allocation16 + $0x30] sm:$0xff]
          %v2094 = vld [vmem:[#allocation16 + $0x38] sm:$0xff]
          %v2095 = vld [vmem:[#allocation16 + $0x40] sm:$0xff]
          %v2096 = vld [vmem:[#allocation16 + $0x48] sm:$0xff]
          %v2097 = vld [vmem:[#allocation16 + $0x50] sm:$0xff]
          %v2098 = vld [vmem:[#allocation16 + $0x58] sm:$0xff]
          %v2099 = vld [vmem:[#allocation16 + $0x60] sm:$0xff]
          %v2100 = vld [vmem:[#allocation16 + $0x68] sm:$0xff]
          %v2101 = vld [vmem:[#allocation16 + $0x70] sm:$0xff]
          %v2102 = vld [vmem:[#allocation16 + $0x78] sm:$0xff]
          %v2103 = vld [vmem:[%s13] sm:$0x1]
          %v2105 = vperm.slane %v2103, 0
          %2107 = vmatpush.msra.mxu0 %v2102
          %2108 = vmatpush.msra.mxu0 %v2101
          %2109 = vmatpush.msra.mxu0 %v2100
          %2110 = vmatpush.msra.mxu0 %v2099
          %2111 = vmatpush.msra.mxu0 %v2098
          %2112 = vmatpush.msra.mxu0 %v2097
          %2113 = vmatpush.msra.mxu0 %v2096
          %2114 = vmatpush.msra.mxu0 %v2095
          %2115 = vmatpush.msra.mxu0 %v2094
          %2116 = vmatpush.msra.mxu0 %v2093
          %2117 = vmatpush.msra.mxu0 %v2092
          %2118 = vmatpush.msra.mxu0 %v2091
          %2119 = vmatpush.msra.mxu0 %v2090
          %2120 = vmatpush.msra.mxu0 %v2089
          %2121 = vmatpush.msra.mxu0 %v2088
          %2122 = vmatpush.msra.mxu0 %v2087
          %2123 = vmatmul.f32.gmra.mxu0 %v2086
          %v2124 = vpop.f32.mrf.mxu0
          %v2125 = vadd.f32 %v2105, %v2124
          %2126 = vdwg.mxu0
          %v2127 = vmul.f32 %v2125, 0.5
          %v2128 = vmul.f32 %v2125, %v1875
          %v2129 = vmul.f32 %v2128, %v2128
          %v2130 = vmin.f32 16.0, %v2129
          %v2131 = vmul.f32 %v2130, 2.1237322e-06
          %v2132 = vadd.f32 %v2131, 0.00028619796
          %v2133 = vmul.f32 %v2130, %v2132
          %v2134 = vadd.f32 %v2133, 0.0036580483
          %v2135 = vmul.f32 %v2130, %v2134
          %v2136 = vadd.f32 %v2135, 0.05243302
          %v2137 = vmul.f32 %v2130, %v2136
          %v2138 = vadd.f32 %v2137, 0.18741608
          %v2139 = vmul.f32 %v2130, %v2138
          %v2140 = vadd.f32 %v2139, 1.1283791
          %v2141 = vmul.f32 %v2128, %v2140
          %v2142 = vmul.f32 %v2130, 3.8918573e-05
          %v2143 = vadd.f32 %v2142, 0.001143296
          %v2144 = vmul.f32 %v2130, %v2143
          %v2145 = vadd.f32 %v2144, 0.014752088
          %v2146 = vmul.f32 %v2130, %v2145
          %v2147 = vadd.f32 %v2146, 0.112945676
          %v2148 = vmul.f32 %v2130, %v2147
          %v2149 = vadd.f32 %v2148, 0.4994258
          %v2150 = vmul.f32 %v2130, %v2149
          %v2151 = vadd.f32 %v2150, 1.0
          %v2152 = vrcp.pop %v2151
          %v2153 = vmul.f32 %v2151, %v2152
          %v2154 = vsub.f32 1.0, %v2153
          %v2155 = vmul.f32 %v2152, %v2154
          %v2156 = vadd.f32 %v2152, %v2155
          %vm2157 = vweird.f32 %v2151
          %vm2158 = vweird.f32 %v2152
          %vm2159 = vmor %vm2157, %vm2158
          %v2160 = vsel %vm2159, %v2152, %v2156
          %v2161 = vand.u32 2147483647, %v2151
          %vm2162 = vcmp.eq.f32.partialorder %v2161, 8.507059e+37
          %v2163 = vand.u32 %v2151, 2147483648
          %v2164 = vor.u32 1.1754944e-38, %v2163
          %v2165 = vsel %vm2162, %v2164, %v2160
          %v2166 = vmul.f32 %v2141, %v2165
          %v2167 = vmin.f32 %v2166, 1.0
          %v2168 = vmax.f32 %v2167, -1.0
          %v2169 = vadd.f32 %v2168, 1.0
          %v2170 = vmul.f32 %v2127, %v2169
          %v2171 = vld [vmem:[#allocation17] sm:$0xff]
          %v2172 = vld [vmem:[#allocation17 + $0x8] sm:$0xff]
          %v2173 = vld [vmem:[#allocation17 + $0x10] sm:$0xff]
          %v2174 = vld [vmem:[#allocation17 + $0x18] sm:$0xff]
          %v2175 = vld [vmem:[#allocation17 + $0x20] sm:$0xff]
          %v2176 = vld [vmem:[#allocation17 + $0x28] sm:$0xff]
          %v2177 = vld [vmem:[#allocation17 + $0x30] sm:$0xff]
          %v2178 = vld [vmem:[#allocation17 + $0x38] sm:$0xff]
          %v2179 = vld [vmem:[#allocation17 + $0x40] sm:$0xff]
          %v2180 = vld [vmem:[#allocation17 + $0x48] sm:$0xff]
          %v2181 = vld [vmem:[#allocation17 + $0x50] sm:$0xff]
          %v2182 = vld [vmem:[#allocation17 + $0x58] sm:$0xff]
          %v2183 = vld [vmem:[#allocation17 + $0x60] sm:$0xff]
          %v2184 = vld [vmem:[#allocation17 + $0x68] sm:$0xff]
          %v2185 = vld [vmem:[#allocation17 + $0x70] sm:$0xff]
          %v2186 = vld [vmem:[#allocation17 + $0x78] sm:$0xff]
          %v2187 = vld [vmem:[%s15] sm:$0x1]
          %v2189 = vperm.slane %v2187, 0
          %2191 = vmatpush.msra.mxu0 %v2186
          %2192 = vmatpush.msra.mxu0 %v2185
          %2193 = vmatpush.msra.mxu0 %v2184
          %2194 = vmatpush.msra.mxu0 %v2183
          %2195 = vmatpush.msra.mxu0 %v2182
          %2196 = vmatpush.msra.mxu0 %v2181
          %2197 = vmatpush.msra.mxu0 %v2180
          %2198 = vmatpush.msra.mxu0 %v2179
          %2199 = vmatpush.msra.mxu0 %v2178
          %2200 = vmatpush.msra.mxu0 %v2177
          %2201 = vmatpush.msra.mxu0 %v2176
          %2202 = vmatpush.msra.mxu0 %v2175
          %2203 = vmatpush.msra.mxu0 %v2174
          %2204 = vmatpush.msra.mxu0 %v2173
          %2205 = vmatpush.msra.mxu0 %v2172
          %2206 = vmatpush.msra.mxu0 %v2171
          %2207 = vmatmul.f32.gmra.mxu0 %v2170
          %v2208 = vpop.f32.mrf.mxu0
          %v2209 = vadd.f32 %v2189, %v2208
          %2210 = vdwg.mxu0
          %v2211 = vld [vmem:[#allocation19] sm:$0xff]
          %v2212 = vld [vmem:[#allocation19 + $0x8] sm:$0xff]
          %v2213 = vld [vmem:[#allocation19 + $0x10] sm:$0xff]
          %v2214 = vld [vmem:[#allocation19 + $0x18] sm:$0xff]
          %v2215 = vld [vmem:[#allocation19 + $0x20] sm:$0xff]
          %v2216 = vld [vmem:[#allocation19 + $0x28] sm:$0xff]
          %v2217 = vld [vmem:[#allocation19 + $0x30] sm:$0xff]
          %v2218 = vld [vmem:[#allocation19 + $0x38] sm:$0xff]
          %v2219 = vld [vmem:[#allocation19 + $0x40] sm:$0xff]
          %v2220 = vld [vmem:[#allocation19 + $0x48] sm:$0xff]
          %v2221 = vld [vmem:[#allocation19 + $0x50] sm:$0xff]
          %v2222 = vld [vmem:[#allocation19 + $0x58] sm:$0xff]
          %v2223 = vld [vmem:[#allocation19 + $0x60] sm:$0xff]
          %v2224 = vld [vmem:[#allocation19 + $0x68] sm:$0xff]
          %v2225 = vld [vmem:[#allocation19 + $0x70] sm:$0xff]
          %v2226 = vld [vmem:[#allocation19 + $0x78] sm:$0xff]
          %v2227 = vld [vmem:[%s17] sm:$0x1]
          %v2229 = vperm.slane %v2227, 0
          %2231 = vmatpush.msra.mxu0 %v2226
          %2232 = vmatpush.msra.mxu0 %v2225
          %2233 = vmatpush.msra.mxu0 %v2224
          %2234 = vmatpush.msra.mxu0 %v2223
          %2235 = vmatpush.msra.mxu0 %v2222
          %2236 = vmatpush.msra.mxu0 %v2221
          %2237 = vmatpush.msra.mxu0 %v2220
          %2238 = vmatpush.msra.mxu0 %v2219
          %2239 = vmatpush.msra.mxu0 %v2218
          %2240 = vmatpush.msra.mxu0 %v2217
          %2241 = vmatpush.msra.mxu0 %v2216
          %2242 = vmatpush.msra.mxu0 %v2215
          %2243 = vmatpush.msra.mxu0 %v2214
          %2244 = vmatpush.msra.mxu0 %v2213
          %2245 = vmatpush.msra.mxu0 %v2212
          %2246 = vmatpush.msra.mxu0 %v2211
          %2247 = vmatmul.f32.gmra.mxu0 %v1827
          %v2248 = vpop.f32.mrf.mxu0
          %v2249 = vadd.f32 %v2229, %v2248
          %2250 = vdwg.mxu0
          %v2251 = vmul.f32 %v2249, 0.5
          %v2252 = vmul.f32 %v2249, %v1875
          %v2253 = vmul.f32 %v2252, %v2252
          %v2254 = vmin.f32 16.0, %v2253
          %v2255 = vmul.f32 %v2254, 2.1237322e-06
          %v2256 = vadd.f32 %v2255, 0.00028619796
          %v2257 = vmul.f32 %v2254, %v2256
          %v2258 = vadd.f32 %v2257, 0.0036580483
          %v2259 = vmul.f32 %v2254, %v2258
          %v2260 = vadd.f32 %v2259, 0.05243302
          %v2261 = vmul.f32 %v2254, %v2260
          %v2262 = vadd.f32 %v2261, 0.18741608
          %v2263 = vmul.f32 %v2254, %v2262
          %v2264 = vadd.f32 %v2263, 1.1283791
          %v2265 = vmul.f32 %v2252, %v2264
          %v2266 = vmul.f32 %v2254, 3.8918573e-05
          %v2267 = vadd.f32 %v2266, 0.001143296
          %v2268 = vmul.f32 %v2254, %v2267
          %v2269 = vadd.f32 %v2268, 0.014752088
          %v2270 = vmul.f32 %v2254, %v2269
          %v2271 = vadd.f32 %v2270, 0.112945676
          %v2272 = vmul.f32 %v2254, %v2271
          %v2273 = vadd.f32 %v2272, 0.4994258
          %v2274 = vmul.f32 %v2254, %v2273
          %v2275 = vadd.f32 %v2274, 1.0
          %v2276 = vrcp.pop %v2275
          %v2277 = vmul.f32 %v2275, %v2276
          %v2278 = vsub.f32 1.0, %v2277
          %v2279 = vmul.f32 %v2276, %v2278
          %v2280 = vadd.f32 %v2276, %v2279
          %vm2281 = vweird.f32 %v2275
          %vm2282 = vweird.f32 %v2276
          %vm2283 = vmor %vm2281, %vm2282
          %v2284 = vsel %vm2283, %v2276, %v2280
          %v2285 = vand.u32 2147483647, %v2275
          %vm2286 = vcmp.eq.f32.partialorder %v2285, 8.507059e+37
          %v2287 = vand.u32 %v2275, 2147483648
          %v2288 = vor.u32 1.1754944e-38, %v2287
          %v2289 = vsel %vm2286, %v2288, %v2284
          %v2290 = vmul.f32 %v2265, %v2289
          %v2291 = vmin.f32 %v2290, 1.0
          %v2292 = vmax.f32 %v2291, -1.0
          %v2293 = vadd.f32 %v2292, 1.0
          %v2294 = vmul.f32 %v2251, %v2293
          %v2295 = vld [vmem:[#allocation20] sm:$0xff]
          %v2296 = vld [vmem:[#allocation20 + $0x8] sm:$0xff]
          %v2297 = vld [vmem:[#allocation20 + $0x10] sm:$0xff]
          %v2298 = vld [vmem:[#allocation20 + $0x18] sm:$0xff]
          %v2299 = vld [vmem:[#allocation20 + $0x20] sm:$0xff]
          %v2300 = vld [vmem:[#allocation20 + $0x28] sm:$0xff]
          %v2301 = vld [vmem:[#allocation20 + $0x30] sm:$0xff]
          %v2302 = vld [vmem:[#allocation20 + $0x38] sm:$0xff]
          %v2303 = vld [vmem:[#allocation20 + $0x40] sm:$0xff]
          %v2304 = vld [vmem:[#allocation20 + $0x48] sm:$0xff]
          %v2305 = vld [vmem:[#allocation20 + $0x50] sm:$0xff]
          %v2306 = vld [vmem:[#allocation20 + $0x58] sm:$0xff]
          %v2307 = vld [vmem:[#allocation20 + $0x60] sm:$0xff]
          %v2308 = vld [vmem:[#allocation20 + $0x68] sm:$0xff]
          %v2309 = vld [vmem:[#allocation20 + $0x70] sm:$0xff]
          %v2310 = vld [vmem:[#allocation20 + $0x78] sm:$0xff]
          %v2311 = vld [vmem:[%s19] sm:$0x1]
          %v2313 = vperm.slane %v2311, 0
          %2315 = vmatpush.msra.mxu0 %v2310
          %2316 = vmatpush.msra.mxu0 %v2309
          %2317 = vmatpush.msra.mxu0 %v2308
          %2318 = vmatpush.msra.mxu0 %v2307
          %2319 = vmatpush.msra.mxu0 %v2306
          %2320 = vmatpush.msra.mxu0 %v2305
          %2321 = vmatpush.msra.mxu0 %v2304
          %2322 = vmatpush.msra.mxu0 %v2303
          %2323 = vmatpush.msra.mxu0 %v2302
          %2324 = vmatpush.msra.mxu0 %v2301
          %2325 = vmatpush.msra.mxu0 %v2300
          %2326 = vmatpush.msra.mxu0 %v2299
          %2327 = vmatpush.msra.mxu0 %v2298
          %2328 = vmatpush.msra.mxu0 %v2297
          %2329 = vmatpush.msra.mxu0 %v2296
          %2330 = vmatpush.msra.mxu0 %v2295
          %2331 = vmatmul.f32.gmra.mxu0 %v2294
          %v2332 = vpop.f32.mrf.mxu0
          %v2333 = vadd.f32 %v2313, %v2332
          %2334 = vdwg.mxu0
          %v2335 = vmul.f32 %v2333, 0.5
          %v2336 = vmul.f32 %v2333, %v1875
          %v2337 = vmul.f32 %v2336, %v2336
          %v2338 = vmin.f32 16.0, %v2337
          %v2339 = vmul.f32 %v2338, 2.1237322e-06
          %v2340 = vadd.f32 %v2339, 0.00028619796
          %v2341 = vmul.f32 %v2338, %v2340
          %v2342 = vadd.f32 %v2341, 0.0036580483
          %v2343 = vmul.f32 %v2338, %v2342
          %v2344 = vadd.f32 %v2343, 0.05243302
          %v2345 = vmul.f32 %v2338, %v2344
          %v2346 = vadd.f32 %v2345, 0.18741608
          %v2347 = vmul.f32 %v2338, %v2346
          %v2348 = vadd.f32 %v2347, 1.1283791
          %v2349 = vmul.f32 %v2336, %v2348
          %v2350 = vmul.f32 %v2338, 3.8918573e-05
          %v2351 = vadd.f32 %v2350, 0.001143296
          %v2352 = vmul.f32 %v2338, %v2351
          %v2353 = vadd.f32 %v2352, 0.014752088
          %v2354 = vmul.f32 %v2338, %v2353
          %v2355 = vadd.f32 %v2354, 0.112945676
          %v2356 = vmul.f32 %v2338, %v2355
          %v2357 = vadd.f32 %v2356, 0.4994258
          %v2358 = vmul.f32 %v2338, %v2357
          %v2359 = vadd.f32 %v2358, 1.0
          %v2360 = vrcp.pop %v2359
          %v2361 = vmul.f32 %v2359, %v2360
          %v2362 = vsub.f32 1.0, %v2361
          %v2363 = vmul.f32 %v2360, %v2362
          %v2364 = vadd.f32 %v2360, %v2363
          %vm2365 = vweird.f32 %v2359
          %vm2366 = vweird.f32 %v2360
          %vm2367 = vmor %vm2365, %vm2366
          %v2368 = vsel %vm2367, %v2360, %v2364
          %v2369 = vand.u32 2147483647, %v2359
          %vm2370 = vcmp.eq.f32.partialorder %v2369, 8.507059e+37
          %v2371 = vand.u32 %v2359, 2147483648
          %v2372 = vor.u32 1.1754944e-38, %v2371
          %v2373 = vsel %vm2370, %v2372, %v2368
          %v2374 = vmul.f32 %v2349, %v2373
          %v2375 = vmin.f32 %v2374, 1.0
          %v2376 = vmax.f32 %v2375, -1.0
          %v2377 = vadd.f32 %v2376, 1.0
          %v2378 = vmul.f32 %v2335, %v2377
          %v2379 = vld [vmem:[#allocation22] sm:$0xff]
          %v2380 = vld [vmem:[#allocation22 + $0x8] sm:$0xff]
          %v2381 = vld [vmem:[#allocation22 + $0x10] sm:$0xff]
          %v2382 = vld [vmem:[#allocation22 + $0x18] sm:$0xff]
          %v2383 = vld [vmem:[#allocation22 + $0x20] sm:$0xff]
          %v2384 = vld [vmem:[#allocation22 + $0x28] sm:$0xff]
          %v2385 = vld [vmem:[#allocation22 + $0x30] sm:$0xff]
          %v2386 = vld [vmem:[#allocation22 + $0x38] sm:$0xff]
          %v2387 = vld [vmem:[#allocation22 + $0x40] sm:$0xff]
          %v2388 = vld [vmem:[#allocation22 + $0x48] sm:$0xff]
          %v2389 = vld [vmem:[#allocation22 + $0x50] sm:$0xff]
          %v2390 = vld [vmem:[#allocation22 + $0x58] sm:$0xff]
          %v2391 = vld [vmem:[#allocation22 + $0x60] sm:$0xff]
          %v2392 = vld [vmem:[#allocation22 + $0x68] sm:$0xff]
          %v2393 = vld [vmem:[#allocation22 + $0x70] sm:$0xff]
          %v2394 = vld [vmem:[#allocation22 + $0x78] sm:$0xff]
          %v2395 = vld [vmem:[%s21] sm:$0x1]
          %v2397 = vperm.slane %v2395, 0
          %2399 = vmatpush.msra.mxu0 %v2394
          %2400 = vmatpush.msra.mxu0 %v2393
          %2401 = vmatpush.msra.mxu0 %v2392
          %2402 = vmatpush.msra.mxu0 %v2391
          %2403 = vmatpush.msra.mxu0 %v2390
          %2404 = vmatpush.msra.mxu0 %v2389
          %2405 = vmatpush.msra.mxu0 %v2388
          %2406 = vmatpush.msra.mxu0 %v2387
          %2407 = vmatpush.msra.mxu0 %v2386
          %2408 = vmatpush.msra.mxu0 %v2385
          %2409 = vmatpush.msra.mxu0 %v2384
          %2410 = vmatpush.msra.mxu0 %v2383
          %2411 = vmatpush.msra.mxu0 %v2382
          %2412 = vmatpush.msra.mxu0 %v2381
          %2413 = vmatpush.msra.mxu0 %v2380
          %2414 = vmatpush.msra.mxu0 %v2379
          %2415 = vmatmul.f32.gmra.mxu0 %v2378
          %v2416 = vpop.f32.mrf.mxu0
          %v2417 = vadd.f32 %v2397, %v2416
          %2418 = vdwg.mxu0
          %v2419 = vmul.f32 %v2417, 0.5
          %v2420 = vmul.f32 %v2417, %v1875
          %v2421 = vmul.f32 %v2420, %v2420
          %v2422 = vmin.f32 16.0, %v2421
          %v2423 = vmul.f32 %v2422, 2.1237322e-06
          %v2424 = vadd.f32 %v2423, 0.00028619796
          %v2425 = vmul.f32 %v2422, %v2424
          %v2426 = vadd.f32 %v2425, 0.0036580483
          %v2427 = vmul.f32 %v2422, %v2426
          %v2428 = vadd.f32 %v2427, 0.05243302
          %v2429 = vmul.f32 %v2422, %v2428
          %v2430 = vadd.f32 %v2429, 0.18741608
          %v2431 = vmul.f32 %v2422, %v2430
          %v2432 = vadd.f32 %v2431, 1.1283791
          %v2433 = vmul.f32 %v2420, %v2432
          %v2434 = vmul.f32 %v2422, 3.8918573e-05
          %v2435 = vadd.f32 %v2434, 0.001143296
          %v2436 = vmul.f32 %v2422, %v2435
          %v2437 = vadd.f32 %v2436, 0.014752088
          %v2438 = vmul.f32 %v2422, %v2437
          %v2439 = vadd.f32 %v2438, 0.112945676
          %v2440 = vmul.f32 %v2422, %v2439
          %v2441 = vadd.f32 %v2440, 0.4994258
          %v2442 = vmul.f32 %v2422, %v2441
          %v2443 = vadd.f32 %v2442, 1.0
          %v2444 = vrcp.pop %v2443
          %v2445 = vmul.f32 %v2443, %v2444
          %v2446 = vsub.f32 1.0, %v2445
          %v2447 = vmul.f32 %v2444, %v2446
          %v2448 = vadd.f32 %v2444, %v2447
          %vm2449 = vweird.f32 %v2443
          %vm2450 = vweird.f32 %v2444
          %vm2451 = vmor %vm2449, %vm2450
          %v2452 = vsel %vm2451, %v2444, %v2448
          %v2453 = vand.u32 2147483647, %v2443
          %vm2454 = vcmp.eq.f32.partialorder %v2453, 8.507059e+37
          %v2455 = vand.u32 %v2443, 2147483648
          %v2456 = vor.u32 1.1754944e-38, %v2455
          %v2457 = vsel %vm2454, %v2456, %v2452
          %v2458 = vmul.f32 %v2433, %v2457
          %v2459 = vmin.f32 %v2458, 1.0
          %v2460 = vmax.f32 %v2459, -1.0
          %v2461 = vadd.f32 %v2460, 1.0
          %v2462 = vmul.f32 %v2419, %v2461
          %v2463 = vld [vmem:[#allocation23] sm:$0xff]
          %v2464 = vld [vmem:[#allocation23 + $0x8] sm:$0xff]
          %v2465 = vld [vmem:[#allocation23 + $0x10] sm:$0xff]
          %v2466 = vld [vmem:[#allocation23 + $0x18] sm:$0xff]
          %v2467 = vld [vmem:[#allocation23 + $0x20] sm:$0xff]
          %v2468 = vld [vmem:[#allocation23 + $0x28] sm:$0xff]
          %v2469 = vld [vmem:[#allocation23 + $0x30] sm:$0xff]
          %v2470 = vld [vmem:[#allocation23 + $0x38] sm:$0xff]
          %v2471 = vld [vmem:[#allocation23 + $0x40] sm:$0xff]
          %v2472 = vld [vmem:[#allocation23 + $0x48] sm:$0xff]
          %v2473 = vld [vmem:[#allocation23 + $0x50] sm:$0xff]
          %v2474 = vld [vmem:[#allocation23 + $0x58] sm:$0xff]
          %v2475 = vld [vmem:[#allocation23 + $0x60] sm:$0xff]
          %v2476 = vld [vmem:[#allocation23 + $0x68] sm:$0xff]
          %v2477 = vld [vmem:[#allocation23 + $0x70] sm:$0xff]
          %v2478 = vld [vmem:[#allocation23 + $0x78] sm:$0xff]
          %v2479 = vld [vmem:[%s23] sm:$0x1]
          %v2481 = vperm.slane %v2479, 0
          %2483 = vmatpush.msra.mxu0 %v2478
          %2484 = vmatpush.msra.mxu0 %v2477
          %2485 = vmatpush.msra.mxu0 %v2476
          %2486 = vmatpush.msra.mxu0 %v2475
          %2487 = vmatpush.msra.mxu0 %v2474
          %2488 = vmatpush.msra.mxu0 %v2473
          %2489 = vmatpush.msra.mxu0 %v2472
          %2490 = vmatpush.msra.mxu0 %v2471
          %2491 = vmatpush.msra.mxu0 %v2470
          %2492 = vmatpush.msra.mxu0 %v2469
          %2493 = vmatpush.msra.mxu0 %v2468
          %2494 = vmatpush.msra.mxu0 %v2467
          %2495 = vmatpush.msra.mxu0 %v2466
          %2496 = vmatpush.msra.mxu0 %v2465
          %2497 = vmatpush.msra.mxu0 %v2464
          %2498 = vmatpush.msra.mxu0 %v2463
          %2499 = vmatmul.f32.gmra.mxu0 %v2462
          %v2500 = vpop.f32.mrf.mxu0
          %v2501 = vadd.f32 %v2481, %v2500
          %2502 = vdwg.mxu0
          %v2503 = vmul.f32 %v2501, 0.5
          %v2504 = vmul.f32 %v2501, %v1875
          %v2505 = vmul.f32 %v2504, %v2504
          %v2506 = vmin.f32 16.0, %v2505
          %v2507 = vmul.f32 %v2506, 2.1237322e-06
          %v2508 = vadd.f32 %v2507, 0.00028619796
          %v2509 = vmul.f32 %v2506, %v2508
          %v2510 = vadd.f32 %v2509, 0.0036580483
          %v2511 = vmul.f32 %v2506, %v2510
          %v2512 = vadd.f32 %v2511, 0.05243302
          %v2513 = vmul.f32 %v2506, %v2512
          %v2514 = vadd.f32 %v2513, 0.18741608
          %v2515 = vmul.f32 %v2506, %v2514
          %v2516 = vadd.f32 %v2515, 1.1283791
          %v2517 = vmul.f32 %v2504, %v2516
          %v2518 = vmul.f32 %v2506, 3.8918573e-05
          %v2519 = vadd.f32 %v2518, 0.001143296
          %v2520 = vmul.f32 %v2506, %v2519
          %v2521 = vadd.f32 %v2520, 0.014752088
          %v2522 = vmul.f32 %v2506, %v2521
          %v2523 = vadd.f32 %v2522, 0.112945676
          %v2524 = vmul.f32 %v2506, %v2523
          %v2525 = vadd.f32 %v2524, 0.4994258
          %v2526 = vmul.f32 %v2506, %v2525
          %v2527 = vadd.f32 %v2526, 1.0
          %v2528 = vrcp.pop %v2527
          %v2529 = vmul.f32 %v2527, %v2528
          %v2530 = vsub.f32 1.0, %v2529
          %v2531 = vmul.f32 %v2528, %v2530
          %v2532 = vadd.f32 %v2528, %v2531
          %vm2533 = vweird.f32 %v2527
          %vm2534 = vweird.f32 %v2528
          %vm2535 = vmor %vm2533, %vm2534
          %v2536 = vsel %vm2535, %v2528, %v2532
          %v2537 = vand.u32 2147483647, %v2527
          %vm2538 = vcmp.eq.f32.partialorder %v2537, 8.507059e+37
          %v2539 = vand.u32 %v2527, 2147483648
          %v2540 = vor.u32 1.1754944e-38, %v2539
          %v2541 = vsel %vm2538, %v2540, %v2536
          %v2542 = vmul.f32 %v2517, %v2541
          %v2543 = vmin.f32 %v2542, 1.0
          %v2544 = vmax.f32 %v2543, -1.0
          %v2545 = vadd.f32 %v2544, 1.0
          %v2546 = vmul.f32 %v2503, %v2545
          %v2547 = vld [vmem:[#allocation25] sm:$0xff]
          %v2548 = vld [vmem:[#allocation25 + $0x8] sm:$0xff]
          %v2549 = vld [vmem:[#allocation25 + $0x10] sm:$0xff]
          %v2550 = vld [vmem:[#allocation25 + $0x18] sm:$0xff]
          %v2551 = vld [vmem:[#allocation25 + $0x20] sm:$0xff]
          %v2552 = vld [vmem:[#allocation25 + $0x28] sm:$0xff]
          %v2553 = vld [vmem:[#allocation25 + $0x30] sm:$0xff]
          %v2554 = vld [vmem:[#allocation25 + $0x38] sm:$0xff]
          %v2555 = vld [vmem:[#allocation25 + $0x40] sm:$0xff]
          %v2556 = vld [vmem:[#allocation25 + $0x48] sm:$0xff]
          %v2557 = vld [vmem:[#allocation25 + $0x50] sm:$0xff]
          %v2558 = vld [vmem:[#allocation25 + $0x58] sm:$0xff]
          %v2559 = vld [vmem:[#allocation25 + $0x60] sm:$0xff]
          %v2560 = vld [vmem:[#allocation25 + $0x68] sm:$0xff]
          %v2561 = vld [vmem:[#allocation25 + $0x70] sm:$0xff]
          %v2562 = vld [vmem:[#allocation25 + $0x78] sm:$0xff]
          %v2563 = vld [vmem:[%s25] sm:$0x1]
          %v2565 = vperm.slane %v2563, 0
          %2567 = vmatpush.msra.mxu0 %v2562
          %2568 = vmatpush.msra.mxu0 %v2561
          %2569 = vmatpush.msra.mxu0 %v2560
          %2570 = vmatpush.msra.mxu0 %v2559
          %2571 = vmatpush.msra.mxu0 %v2558
          %2572 = vmatpush.msra.mxu0 %v2557
          %2573 = vmatpush.msra.mxu0 %v2556
          %2574 = vmatpush.msra.mxu0 %v2555
          %2575 = vmatpush.msra.mxu0 %v2554
          %2576 = vmatpush.msra.mxu0 %v2553
          %2577 = vmatpush.msra.mxu0 %v2552
          %2578 = vmatpush.msra.mxu0 %v2551
          %2579 = vmatpush.msra.mxu0 %v2550
          %2580 = vmatpush.msra.mxu0 %v2549
          %2581 = vmatpush.msra.mxu0 %v2548
          %2582 = vmatpush.msra.mxu0 %v2547
          %2583 = vmatmul.f32.gmra.mxu0 %v2546
          %v2584 = vpop.f32.mrf.mxu0
          %v2585 = vadd.f32 %v2565, %v2584
          %2586 = vdwg.mxu0
          %v2587 = vadd.f32 %v2209, %v2585
          %v2588 = vlaneseq
          %v2589 = vand.u32 %v2588, 127
          %vm2590 = vcmp.lt.s32.totalorder %v2589, 4
          %v2591 = vsel %vm2590, %v2587, -1e+30
          %2592 = vmax.xlane.f32.xlu0 %v2591
          %v2593 = vpop.xlane.xlu0 %2592
          %v2594 = vsub.f32 %v2591, %v2593
          %v2595 = vmul.f32 %v2594, 1.442695
          %v2596 = vpow.pop %v2595
          %2597 = vadd.xlane.f32.xlu0 %v2596
          %v2598 = vpop.xlane.xlu0 %2597
          %v2599 = vrcp.pop %v2598
          %v2600 = vmul.f32 %v2596, %v2599
          %2601 = vst [vmem:[%s1315] sm:$0xff] %v2600
        $region328: #{tpu_custom_call.1} parent=259 // pred_fallthru
          _
        %s2602 = sand.u32 %s640, 1
        %s2603 = scalar_lea.sflag [#allocation10], %s2602
        %s2604 = sand.u32 %s640, 1
        %s2605 = smul.addr %s2604, 8
        %s2606 = scalar_lea.vmem [#allocation26], %s2605
        // Predicated region
        $region329: #{tpu_custom_call.1} parent=259 // pred_check
          %p2607 = pneg %p650
        $region330: #{tpu_custom_call.1} parent=259 // pred_check_branch
          %2609 = sbr.rel (%p2607) target = $region332
        $region331: #{tpu_custom_call.1} parent=259 // pred_region
          %2611 = vsyncadd %s2603, 0
          %s2612 = smul.addr %s50, 8
          %s2613 = scalar_lea.hbm %s26, %s2612
          %s2615 = sshll.u32 %s2606, 4
          %s2616 = int_to_ptr.vmem [resolvable:$true] %s2615
          %s2617 = sshll.u32 %s2613, 4
          %s2618 = int_to_ptr.hbm [resolvable:$true] %s2617
          %2620 = dma.vmem_to_hbm [thread:$0]  %s2616, 128, %s2618, %s2603
        $region332: #{tpu_custom_call.1} parent=259 // pred_fallthru
          _
      $region260: #{tpu_custom_call.1} parent=5 // pred_fallthru
        _
      %p2621 = scmp.le.s32.totalorder 2, %s41
      // Predicated region
      $region333: #{tpu_custom_call.1} parent=5 // pred_check
        %p2622 = pneg %p2621
      $region334: #{tpu_custom_call.1} parent=5 // pred_check_branch
        %2624 = sbr.rel (%p2622) target = $region336
      $region335: #{tpu_custom_call.1} parent=5 // pred_region
        %s2625 = ssub.s32 %s41, 2
        // Predicated region
        $region337: #{tpu_custom_call.1} parent=335 // pred_check
          %p2626 = pneg %p656
        $region338: #{tpu_custom_call.1} parent=335 // pred_check_branch
          %2628 = sbr.rel (%p2626) target = $region340
        $region339: #{tpu_custom_call.1} parent=335 // pred_region
          %s2629 = sand.u32 %s641, 1
          %s2630 = scalar_lea.sflag [#allocation10], %s2629
          %s2631 = sand.u32 %s641, 1
          %s2632 = smul.addr %s2631, 8
          %s2633 = scalar_lea.vmem [#allocation26], %s2632
          %2635 = dma.done %s2630, 128
        $region340: #{tpu_custom_call.1} parent=335 // pred_fallthru
          _
      $region336: #{tpu_custom_call.1} parent=5 // pred_fallthru
        _
    $region6: #{tpu_custom_call.1} parent=1 // loop_footer
      %s45 = sadd.s32 1, %s41
    $region7: #{tpu_custom_call.1} parent=1 // loop_footer_branch
      %40 = sbr.rel target = $region3
    $region8: #{tpu_custom_call.1} parent=1 // loop_exit
      _
    %2636 = vsyncpa [#allocation9], 1
    %s2637 = scalar_lea.sflag [#allocation9], 1
    %2638 = vsyncpa %s2637, 1
    %2639 = vsyncpa [#allocation12], 1
    %2640 = vsyncpa [#allocation15], 1
    %2641 = vsyncpa [#allocation18], 1
    %2642 = vsyncpa [#allocation21], 1
    %2643 = vsyncpa [#allocation24], 1
    %2644 = vsyncpa [#allocation10], 1
    %s2645 = scalar_lea.sflag [#allocation10], 1
    %2646 = vsyncpa %s2645, 1

</llo_original>
